<compile_context>
chip_gen: v7x
topology: tpu7x:2x2x1
jax: 0.10.0
libtpu: 0.0.40
codegen_flags: <defaults>
</compile_context>

<pallas_src>
import math
import functools

import jax
import jax.numpy as jnp
from jax.experimental import pallas as pl
from jax.experimental.pallas import tpu as pltpu

LEAKY_SLOPE = 0.2
LRELU_GAIN = math.sqrt(2.0)
NORM_EPS = 1e-8


def mapping_kernel(z_ref, w_ref, b_ref, out_ref, *, num_layers, in_features,
                   pre_scale, act_pos, act_neg, normalize):
    """Fused mapping-network body for one batch tile.

    z_ref:   (tm, D)            activation tile (feature dim possibly zero-padded to D)
    w_ref:   (L, D, D)          stacked PyTorch-layout (out, in) weights, f32
    b_ref:   (L, 1, D)          stacked biases, lr_mult already applied
    out_ref: (tm, D)
    """
    x = z_ref[...].astype(jnp.float32)

    if normalize:
        # Second-moment normalization over the *true* feature width (padded columns
        # are zero and contribute nothing to the sum).  Layer 0's equalized-lr scale
        # is folded into the same multiply.
        ssq = jnp.sum(x * x, axis=-1, keepdims=True) * (1.0 / in_features)
        x = x * (jax.lax.rsqrt(ssq + NORM_EPS) * pre_scale)
    else:
        x = x * pre_scale

    for i in range(num_layers):
        # Contract dim 1 of both operands: (tm, D) . (D_out, D_in) -> (tm, D_out),
        # consuming the PyTorch (out, in) layout directly (no transpose).
        y = jax.lax.dot_general(
            x, w_ref[i],
            dimension_numbers=(((1,), (1,)), ((), ())),
            preferred_element_type=jnp.float32,
        ) + b_ref[i]
        # leaky_relu(y, 0.2) * sqrt(2), with the NEXT layer's lr_mult/sqrt(fan_in)
        # scale pre-folded into both constants.  a > b > 0, so max() == leaky-relu.
        x = jnp.maximum(y * act_pos[i], y * act_neg[i])

    out_ref[...] = x.astype(out_ref.dtype)


def _pick_block_m(batch):
    """Batch tile: one big tile for small batches (single-TC friendly), otherwise
    split into ~2 tiles (<=1024 rows) so v7x's 2 TensorCores both get work."""
    rounded = max(8, ((batch + 7) // 8) * 8)
    if rounded <= 512:
        return rounded
    half = (((rounded + 1) // 2) + 7) // 8 * 8
    return min(1024, half)


def mapping_net_forward(z, weights, biases, lr_mult=0.01, normalize=True):
    """Pallas-backed MappingNet.forward (num_classes == 0 path)."""
    num_layers = len(weights)
    features = [weights[0].shape[1]] + [int(w.shape[0]) for w in weights]
    in_features = features[0]
    style_dim = features[-1]
    D = max(features)                      # uniform width for the stacked params
    batch = z.shape[0]

    block_m = _pick_block_m(batch)
    n_blocks = pl.cdiv(batch, block_m)     # ragged last block handled by Pallas masking

    # --- Stack per-layer params into 2 refs (ideally done once at param-prep time). ---
    uniform = all(w.shape == (D, D) for w in weights)
    if uniform:
        w_stack = jnp.stack([w.astype(jnp.float32) for w in weights])
        b_stack = jnp.stack(
            [(b.astype(jnp.float32) * float(lr_mult)).reshape(1, -1) for b in biases])
    else:
        # Zero-pad to (D, D): padded rows/cols stay exactly zero through the whole
        # network, so the valid columns are unaffected; slice the output at the end.
        w_stack = jnp.zeros((num_layers, D, D), jnp.float32)
        b_stack = jnp.zeros((num_layers, 1, D), jnp.float32)
        for i, (w, b) in enumerate(zip(weights, biases)):
            w_stack = w_stack.at[i, : w.shape[0], : w.shape[1]].set(w.astype(jnp.float32))
            b_stack = b_stack.at[i, 0, : b.shape[0]].set(
                b.astype(jnp.float32) * float(lr_mult))
    if in_features != D:
        z = jnp.pad(z, ((0, 0), (0, D - in_features)))

    # --- Fold equalized-lr scales into compile-time leaky-relu constants. ---
    w_scales = [float(lr_mult) / math.sqrt(w.shape[1]) for w in weights]
    pre_scale = w_scales[0]
    act_pos = tuple(
        LRELU_GAIN * (w_scales[i + 1] if i + 1 < num_layers else 1.0)
        for i in range(num_layers))
    act_neg = tuple(a * LEAKY_SLOPE for a in act_pos)

    kernel = functools.partial(
        mapping_kernel,
        num_layers=num_layers,
        in_features=in_features,
        pre_scale=pre_scale,
        act_pos=act_pos,
        act_neg=act_neg,
        normalize=normalize,
    )

    # z / out tiled over the batch grid; stacked weights & biases map to block 0
    # every step so they stay VMEM-resident across grid iterations.
    in_specs = [
        pl.BlockSpec((block_m, D), lambda i: (i, 0)),
        pl.BlockSpec((num_layers, D, D), lambda i: (0, 0, 0)),
        pl.BlockSpec((num_layers, 1, D), lambda i: (0, 0, 0)),
    ]
    out_spec = pl.BlockSpec((block_m, D), lambda i: (i, 0))

    flops = 2 * batch * sum(w.shape[0] * w.shape[1] for w in weights)
    bytes_accessed = (
        batch * D * 4                       # z
        + num_layers * D * D * 4            # weights (fetched once; advisory estimate)
        + num_layers * D * 4                # biases
        + batch * D * 4                     # out
    )

    out = pl.pallas_call(
        kernel,
        out_shape=jax.ShapeDtypeStruct((batch, D), z.dtype),
        grid=(n_blocks,),
        in_specs=in_specs,
        out_specs=out_spec,
        compiler_params=pltpu.CompilerParams(dimension_semantics=("parallel",)),
        cost_estimate=pl.CostEstimate(
            flops=flops,
            transcendentals=batch if normalize else 0,
            bytes_accessed=bytes_accessed,
        ),
    )(z, w_stack, b_stack)

    if style_dim != D:
        out = out[:, :style_dim]
    return out


def mapping_net_reference(z, weights, biases, lr_mult=0.01, normalize=True):
    """Pure-JAX reference mirroring the PyTorch module, for verification."""
    x = z.astype(jnp.float32)
    if normalize:
        x = x * jax.lax.rsqrt(jnp.mean(x * x, axis=-1, keepdims=True) + NORM_EPS)
    for w, b in zip(weights, biases):
        scale = lr_mult / math.sqrt(w.shape[1])
        x = x @ (w.astype(jnp.float32) * scale).T + b.astype(jnp.float32) * lr_mult
        x = jnp.where(x >= 0.0, x, x * LEAKY_SLOPE) * LRELU_GAIN
    return x.astype(z.dtype)


def init_mapping_params(key, latent_dim, style_dim, num_layers, hidden_dim, lr_mult):
    """EqualizedLR-style init: W ~ N(0,1)/lr_mult, b random (exercises the bias path)."""
    features = [latent_dim] + [hidden_dim] * (num_layers - 1) + [style_dim]
    weights, biases = [], []
    for i in range(num_layers):
        key, wk, bk = jax.random.split(key, 3)
        w = jax.random.normal(wk, (features[i + 1], features[i]), jnp.float32) / lr_mult
        b = jax.random.normal(bk, (features[i + 1],), jnp.float32)
        weights.append(w)
        biases.append(b)
    return weights, biases


if __name__ == "__main__":
    # Small, module-consistent shapes; batch=256 exercises a single 256-row tile,
    # batch=10 exercises the masked ragged-block path (no jnp.pad round trip).
    batch = 256
    latent_dim = 128
    hidden_dim = 128
    style_dim = 128
    num_layers = 8
    lr_mult = 0.01

    key = jax.random.PRNGKey(0)
    key, zk = jax.random.split(key)
    z = jax.random.normal(zk, (batch, latent_dim), jnp.float32)

    weights, biases = init_mapping_params(
        key, latent_dim, style_dim, num_layers, hidden_dim, lr_mult
    )

    out = jax.block_until_ready(
        mapping_net_forward(z, weights, biases, lr_mult=lr_mult, normalize=True)
    )
    ref = mapping_net_reference(z, weights, biases, lr_mult=lr_mult, normalize=True)
    assert out.shape == (batch, style_dim)
    assert jnp.allclose(out, ref, atol=1e-4, rtol=1e-4), "Pallas kernel mismatch vs reference"

    # Non-tile-multiple / small batch: validates Pallas boundary-block masking.
    z_small = z[:10]
    out_small = jax.block_until_ready(
        mapping_net_forward(z_small, weights, biases, lr_mult=lr_mult, normalize=True)
    )
    ref_small = mapping_net_reference(z_small, weights, biases, lr_mult=lr_mult, normalize=True)
    assert out_small.shape == (10, style_dim)
    assert jnp.allclose(out_small, ref_small, atol=1e-4, rtol=1e-4), "small-batch mismatch"

    print("KERNEL_OK")
</pallas_src>

<mosaic_0001>
module attributes {stable_mosaic.version = 11 : i64} {
  func.func @mapping_kernel(%arg0: i32, %arg1: memref<256x128xf32, #tpu.memory_space<vmem>>, %arg2: memref<8x128x128xf32, #tpu.memory_space<vmem>>, %arg3: memref<8x1x128xf32, #tpu.memory_space<vmem>>, %arg4: memref<256x128xf32, #tpu.memory_space<vmem>>) attributes {dimension_semantics = [#tpu.dimension_semantics<parallel>], iteration_bounds = array<i64: 1>, scalar_prefetch = 0 : i64, scratch_operands = 0 : i64, tpu.core_type = #tpu.core_type<tc>, window_params = [{transform_indices = @transform_0, window_bounds = array<i64: 256, 128>}, {pipeline_mode = #tpu.pipeline_mode<synchronous>, transform_indices = @transform_1, window_bounds = array<i64: 8, 128, 128>}, {pipeline_mode = #tpu.pipeline_mode<synchronous>, transform_indices = @transform_2, window_bounds = array<i64: 8, 1, 128>}, {transform_indices = @transform_3, window_bounds = array<i64: 256, 128>}]} {
    %c0 = arith.constant 0 : index
    %c0_0 = arith.constant 0 : index
    %0 = vector.load %arg1[%c0, %c0_0] : memref<256x128xf32, #tpu.memory_space<vmem>>, vector<256x128xf32>
    %1 = arith.mulf %0, %0 : vector<256x128xf32>
    %cst = arith.constant dense<0.000000e+00> : vector<256xf32>
    %2 = vector.multi_reduction <add>, %1, %cst [1] : vector<256x128xf32> to vector<256xf32>
    %3 = vector.shape_cast %2 : vector<256xf32> to vector<256x1xf32>
    %cst_1 = arith.constant 7.812500e-03 : f32
    %4 = vector.broadcast %cst_1 : f32 to vector<256x1xf32>
    %5 = arith.mulf %3, %4 : vector<256x1xf32>
    %cst_2 = arith.constant 9.99999993E-9 : f32
    %6 = vector.broadcast %cst_2 : f32 to vector<256x1xf32>
    %7 = arith.addf %5, %6 : vector<256x1xf32>
    %8 = math.rsqrt %7 : vector<256x1xf32>
    %cst_3 = arith.constant 8.83883447E-4 : f32
    %9 = vector.broadcast %cst_3 : f32 to vector<256x1xf32>
    %10 = arith.mulf %8, %9 : vector<256x1xf32>
    %11 = vector.broadcast %10 : vector<256x1xf32> to vector<256x128xf32>
    %12 = arith.mulf %0, %11 : vector<256x128xf32>
    %c0_4 = arith.constant 0 : index
    %c0_5 = arith.constant 0 : index
    %c0_6 = arith.constant 0 : index
    %13 = vector.load %arg2[%c0_4, %c0_5, %c0_6] : memref<8x128x128xf32, #tpu.memory_space<vmem>>, vector<1x128x128xf32>
    %14 = vector.shape_cast %13 : vector<1x128x128xf32> to vector<128x128xf32>
    %cst_7 = arith.constant dense<0.000000e+00> : vector<256x128xf32>
    %15 = tpu.matmul %12, %14, %cst_7 {dimension_numbers = #tpu.dot_dimension_numbers<[1], [1], [0], [0], [0, 0, 1, 0], [], []>} : vector<256x128xf32>, vector<128x128xf32>, vector<256x128xf32> -> vector<256x128xf32>
    %c0_8 = arith.constant 0 : index
    %c0_9 = arith.constant 0 : index
    %c0_10 = arith.constant 0 : index
    %16 = vector.load %arg3[%c0_8, %c0_9, %c0_10] : memref<8x1x128xf32, #tpu.memory_space<vmem>>, vector<1x1x128xf32>
    %17 = vector.shape_cast %16 : vector<1x1x128xf32> to vector<1x128xf32>
    %18 = vector.broadcast %17 : vector<1x128xf32> to vector<256x128xf32>
    %19 = arith.addf %15, %18 : vector<256x128xf32>
    %cst_11 = arith.constant 1.250000e-03 : f32
    %20 = vector.broadcast %cst_11 : f32 to vector<256x128xf32>
    %21 = arith.mulf %19, %20 : vector<256x128xf32>
    %cst_12 = arith.constant 2.500000e-04 : f32
    %22 = vector.broadcast %cst_12 : f32 to vector<256x128xf32>
    %23 = arith.mulf %19, %22 : vector<256x128xf32>
    %24 = arith.maximumf %21, %23 : vector<256x128xf32>
    %c1 = arith.constant 1 : index
    %c0_13 = arith.constant 0 : index
    %c0_14 = arith.constant 0 : index
    %25 = vector.load %arg2[%c1, %c0_13, %c0_14] : memref<8x128x128xf32, #tpu.memory_space<vmem>>, vector<1x128x128xf32>
    %26 = vector.shape_cast %25 : vector<1x128x128xf32> to vector<128x128xf32>
    %cst_15 = arith.constant dense<0.000000e+00> : vector<256x128xf32>
    %27 = tpu.matmul %24, %26, %cst_15 {dimension_numbers = #tpu.dot_dimension_numbers<[1], [1], [0], [0], [0, 0, 1, 0], [], []>} : vector<256x128xf32>, vector<128x128xf32>, vector<256x128xf32> -> vector<256x128xf32>
    %c1_16 = arith.constant 1 : index
    %c0_17 = arith.constant 0 : index
    %c0_18 = arith.constant 0 : index
    %28 = vector.load %arg3[%c1_16, %c0_17, %c0_18] : memref<8x1x128xf32, #tpu.memory_space<vmem>>, vector<1x1x128xf32>
    %29 = vector.shape_cast %28 : vector<1x1x128xf32> to vector<1x128xf32>
    %30 = vector.broadcast %29 : vector<1x128xf32> to vector<256x128xf32>
    %31 = arith.addf %27, %30 : vector<256x128xf32>
    %cst_19 = arith.constant 1.250000e-03 : f32
    %32 = vector.broadcast %cst_19 : f32 to vector<256x128xf32>
    %33 = arith.mulf %31, %32 : vector<256x128xf32>
    %cst_20 = arith.constant 2.500000e-04 : f32
    %34 = vector.broadcast %cst_20 : f32 to vector<256x128xf32>
    %35 = arith.mulf %31, %34 : vector<256x128xf32>
    %36 = arith.maximumf %33, %35 : vector<256x128xf32>
    %c2 = arith.constant 2 : index
    %c0_21 = arith.constant 0 : index
    %c0_22 = arith.constant 0 : index
    %37 = vector.load %arg2[%c2, %c0_21, %c0_22] : memref<8x128x128xf32, #tpu.memory_space<vmem>>, vector<1x128x128xf32>
    %38 = vector.shape_cast %37 : vector<1x128x128xf32> to vector<128x128xf32>
    %cst_23 = arith.constant dense<0.000000e+00> : vector<256x128xf32>
    %39 = tpu.matmul %36, %38, %cst_23 {dimension_numbers = #tpu.dot_dimension_numbers<[1], [1], [0], [0], [0, 0, 1, 0], [], []>} : vector<256x128xf32>, vector<128x128xf32>, vector<256x128xf32> -> vector<256x128xf32>
    %c2_24 = arith.constant 2 : index
    %c0_25 = arith.constant 0 : index
    %c0_26 = arith.constant 0 : index
    %40 = vector.load %arg3[%c2_24, %c0_25, %c0_26] : memref<8x1x128xf32, #tpu.memory_space<vmem>>, vector<1x1x128xf32>
    %41 = vector.shape_cast %40 : vector<1x1x128xf32> to vector<1x128xf32>
    %42 = vector.broadcast %41 : vector<1x128xf32> to vector<256x128xf32>
    %43 = arith.addf %39, %42 : vector<256x128xf32>
    %cst_27 = arith.constant 1.250000e-03 : f32
    %44 = vector.broadcast %cst_27 : f32 to vector<256x128xf32>
    %45 = arith.mulf %43, %44 : vector<256x128xf32>
    %cst_28 = arith.constant 2.500000e-04 : f32
    %46 = vector.broadcast %cst_28 : f32 to vector<256x128xf32>
    %47 = arith.mulf %43, %46 : vector<256x128xf32>
    %48 = arith.maximumf %45, %47 : vector<256x128xf32>
    %c3 = arith.constant 3 : index
    %c0_29 = arith.constant 0 : index
    %c0_30 = arith.constant 0 : index
    %49 = vector.load %arg2[%c3, %c0_29, %c0_30] : memref<8x128x128xf32, #tpu.memory_space<vmem>>, vector<1x128x128xf32>
    %50 = vector.shape_cast %49 : vector<1x128x128xf32> to vector<128x128xf32>
    %cst_31 = arith.constant dense<0.000000e+00> : vector<256x128xf32>
    %51 = tpu.matmul %48, %50, %cst_31 {dimension_numbers = #tpu.dot_dimension_numbers<[1], [1], [0], [0], [0, 0, 1, 0], [], []>} : vector<256x128xf32>, vector<128x128xf32>, vector<256x128xf32> -> vector<256x128xf32>
    %c3_32 = arith.constant 3 : index
    %c0_33 = arith.constant 0 : index
    %c0_34 = arith.constant 0 : index
    %52 = vector.load %arg3[%c3_32, %c0_33, %c0_34] : memref<8x1x128xf32, #tpu.memory_space<vmem>>, vector<1x1x128xf32>
    %53 = vector.shape_cast %52 : vector<1x1x128xf32> to vector<1x128xf32>
    %54 = vector.broadcast %53 : vector<1x128xf32> to vector<256x128xf32>
    %55 = arith.addf %51, %54 : vector<256x128xf32>
    %cst_35 = arith.constant 1.250000e-03 : f32
    %56 = vector.broadcast %cst_35 : f32 to vector<256x128xf32>
    %57 = arith.mulf %55, %56 : vector<256x128xf32>
    %cst_36 = arith.constant 2.500000e-04 : f32
    %58 = vector.broadcast %cst_36 : f32 to vector<256x128xf32>
    %59 = arith.mulf %55, %58 : vector<256x128xf32>
    %60 = arith.maximumf %57, %59 : vector<256x128xf32>
    %c4 = arith.constant 4 : index
    %c0_37 = arith.constant 0 : index
    %c0_38 = arith.constant 0 : index
    %61 = vector.load %arg2[%c4, %c0_37, %c0_38] : memref<8x128x128xf32, #tpu.memory_space<vmem>>, vector<1x128x128xf32>
    %62 = vector.shape_cast %61 : vector<1x128x128xf32> to vector<128x128xf32>
    %cst_39 = arith.constant dense<0.000000e+00> : vector<256x128xf32>
    %63 = tpu.matmul %60, %62, %cst_39 {dimension_numbers = #tpu.dot_dimension_numbers<[1], [1], [0], [0], [0, 0, 1, 0], [], []>} : vector<256x128xf32>, vector<128x128xf32>, vector<256x128xf32> -> vector<256x128xf32>
    %c4_40 = arith.constant 4 : index
    %c0_41 = arith.constant 0 : index
    %c0_42 = arith.constant 0 : index
    %64 = vector.load %arg3[%c4_40, %c0_41, %c0_42] : memref<8x1x128xf32, #tpu.memory_space<vmem>>, vector<1x1x128xf32>
    %65 = vector.shape_cast %64 : vector<1x1x128xf32> to vector<1x128xf32>
    %66 = vector.broadcast %65 : vector<1x128xf32> to vector<256x128xf32>
    %67 = arith.addf %63, %66 : vector<256x128xf32>
    %cst_43 = arith.constant 1.250000e-03 : f32
    %68 = vector.broadcast %cst_43 : f32 to vector<256x128xf32>
    %69 = arith.mulf %67, %68 : vector<256x128xf32>
    %cst_44 = arith.constant 2.500000e-04 : f32
    %70 = vector.broadcast %cst_44 : f32 to vector<256x128xf32>
    %71 = arith.mulf %67, %70 : vector<256x128xf32>
    %72 = arith.maximumf %69, %71 : vector<256x128xf32>
    %c5 = arith.constant 5 : index
    %c0_45 = arith.constant 0 : index
    %c0_46 = arith.constant 0 : index
    %73 = vector.load %arg2[%c5, %c0_45, %c0_46] : memref<8x128x128xf32, #tpu.memory_space<vmem>>, vector<1x128x128xf32>
    %74 = vector.shape_cast %73 : vector<1x128x128xf32> to vector<128x128xf32>
    %cst_47 = arith.constant dense<0.000000e+00> : vector<256x128xf32>
    %75 = tpu.matmul %72, %74, %cst_47 {dimension_numbers = #tpu.dot_dimension_numbers<[1], [1], [0], [0], [0, 0, 1, 0], [], []>} : vector<256x128xf32>, vector<128x128xf32>, vector<256x128xf32> -> vector<256x128xf32>
    %c5_48 = arith.constant 5 : index
    %c0_49 = arith.constant 0 : index
    %c0_50 = arith.constant 0 : index
    %76 = vector.load %arg3[%c5_48, %c0_49, %c0_50] : memref<8x1x128xf32, #tpu.memory_space<vmem>>, vector<1x1x128xf32>
    %77 = vector.shape_cast %76 : vector<1x1x128xf32> to vector<1x128xf32>
    %78 = vector.broadcast %77 : vector<1x128xf32> to vector<256x128xf32>
    %79 = arith.addf %75, %78 : vector<256x128xf32>
    %cst_51 = arith.constant 1.250000e-03 : f32
    %80 = vector.broadcast %cst_51 : f32 to vector<256x128xf32>
    %81 = arith.mulf %79, %80 : vector<256x128xf32>
    %cst_52 = arith.constant 2.500000e-04 : f32
    %82 = vector.broadcast %cst_52 : f32 to vector<256x128xf32>
    %83 = arith.mulf %79, %82 : vector<256x128xf32>
    %84 = arith.maximumf %81, %83 : vector<256x128xf32>
    %c6 = arith.constant 6 : index
    %c0_53 = arith.constant 0 : index
    %c0_54 = arith.constant 0 : index
    %85 = vector.load %arg2[%c6, %c0_53, %c0_54] : memref<8x128x128xf32, #tpu.memory_space<vmem>>, vector<1x128x128xf32>
    %86 = vector.shape_cast %85 : vector<1x128x128xf32> to vector<128x128xf32>
    %cst_55 = arith.constant dense<0.000000e+00> : vector<256x128xf32>
    %87 = tpu.matmul %84, %86, %cst_55 {dimension_numbers = #tpu.dot_dimension_numbers<[1], [1], [0], [0], [0, 0, 1, 0], [], []>} : vector<256x128xf32>, vector<128x128xf32>, vector<256x128xf32> -> vector<256x128xf32>
    %c6_56 = arith.constant 6 : index
    %c0_57 = arith.constant 0 : index
    %c0_58 = arith.constant 0 : index
    %88 = vector.load %arg3[%c6_56, %c0_57, %c0_58] : memref<8x1x128xf32, #tpu.memory_space<vmem>>, vector<1x1x128xf32>
    %89 = vector.shape_cast %88 : vector<1x1x128xf32> to vector<1x128xf32>
    %90 = vector.broadcast %89 : vector<1x128xf32> to vector<256x128xf32>
    %91 = arith.addf %87, %90 : vector<256x128xf32>
    %cst_59 = arith.constant 1.250000e-03 : f32
    %92 = vector.broadcast %cst_59 : f32 to vector<256x128xf32>
    %93 = arith.mulf %91, %92 : vector<256x128xf32>
    %cst_60 = arith.constant 2.500000e-04 : f32
    %94 = vector.broadcast %cst_60 : f32 to vector<256x128xf32>
    %95 = arith.mulf %91, %94 : vector<256x128xf32>
    %96 = arith.maximumf %93, %95 : vector<256x128xf32>
    %c7 = arith.constant 7 : index
    %c0_61 = arith.constant 0 : index
    %c0_62 = arith.constant 0 : index
    %97 = vector.load %arg2[%c7, %c0_61, %c0_62] : memref<8x128x128xf32, #tpu.memory_space<vmem>>, vector<1x128x128xf32>
    %98 = vector.shape_cast %97 : vector<1x128x128xf32> to vector<128x128xf32>
    %cst_63 = arith.constant dense<0.000000e+00> : vector<256x128xf32>
    %99 = tpu.matmul %96, %98, %cst_63 {dimension_numbers = #tpu.dot_dimension_numbers<[1], [1], [0], [0], [0, 0, 1, 0], [], []>} : vector<256x128xf32>, vector<128x128xf32>, vector<256x128xf32> -> vector<256x128xf32>
    %c7_64 = arith.constant 7 : index
    %c0_65 = arith.constant 0 : index
    %c0_66 = arith.constant 0 : index
    %100 = vector.load %arg3[%c7_64, %c0_65, %c0_66] : memref<8x1x128xf32, #tpu.memory_space<vmem>>, vector<1x1x128xf32>
    %101 = vector.shape_cast %100 : vector<1x1x128xf32> to vector<1x128xf32>
    %102 = vector.broadcast %101 : vector<1x128xf32> to vector<256x128xf32>
    %103 = arith.addf %99, %102 : vector<256x128xf32>
    %cst_67 = arith.constant 1.41421354 : f32
    %104 = vector.broadcast %cst_67 : f32 to vector<256x128xf32>
    %105 = arith.mulf %103, %104 : vector<256x128xf32>
    %cst_68 = arith.constant 0.282842726 : f32
    %106 = vector.broadcast %cst_68 : f32 to vector<256x128xf32>
    %107 = arith.mulf %103, %106 : vector<256x128xf32>
    %108 = arith.maximumf %105, %107 : vector<256x128xf32>
    %c0_69 = arith.constant 0 : index
    %c0_70 = arith.constant 0 : index
    %109 = vector.load %arg4[%c0_69, %c0_70] : memref<256x128xf32, #tpu.memory_space<vmem>>, vector<256x128xf32>
    tpu.vector_store %arg4[%c0_69, %c0_70], %108 {strides = array<i32>} : memref<256x128xf32, #tpu.memory_space<vmem>>, vector<256x128xf32>,
    return
  }
  func.func @transform_0(%arg0: i32) -> (i32, i32) {
    %c0_i32 = arith.constant 0 : i32
    %c0_i32_0 = arith.constant 0 : i32
    return %arg0, %c0_i32 : i32, i32
  }
  func.func @transform_1(%arg0: i32) -> (i32, i32, i32) {
    %c0_i32 = arith.constant 0 : i32
    %c0_i32_0 = arith.constant 0 : i32
    %c0_i32_1 = arith.constant 0 : i32
    %c0_i32_2 = arith.constant 0 : i32
    return %c0_i32, %c0_i32_0, %c0_i32_1 : i32, i32, i32
  }
  func.func @transform_2(%arg0: i32) -> (i32, i32, i32) {
    %c0_i32 = arith.constant 0 : i32
    %c0_i32_0 = arith.constant 0 : i32
    %c0_i32_1 = arith.constant 0 : i32
    %c0_i32_2 = arith.constant 0 : i32
    return %c0_i32, %c0_i32_0, %c0_i32_1 : i32, i32, i32
  }
  func.func @transform_3(%arg0: i32) -> (i32, i32) {
    %c0_i32 = arith.constant 0 : i32
    %c0_i32_0 = arith.constant 0 : i32
    return %arg0, %c0_i32 : i32, i32
  }
}

</mosaic_0001>

<llo_original>
// kernel: tpu_custom_call.1
$region0: #{tpu_custom_call.1}
  #allocation0 [shape = 'u32[]', space=smem, size = 0x4, offset = 0x4, fixed_abs, tag = 'smem constant byte address 0x4 - core index']
  #allocation1 [shape = 'u32[144,128]{1,0:T(1,128)}', space=vmem, size = 0x12000, scoped, tag = 'internal scratch']
  %s0 = inlined_call_operand.hbm [shape: f32[256,128], index: 0, kind: input, shape index: {}]
  %s1 = inlined_call_operand.hbm [shape: f32[8,128,128], index: 1, kind: input, shape index: {}]
  %s2 = inlined_call_operand.hbm [shape: f32[8,1,128], index: 2, kind: input, shape index: {}]
  %s3 = inlined_call_operand.hbm [shape: f32[256,128], index: 3, kind: output, shape index: {}]
  %s4 = sld [smem:[#allocation0]]
  $region34: #{tpu_custom_call.1} parent=0
    _
  %s6 = ssub.s32 1, %s4
  %s7 = scalar_select 0, %s6, %s4
  $region1: #{tpu_custom_call.1} parent=0
    #allocation2 [shape = 'u8[131072]{0}', space=vmem, size = 0x20000, scoped, tag = 'input window, operand 0, single buffered']
    #allocation3 [shape = 's32[1]{0}', space=sflag, size = 0x4, scoped, tag = 'scoped memory for tpu_custom_call.1']
    #allocation4 [shape = 's32[1]{0}', space=sflag, size = 0x4, scoped, tag = 'scoped memory for tpu_custom_call.1']
    #allocation5 [shape = 'u8[524288]{0}', space=vmem, size = 0x80000, scoped, tag = 'input window, operand 1, single buffered']
    #allocation6 [shape = 's32[1]{0}', space=sflag, size = 0x4, scoped, tag = 'scoped memory for tpu_custom_call.1']
    #allocation7 [shape = 'u8[4096]{0}', space=vmem, size = 0x1000, scoped, tag = 'input window, operand 2, single buffered']
    #allocation8 [shape = 'u8[131072]{0}', space=vmem, size = 0x20000, scoped, tag = 'output window, operand 0, single buffered']
    %8 = vsyncpa [#allocation3], 0
    %9 = vsyncpa [#allocation6], 0
    %10 = vsyncpa [#allocation4], 0
    // Predicated region
    $region2: #{tpu_custom_call.1} parent=1 // pred_check
      _
    $region3: #{tpu_custom_call.1} parent=1 // pred_check_branch
      %12 = sbr.rel (0) target = $region5
    $region4: #{tpu_custom_call.1} parent=1 // pred_region
      %s14 = ssub.s32 4096, 4096
      %15 = vsyncadd [#allocation3], %s14
      %s16 = sshll.u32 [#allocation2], 4
      %s17 = int_to_ptr.vmem [resolvable:$true] %s16
      %22 = dma.hbm_to_vmem [thread:$0]  %s0, 4096, %s17, [#allocation3], 128, 128, 8
    $region5: #{tpu_custom_call.1} parent=1 // pred_fallthru
      _
    // Predicated region
    $region6: #{tpu_custom_call.1} parent=1 // pred_check
      _
    $region7: #{tpu_custom_call.1} parent=1 // pred_check_branch
      %24 = sbr.rel (0) target = $region9
    $region8: #{tpu_custom_call.1} parent=1 // pred_region
      %s26 = ssub.s32 16384, 16384
      %27 = vsyncadd [#allocation6], %s26
      %s28 = sshll.u32 [#allocation5], 4
      %s29 = int_to_ptr.vmem [resolvable:$true] %s28
      %34 = dma.hbm_to_vmem [thread:$0]  %s1, 16384, %s29, [#allocation6], 128, 128, 8
    $region9: #{tpu_custom_call.1} parent=1 // pred_fallthru
      _
    // Predicated region
    $region10: #{tpu_custom_call.1} parent=1 // pred_check
      _
    $region11: #{tpu_custom_call.1} parent=1 // pred_check_branch
      %36 = sbr.rel (0) target = $region13
    $region12: #{tpu_custom_call.1} parent=1 // pred_region
      %s38 = ssub.s32 128, 128
      %39 = vsyncadd [#allocation6], %s38
      %s40 = sshll.u32 [#allocation7], 4
      %s41 = int_to_ptr.vmem [resolvable:$true] %s40
      %46 = dma.hbm_to_vmem [thread:$0]  %s2, 128, %s41, [#allocation6], 16, 16, 1
    $region13: #{tpu_custom_call.1} parent=1 // pred_fallthru
      _
    // Predicated region
    $region14: #{tpu_custom_call.1} parent=1 // pred_check
      _
    $region15: #{tpu_custom_call.1} parent=1 // pred_check_branch
      %48 = sbr.rel (0) target = $region17
    $region16: #{tpu_custom_call.1} parent=1 // pred_region
      %49 = dma.done [#allocation3], 4096
    $region17: #{tpu_custom_call.1} parent=1 // pred_fallthru
      _
    // Predicated region
    $region18: #{tpu_custom_call.1} parent=1 // pred_check
      _
    $region19: #{tpu_custom_call.1} parent=1 // pred_check_branch
      %51 = sbr.rel (0) target = $region21
    $region20: #{tpu_custom_call.1} parent=1 // pred_region
      %52 = dma.done [#allocation6], 16384
    $region21: #{tpu_custom_call.1} parent=1 // pred_fallthru
      _
    // Predicated region
    $region22: #{tpu_custom_call.1} parent=1 // pred_check
      _
    $region23: #{tpu_custom_call.1} parent=1 // pred_check_branch
      %54 = sbr.rel (0) target = $region25
    $region24: #{tpu_custom_call.1} parent=1 // pred_region
      %55 = dma.done [#allocation6], 128
    $region25: #{tpu_custom_call.1} parent=1 // pred_fallthru
      _
    %v56 = vld [vmem:[#allocation2] sm:$0xff]
    %v57 = vld [vmem:[#allocation2 + $0x8] sm:$0xff]
    %v58 = vld [vmem:[#allocation2 + $0x10] sm:$0xff]
    %v59 = vld [vmem:[#allocation2 + $0x18] sm:$0xff]
    %v60 = vld [vmem:[#allocation2 + $0x20] sm:$0xff]
    %v61 = vld [vmem:[#allocation2 + $0x28] sm:$0xff]
    %v62 = vld [vmem:[#allocation2 + $0x30] sm:$0xff]
    %v63 = vld [vmem:[#allocation2 + $0x38] sm:$0xff]
    %v64 = vld [vmem:[#allocation2 + $0x40] sm:$0xff]
    %v65 = vld [vmem:[#allocation2 + $0x48] sm:$0xff]
    %v66 = vld [vmem:[#allocation2 + $0x50] sm:$0xff]
    %v67 = vld [vmem:[#allocation2 + $0x58] sm:$0xff]
    %v68 = vld [vmem:[#allocation2 + $0x60] sm:$0xff]
    %v69 = vld [vmem:[#allocation2 + $0x68] sm:$0xff]
    %v70 = vld [vmem:[#allocation2 + $0x70] sm:$0xff]
    %v71 = vld [vmem:[#allocation2 + $0x78] sm:$0xff]
    %v72 = vld [vmem:[#allocation2 + $0x80] sm:$0xff]
    %v73 = vld [vmem:[#allocation2 + $0x88] sm:$0xff]
    %v74 = vld [vmem:[#allocation2 + $0x90] sm:$0xff]
    %v75 = vld [vmem:[#allocation2 + $0x98] sm:$0xff]
    %v76 = vld [vmem:[#allocation2 + $0xa0] sm:$0xff]
    %v77 = vld [vmem:[#allocation2 + $0xa8] sm:$0xff]
    %v78 = vld [vmem:[#allocation2 + $0xb0] sm:$0xff]
    %v79 = vld [vmem:[#allocation2 + $0xb8] sm:$0xff]
    %v80 = vld [vmem:[#allocation2 + $0xc0] sm:$0xff]
    %v81 = vld [vmem:[#allocation2 + $0xc8] sm:$0xff]
    %v82 = vld [vmem:[#allocation2 + $0xd0] sm:$0xff]
    %v83 = vld [vmem:[#allocation2 + $0xd8] sm:$0xff]
    %v84 = vld [vmem:[#allocation2 + $0xe0] sm:$0xff]
    %v85 = vld [vmem:[#allocation2 + $0xe8] sm:$0xff]
    %v86 = vld [vmem:[#allocation2 + $0xf0] sm:$0xff]
    %v87 = vld [vmem:[#allocation2 + $0xf8] sm:$0xff]
    %v88 = vmul.f32 %v56, %v56
    %v89 = vmul.f32 %v57, %v57
    %v90 = vmul.f32 %v58, %v58
    %v91 = vmul.f32 %v59, %v59
    %v92 = vmul.f32 %v60, %v60
    %v93 = vmul.f32 %v61, %v61
    %v94 = vmul.f32 %v62, %v62
    %v95 = vmul.f32 %v63, %v63
    %v96 = vmul.f32 %v64, %v64
    %v97 = vmul.f32 %v65, %v65
    %v98 = vmul.f32 %v66, %v66
    %v99 = vmul.f32 %v67, %v67
    %v100 = vmul.f32 %v68, %v68
    %v101 = vmul.f32 %v69, %v69
    %v102 = vmul.f32 %v70, %v70
    %v103 = vmul.f32 %v71, %v71
    %v104 = vmul.f32 %v72, %v72
    %v105 = vmul.f32 %v73, %v73
    %v106 = vmul.f32 %v74, %v74
    %v107 = vmul.f32 %v75, %v75
    %v108 = vmul.f32 %v76, %v76
    %v109 = vmul.f32 %v77, %v77
    %v110 = vmul.f32 %v78, %v78
    %v111 = vmul.f32 %v79, %v79
    %v112 = vmul.f32 %v80, %v80
    %v113 = vmul.f32 %v81, %v81
    %v114 = vmul.f32 %v82, %v82
    %v115 = vmul.f32 %v83, %v83
    %v116 = vmul.f32 %v84, %v84
    %v117 = vmul.f32 %v85, %v85
    %v118 = vmul.f32 %v86, %v86
    %v119 = vmul.f32 %v87, %v87
    %120 = vadd.xlane.f32.xlu0 %v88
    %v121 = vpop.xlane.xlu0 %120
    %122 = vadd.xlane.f32.xlu0 %v89
    %v123 = vpop.xlane.xlu0 %122
    %124 = vadd.xlane.f32.xlu0 %v90
    %v125 = vpop.xlane.xlu0 %124
    %126 = vadd.xlane.f32.xlu0 %v91
    %v127 = vpop.xlane.xlu0 %126
    %128 = vadd.xlane.f32.xlu0 %v92
    %v129 = vpop.xlane.xlu0 %128
    %130 = vadd.xlane.f32.xlu0 %v93
    %v131 = vpop.xlane.xlu0 %130
    %132 = vadd.xlane.f32.xlu0 %v94
    %v133 = vpop.xlane.xlu0 %132
    %134 = vadd.xlane.f32.xlu0 %v95
    %v135 = vpop.xlane.xlu0 %134
    %136 = vadd.xlane.f32.xlu0 %v96
    %v137 = vpop.xlane.xlu0 %136
    %138 = vadd.xlane.f32.xlu0 %v97
    %v139 = vpop.xlane.xlu0 %138
    %140 = vadd.xlane.f32.xlu0 %v98
    %v141 = vpop.xlane.xlu0 %140
    %142 = vadd.xlane.f32.xlu0 %v99
    %v143 = vpop.xlane.xlu0 %142
    %144 = vadd.xlane.f32.xlu0 %v100
    %v145 = vpop.xlane.xlu0 %144
    %146 = vadd.xlane.f32.xlu0 %v101
    %v147 = vpop.xlane.xlu0 %146
    %148 = vadd.xlane.f32.xlu0 %v102
    %v149 = vpop.xlane.xlu0 %148
    %150 = vadd.xlane.f32.xlu0 %v103
    %v151 = vpop.xlane.xlu0 %150
    %152 = vadd.xlane.f32.xlu0 %v104
    %v153 = vpop.xlane.xlu0 %152
    %154 = vadd.xlane.f32.xlu0 %v105
    %v155 = vpop.xlane.xlu0 %154
    %156 = vadd.xlane.f32.xlu0 %v106
    %v157 = vpop.xlane.xlu0 %156
    %158 = vadd.xlane.f32.xlu0 %v107
    %v159 = vpop.xlane.xlu0 %158
    %160 = vadd.xlane.f32.xlu0 %v108
    %v161 = vpop.xlane.xlu0 %160
    %162 = vadd.xlane.f32.xlu0 %v109
    %v163 = vpop.xlane.xlu0 %162
    %164 = vadd.xlane.f32.xlu0 %v110
    %v165 = vpop.xlane.xlu0 %164
    %166 = vadd.xlane.f32.xlu0 %v111
    %v167 = vpop.xlane.xlu0 %166
    %168 = vadd.xlane.f32.xlu0 %v112
    %v169 = vpop.xlane.xlu0 %168
    %170 = vadd.xlane.f32.xlu0 %v113
    %v171 = vpop.xlane.xlu0 %170
    %172 = vadd.xlane.f32.xlu0 %v114
    %v173 = vpop.xlane.xlu0 %172
    %174 = vadd.xlane.f32.xlu0 %v115
    %v175 = vpop.xlane.xlu0 %174
    %176 = vadd.xlane.f32.xlu0 %v116
    %v177 = vpop.xlane.xlu0 %176
    %178 = vadd.xlane.f32.xlu0 %v117
    %v179 = vpop.xlane.xlu0 %178
    %180 = vadd.xlane.f32.xlu0 %v118
    %v181 = vpop.xlane.xlu0 %180
    %182 = vadd.xlane.f32.xlu0 %v119
    %v183 = vpop.xlane.xlu0 %182
    %v184 = vmul.f32 %v121, 0.0078125
    %v185 = vmul.f32 %v123, 0.0078125
    %v186 = vmul.f32 %v125, 0.0078125
    %v187 = vmul.f32 %v127, 0.0078125
    %v188 = vmul.f32 %v129, 0.0078125
    %v189 = vmul.f32 %v131, 0.0078125
    %v190 = vmul.f32 %v133, 0.0078125
    %v191 = vmul.f32 %v135, 0.0078125
    %v192 = vmul.f32 %v137, 0.0078125
    %v193 = vmul.f32 %v139, 0.0078125
    %v194 = vmul.f32 %v141, 0.0078125
    %v195 = vmul.f32 %v143, 0.0078125
    %v196 = vmul.f32 %v145, 0.0078125
    %v197 = vmul.f32 %v147, 0.0078125
    %v198 = vmul.f32 %v149, 0.0078125
    %v199 = vmul.f32 %v151, 0.0078125
    %v200 = vmul.f32 %v153, 0.0078125
    %v201 = vmul.f32 %v155, 0.0078125
    %v202 = vmul.f32 %v157, 0.0078125
    %v203 = vmul.f32 %v159, 0.0078125
    %v204 = vmul.f32 %v161, 0.0078125
    %v205 = vmul.f32 %v163, 0.0078125
    %v206 = vmul.f32 %v165, 0.0078125
    %v207 = vmul.f32 %v167, 0.0078125
    %v208 = vmul.f32 %v169, 0.0078125
    %v209 = vmul.f32 %v171, 0.0078125
    %v210 = vmul.f32 %v173, 0.0078125
    %v211 = vmul.f32 %v175, 0.0078125
    %v212 = vmul.f32 %v177, 0.0078125
    %v213 = vmul.f32 %v179, 0.0078125
    %v214 = vmul.f32 %v181, 0.0078125
    %v215 = vmul.f32 %v183, 0.0078125
    %v216 = vadd.f32 %v184, 1e-08
    %v217 = vadd.f32 %v185, 1e-08
    %v218 = vadd.f32 %v186, 1e-08
    %v219 = vadd.f32 %v187, 1e-08
    %v220 = vadd.f32 %v188, 1e-08
    %v221 = vadd.f32 %v189, 1e-08
    %v222 = vadd.f32 %v190, 1e-08
    %v223 = vadd.f32 %v191, 1e-08
    %v224 = vadd.f32 %v192, 1e-08
    %v225 = vadd.f32 %v193, 1e-08
    %v226 = vadd.f32 %v194, 1e-08
    %v227 = vadd.f32 %v195, 1e-08
    %v228 = vadd.f32 %v196, 1e-08
    %v229 = vadd.f32 %v197, 1e-08
    %v230 = vadd.f32 %v198, 1e-08
    %v231 = vadd.f32 %v199, 1e-08
    %v232 = vadd.f32 %v200, 1e-08
    %v233 = vadd.f32 %v201, 1e-08
    %v234 = vadd.f32 %v202, 1e-08
    %v235 = vadd.f32 %v203, 1e-08
    %v236 = vadd.f32 %v204, 1e-08
    %v237 = vadd.f32 %v205, 1e-08
    %v238 = vadd.f32 %v206, 1e-08
    %v239 = vadd.f32 %v207, 1e-08
    %v240 = vadd.f32 %v208, 1e-08
    %v241 = vadd.f32 %v209, 1e-08
    %v242 = vadd.f32 %v210, 1e-08
    %v243 = vadd.f32 %v211, 1e-08
    %v244 = vadd.f32 %v212, 1e-08
    %v245 = vadd.f32 %v213, 1e-08
    %v246 = vadd.f32 %v214, 1e-08
    %v247 = vadd.f32 %v215, 1e-08
    %v248 = vrsqrt.pop %v216
    %v249 = vrsqrt.pop %v217
    %v250 = vrsqrt.pop %v218
    %v251 = vrsqrt.pop %v219
    %v252 = vrsqrt.pop %v220
    %v253 = vrsqrt.pop %v221
    %v254 = vrsqrt.pop %v222
    %v255 = vrsqrt.pop %v223
    %v256 = vrsqrt.pop %v224
    %v257 = vrsqrt.pop %v225
    %v258 = vrsqrt.pop %v226
    %v259 = vrsqrt.pop %v227
    %v260 = vrsqrt.pop %v228
    %v261 = vrsqrt.pop %v229
    %v262 = vrsqrt.pop %v230
    %v263 = vrsqrt.pop %v231
    %v264 = vrsqrt.pop %v232
    %v265 = vrsqrt.pop %v233
    %v266 = vrsqrt.pop %v234
    %v267 = vrsqrt.pop %v235
    %v268 = vrsqrt.pop %v236
    %v269 = vrsqrt.pop %v237
    %v270 = vrsqrt.pop %v238
    %v271 = vrsqrt.pop %v239
    %v272 = vrsqrt.pop %v240
    %v273 = vrsqrt.pop %v241
    %v274 = vrsqrt.pop %v242
    %v275 = vrsqrt.pop %v243
    %v276 = vrsqrt.pop %v244
    %v277 = vrsqrt.pop %v245
    %v278 = vrsqrt.pop %v246
    %v279 = vrsqrt.pop %v247
    %v280 = vmul.f32 %v248, 0.00088388345
    %v281 = vmul.f32 %v249, 0.00088388345
    %v282 = vmul.f32 %v250, 0.00088388345
    %v283 = vmul.f32 %v251, 0.00088388345
    %v284 = vmul.f32 %v252, 0.00088388345
    %v285 = vmul.f32 %v253, 0.00088388345
    %v286 = vmul.f32 %v254, 0.00088388345
    %v287 = vmul.f32 %v255, 0.00088388345
    %v288 = vmul.f32 %v256, 0.00088388345
    %v289 = vmul.f32 %v257, 0.00088388345
    %v290 = vmul.f32 %v258, 0.00088388345
    %v291 = vmul.f32 %v259, 0.00088388345
    %v292 = vmul.f32 %v260, 0.00088388345
    %v293 = vmul.f32 %v261, 0.00088388345
    %v294 = vmul.f32 %v262, 0.00088388345
    %v295 = vmul.f32 %v263, 0.00088388345
    %v296 = vmul.f32 %v264, 0.00088388345
    %v297 = vmul.f32 %v265, 0.00088388345
    %v298 = vmul.f32 %v266, 0.00088388345
    %v299 = vmul.f32 %v267, 0.00088388345
    %v300 = vmul.f32 %v268, 0.00088388345
    %v301 = vmul.f32 %v269, 0.00088388345
    %v302 = vmul.f32 %v270, 0.00088388345
    %v303 = vmul.f32 %v271, 0.00088388345
    %v304 = vmul.f32 %v272, 0.00088388345
    %v305 = vmul.f32 %v273, 0.00088388345
    %v306 = vmul.f32 %v274, 0.00088388345
    %v307 = vmul.f32 %v275, 0.00088388345
    %v308 = vmul.f32 %v276, 0.00088388345
    %v309 = vmul.f32 %v277, 0.00088388345
    %v310 = vmul.f32 %v278, 0.00088388345
    %v311 = vmul.f32 %v279, 0.00088388345
    %v312 = vmul.f32 %v56, %v280
    %v313 = vmul.f32 %v57, %v281
    %v314 = vmul.f32 %v58, %v282
    %v315 = vmul.f32 %v59, %v283
    %v316 = vmul.f32 %v60, %v284
    %v317 = vmul.f32 %v61, %v285
    %v318 = vmul.f32 %v62, %v286
    %v319 = vmul.f32 %v63, %v287
    %v320 = vmul.f32 %v64, %v288
    %v321 = vmul.f32 %v65, %v289
    %v322 = vmul.f32 %v66, %v290
    %v323 = vmul.f32 %v67, %v291
    %v324 = vmul.f32 %v68, %v292
    %v325 = vmul.f32 %v69, %v293
    %v326 = vmul.f32 %v70, %v294
    %v327 = vmul.f32 %v71, %v295
    %v328 = vmul.f32 %v72, %v296
    %v329 = vmul.f32 %v73, %v297
    %v330 = vmul.f32 %v74, %v298
    %v331 = vmul.f32 %v75, %v299
    %v332 = vmul.f32 %v76, %v300
    %v333 = vmul.f32 %v77, %v301
    %v334 = vmul.f32 %v78, %v302
    %v335 = vmul.f32 %v79, %v303
    %v336 = vmul.f32 %v80, %v304
    %v337 = vmul.f32 %v81, %v305
    %v338 = vmul.f32 %v82, %v306
    %v339 = vmul.f32 %v83, %v307
    %v340 = vmul.f32 %v84, %v308
    %v341 = vmul.f32 %v85, %v309
    %v342 = vmul.f32 %v86, %v310
    %v343 = vmul.f32 %v87, %v311
    %v344 = vld [vmem:[#allocation5] sm:$0xff]
    %v345 = vld [vmem:[#allocation5 + $0x8] sm:$0xff]
    %v346 = vld [vmem:[#allocation5 + $0x10] sm:$0xff]
    %v347 = vld [vmem:[#allocation5 + $0x18] sm:$0xff]
    %v348 = vld [vmem:[#allocation5 + $0x20] sm:$0xff]
    %v349 = vld [vmem:[#allocation5 + $0x28] sm:$0xff]
    %v350 = vld [vmem:[#allocation5 + $0x30] sm:$0xff]
    %v351 = vld [vmem:[#allocation5 + $0x38] sm:$0xff]
    %v352 = vld [vmem:[#allocation5 + $0x40] sm:$0xff]
    %v353 = vld [vmem:[#allocation5 + $0x48] sm:$0xff]
    %v354 = vld [vmem:[#allocation5 + $0x50] sm:$0xff]
    %v355 = vld [vmem:[#allocation5 + $0x58] sm:$0xff]
    %v356 = vld [vmem:[#allocation5 + $0x60] sm:$0xff]
    %v357 = vld [vmem:[#allocation5 + $0x68] sm:$0xff]
    %v358 = vld [vmem:[#allocation5 + $0x70] sm:$0xff]
    %v359 = vld [vmem:[#allocation5 + $0x78] sm:$0xff]
    %v360 = vld [vmem:[#allocation7] sm:$0x1]
    %v362 = vlaneseq
    %v363 = vshrl.u32 %v362, 7
    %v364 = vsub.s32 0, %v363
    %v365 = vrot.slane %v360, %v364
    %367 = vmatprep.subr.mxu0 0.0
    %368 = vmatpush1.xpose.msra.mxu0 %v344
    %369 = vmatprep.subr.mxu0 0.0
    %370 = vmatpush1.xpose.msra.mxu0 %v345
    %371 = vmatprep.subr.mxu0 0.0
    %372 = vmatpush1.xpose.msra.mxu0 %v346
    %373 = vmatprep.subr.mxu0 0.0
    %374 = vmatpush1.xpose.msra.mxu0 %v347
    %375 = vmatprep.subr.mxu0 0.0
    %376 = vmatpush1.xpose.msra.mxu0 %v348
    %377 = vmatprep.subr.mxu0 0.0
    %378 = vmatpush1.xpose.msra.mxu0 %v349
    %379 = vmatprep.subr.mxu0 0.0
    %380 = vmatpush1.xpose.msra.mxu0 %v350
    %381 = vmatprep.subr.mxu0 0.0
    %382 = vmatpush1.xpose.msra.mxu0 %v351
    %383 = vmatprep.subr.mxu0 0.0
    %384 = vmatpush1.xpose.msra.mxu0 %v352
    %385 = vmatprep.subr.mxu0 0.0
    %386 = vmatpush1.xpose.msra.mxu0 %v353
    %387 = vmatprep.subr.mxu0 0.0
    %388 = vmatpush1.xpose.msra.mxu0 %v354
    %389 = vmatprep.subr.mxu0 0.0
    %390 = vmatpush1.xpose.msra.mxu0 %v355
    %391 = vmatprep.subr.mxu0 0.0
    %392 = vmatpush1.xpose.msra.mxu0 %v356
    %393 = vmatprep.subr.mxu0 0.0
    %394 = vmatpush1.xpose.msra.mxu0 %v357
    %395 = vmatprep.subr.mxu0 0.0
    %396 = vmatpush1.xpose.msra.mxu0 %v358
    %397 = vmatprep.subr.mxu0 0.0
    %398 = vmatpush1.xpose.msra.mxu0 %v359
    %399 = vmatprep.subr.mxu0 0.0
    %400 = vmatpush1.xpose.msra.mxu0 0.0
    %401 = vmatprep.subr.mxu0 0.0
    %402 = vmatpush1.xpose.msra.mxu0 0.0
    %403 = vmatprep.subr.mxu0 0.0
    %404 = vmatpush1.xpose.msra.mxu0 0.0
    %405 = vmatprep.subr.mxu0 0.0
    %406 = vmatpush1.xpose.msra.mxu0 0.0
    %407 = vmatprep.subr.mxu0 0.0
    %408 = vmatpush1.xpose.msra.mxu0 0.0
    %409 = vmatprep.subr.mxu0 0.0
    %410 = vmatpush1.xpose.msra.mxu0 0.0
    %411 = vmatprep.subr.mxu0 0.0
    %412 = vmatpush1.xpose.msra.mxu0 0.0
    %413 = vmatprep.subr.mxu0 0.0
    %414 = vmatpush1.xpose.msra.mxu0 0.0
    %415 = vmatprep.subr.mxu0 0.0
    %416 = vmatpush1.xpose.msra.mxu0 0.0
    %417 = vmatprep.subr.mxu0 0.0
    %418 = vmatpush1.xpose.msra.mxu0 0.0
    %419 = vmatprep.subr.mxu0 0.0
    %420 = vmatpush1.xpose.msra.mxu0 0.0
    %421 = vmatprep.subr.mxu0 0.0
    %422 = vmatpush1.xpose.msra.mxu0 0.0
    %423 = vmatprep.subr.mxu0 0.0
    %424 = vmatpush1.xpose.msra.mxu0 0.0
    %425 = vmatprep.subr.mxu0 0.0
    %426 = vmatpush1.xpose.msra.mxu0 0.0
    %427 = vmatprep.subr.mxu0 0.0
    %428 = vmatpush1.xpose.msra.mxu0 0.0
    %429 = vmatprep.subr.mxu0 0.0
    %430 = vmatpush1.xpose.msra.mxu0 0.0
    %431 = vmatprep.mubr.f32.mxu0 0.0
    %432 = vmatmul.mubr.f32.gmra.mrb[0].mxu0 %v312
    %v433 = vpop.f32.mrb[0].mxu0
    %v434 = vadd.f32 %v365, %v433
    %v435 = vpop.f32.mrb[0].mxu0
    %436 = vmatprep.mubr.f32.mxu0 0.0
    %437 = vmatmul.mubr.f32.gmra.mrb[0].mxu0 %v313
    %v438 = vpop.f32.mrb[0].mxu0
    %v439 = vadd.f32 %v365, %v438
    %v440 = vpop.f32.mrb[0].mxu0
    %441 = vmatprep.mubr.f32.mxu0 0.0
    %442 = vmatmul.mubr.f32.gmra.mrb[0].mxu0 %v314
    %v443 = vpop.f32.mrb[0].mxu0
    %v444 = vadd.f32 %v365, %v443
    %v445 = vpop.f32.mrb[0].mxu0
    %446 = vmatprep.mubr.f32.mxu0 0.0
    %447 = vmatmul.mubr.f32.gmra.mrb[0].mxu0 %v315
    %v448 = vpop.f32.mrb[0].mxu0
    %v449 = vadd.f32 %v365, %v448
    %v450 = vpop.f32.mrb[0].mxu0
    %451 = vmatprep.mubr.f32.mxu0 0.0
    %452 = vmatmul.mubr.f32.gmra.mrb[0].mxu0 %v316
    %v453 = vpop.f32.mrb[0].mxu0
    %v454 = vadd.f32 %v365, %v453
    %v455 = vpop.f32.mrb[0].mxu0
    %456 = vmatprep.mubr.f32.mxu0 0.0
    %457 = vmatmul.mubr.f32.gmra.mrb[0].mxu0 %v317
    %v458 = vpop.f32.mrb[0].mxu0
    %v459 = vadd.f32 %v365, %v458
    %v460 = vpop.f32.mrb[0].mxu0
    %461 = vmatprep.mubr.f32.mxu0 0.0
    %462 = vmatmul.mubr.f32.gmra.mrb[0].mxu0 %v318
    %v463 = vpop.f32.mrb[0].mxu0
    %v464 = vadd.f32 %v365, %v463
    %v465 = vpop.f32.mrb[0].mxu0
    %466 = vmatprep.mubr.f32.mxu0 0.0
    %467 = vmatmul.mubr.f32.gmra.mrb[0].mxu0 %v319
    %v468 = vpop.f32.mrb[0].mxu0
    %v469 = vadd.f32 %v365, %v468
    %v470 = vpop.f32.mrb[0].mxu0
    %471 = vmatprep.mubr.f32.mxu0 0.0
    %472 = vmatmul.mubr.f32.gmra.mrb[0].mxu0 %v320
    %v473 = vpop.f32.mrb[0].mxu0
    %v474 = vadd.f32 %v365, %v473
    %v475 = vpop.f32.mrb[0].mxu0
    %476 = vmatprep.mubr.f32.mxu0 0.0
    %477 = vmatmul.mubr.f32.gmra.mrb[0].mxu0 %v321
    %v478 = vpop.f32.mrb[0].mxu0
    %v479 = vadd.f32 %v365, %v478
    %v480 = vpop.f32.mrb[0].mxu0
    %481 = vmatprep.mubr.f32.mxu0 0.0
    %482 = vmatmul.mubr.f32.gmra.mrb[0].mxu0 %v322
    %v483 = vpop.f32.mrb[0].mxu0
    %v484 = vadd.f32 %v365, %v483
    %v485 = vpop.f32.mrb[0].mxu0
    %486 = vmatprep.mubr.f32.mxu0 0.0
    %487 = vmatmul.mubr.f32.gmra.mrb[0].mxu0 %v323
    %v488 = vpop.f32.mrb[0].mxu0
    %v489 = vadd.f32 %v365, %v488
    %v490 = vpop.f32.mrb[0].mxu0
    %491 = vmatprep.mubr.f32.mxu0 0.0
    %492 = vmatmul.mubr.f32.gmra.mrb[0].mxu0 %v324
    %v493 = vpop.f32.mrb[0].mxu0
    %v494 = vadd.f32 %v365, %v493
    %v495 = vpop.f32.mrb[0].mxu0
    %496 = vmatprep.mubr.f32.mxu0 0.0
    %497 = vmatmul.mubr.f32.gmra.mrb[0].mxu0 %v325
    %v498 = vpop.f32.mrb[0].mxu0
    %v499 = vadd.f32 %v365, %v498
    %v500 = vpop.f32.mrb[0].mxu0
    %501 = vmatprep.mubr.f32.mxu0 0.0
    %502 = vmatmul.mubr.f32.gmra.mrb[0].mxu0 %v326
    %v503 = vpop.f32.mrb[0].mxu0
    %v504 = vadd.f32 %v365, %v503
    %v505 = vpop.f32.mrb[0].mxu0
    %506 = vmatprep.mubr.f32.mxu0 0.0
    %507 = vmatmul.mubr.f32.gmra.mrb[0].mxu0 %v327
    %v508 = vpop.f32.mrb[0].mxu0
    %v509 = vadd.f32 %v365, %v508
    %v510 = vpop.f32.mrb[0].mxu0
    %511 = vmatprep.mubr.f32.mxu0 0.0
    %512 = vmatmul.mubr.f32.gmra.mrb[0].mxu0 %v328
    %v513 = vpop.f32.mrb[0].mxu0
    %v514 = vadd.f32 %v365, %v513
    %v515 = vpop.f32.mrb[0].mxu0
    %516 = vmatprep.mubr.f32.mxu0 0.0
    %517 = vmatmul.mubr.f32.gmra.mrb[0].mxu0 %v329
    %v518 = vpop.f32.mrb[0].mxu0
    %v519 = vadd.f32 %v365, %v518
    %v520 = vpop.f32.mrb[0].mxu0
    %521 = vmatprep.mubr.f32.mxu0 0.0
    %522 = vmatmul.mubr.f32.gmra.mrb[0].mxu0 %v330
    %v523 = vpop.f32.mrb[0].mxu0
    %v524 = vadd.f32 %v365, %v523
    %v525 = vpop.f32.mrb[0].mxu0
    %526 = vmatprep.mubr.f32.mxu0 0.0
    %527 = vmatmul.mubr.f32.gmra.mrb[0].mxu0 %v331
    %v528 = vpop.f32.mrb[0].mxu0
    %v529 = vadd.f32 %v365, %v528
    %v530 = vpop.f32.mrb[0].mxu0
    %531 = vmatprep.mubr.f32.mxu0 0.0
    %532 = vmatmul.mubr.f32.gmra.mrb[0].mxu0 %v332
    %v533 = vpop.f32.mrb[0].mxu0
    %v534 = vadd.f32 %v365, %v533
    %v535 = vpop.f32.mrb[0].mxu0
    %536 = vmatprep.mubr.f32.mxu0 0.0
    %537 = vmatmul.mubr.f32.gmra.mrb[0].mxu0 %v333
    %v538 = vpop.f32.mrb[0].mxu0
    %v539 = vadd.f32 %v365, %v538
    %v540 = vpop.f32.mrb[0].mxu0
    %541 = vmatprep.mubr.f32.mxu0 0.0
    %542 = vmatmul.mubr.f32.gmra.mrb[0].mxu0 %v334
    %v543 = vpop.f32.mrb[0].mxu0
    %v544 = vadd.f32 %v365, %v543
    %v545 = vpop.f32.mrb[0].mxu0
    %546 = vmatprep.mubr.f32.mxu0 0.0
    %547 = vmatmul.mubr.f32.gmra.mrb[0].mxu0 %v335
    %v548 = vpop.f32.mrb[0].mxu0
    %v549 = vadd.f32 %v365, %v548
    %v550 = vpop.f32.mrb[0].mxu0
    %551 = vmatprep.mubr.f32.mxu0 0.0
    %552 = vmatmul.mubr.f32.gmra.mrb[0].mxu0 %v336
    %v553 = vpop.f32.mrb[0].mxu0
    %v554 = vadd.f32 %v365, %v553
    %v555 = vpop.f32.mrb[0].mxu0
    %556 = vmatprep.mubr.f32.mxu0 0.0
    %557 = vmatmul.mubr.f32.gmra.mrb[0].mxu0 %v337
    %v558 = vpop.f32.mrb[0].mxu0
    %v559 = vadd.f32 %v365, %v558
    %v560 = vpop.f32.mrb[0].mxu0
    %561 = vmatprep.mubr.f32.mxu0 0.0
    %562 = vmatmul.mubr.f32.gmra.mrb[0].mxu0 %v338
    %v563 = vpop.f32.mrb[0].mxu0
    %v564 = vadd.f32 %v365, %v563
    %v565 = vpop.f32.mrb[0].mxu0
    %566 = vmatprep.mubr.f32.mxu0 0.0
    %567 = vmatmul.mubr.f32.gmra.mrb[0].mxu0 %v339
    %v568 = vpop.f32.mrb[0].mxu0
    %v569 = vadd.f32 %v365, %v568
    %v570 = vpop.f32.mrb[0].mxu0
    %571 = vmatprep.mubr.f32.mxu0 0.0
    %572 = vmatmul.mubr.f32.gmra.mrb[0].mxu0 %v340
    %v573 = vpop.f32.mrb[0].mxu0
    %v574 = vadd.f32 %v365, %v573
    %v575 = vpop.f32.mrb[0].mxu0
    %576 = vmatprep.mubr.f32.mxu0 0.0
    %577 = vmatmul.mubr.f32.gmra.mrb[0].mxu0 %v341
    %v578 = vpop.f32.mrb[0].mxu0
    %v579 = vadd.f32 %v365, %v578
    %v580 = vpop.f32.mrb[0].mxu0
    %581 = vmatprep.mubr.f32.mxu0 0.0
    %582 = vmatmul.mubr.f32.gmra.mrb[0].mxu0 %v342
    %v583 = vpop.f32.mrb[0].mxu0
    %v584 = vadd.f32 %v365, %v583
    %v585 = vpop.f32.mrb[0].mxu0
    %586 = vmatprep.mubr.f32.mxu0 0.0
    %587 = vmatmul.mubr.f32.gmra.mrb[0].mxu0 %v343
    %v588 = vpop.f32.mrb[0].mxu0
    %v589 = vadd.f32 %v365, %v588
    %v590 = vpop.f32.mrb[0].mxu0
    %591 = vdwg.mxu0
    %v592 = vmul.f32 %v434, 0.00125
    %v593 = vmul.f32 %v439, 0.00125
    %v594 = vmul.f32 %v444, 0.00125
    %v595 = vmul.f32 %v449, 0.00125
    %v596 = vmul.f32 %v454, 0.00125
    %v597 = vmul.f32 %v459, 0.00125
    %v598 = vmul.f32 %v464, 0.00125
    %v599 = vmul.f32 %v469, 0.00125
    %v600 = vmul.f32 %v474, 0.00125
    %v601 = vmul.f32 %v479, 0.00125
    %v602 = vmul.f32 %v484, 0.00125
    %v603 = vmul.f32 %v489, 0.00125
    %v604 = vmul.f32 %v494, 0.00125
    %v605 = vmul.f32 %v499, 0.00125
    %v606 = vmul.f32 %v504, 0.00125
    %v607 = vmul.f32 %v509, 0.00125
    %v608 = vmul.f32 %v514, 0.00125
    %v609 = vmul.f32 %v519, 0.00125
    %v610 = vmul.f32 %v524, 0.00125
    %v611 = vmul.f32 %v529, 0.00125
    %v612 = vmul.f32 %v534, 0.00125
    %v613 = vmul.f32 %v539, 0.00125
    %v614 = vmul.f32 %v544, 0.00125
    %v615 = vmul.f32 %v549, 0.00125
    %v616 = vmul.f32 %v554, 0.00125
    %v617 = vmul.f32 %v559, 0.00125
    %v618 = vmul.f32 %v564, 0.00125
    %v619 = vmul.f32 %v569, 0.00125
    %v620 = vmul.f32 %v574, 0.00125
    %v621 = vmul.f32 %v579, 0.00125
    %v622 = vmul.f32 %v584, 0.00125
    %v623 = vmul.f32 %v589, 0.00125
    %v624 = vmul.f32 %v434, 0.00025
    %v625 = vmul.f32 %v439, 0.00025
    %v626 = vmul.f32 %v444, 0.00025
    %v627 = vmul.f32 %v449, 0.00025
    %v628 = vmul.f32 %v454, 0.00025
    %v629 = vmul.f32 %v459, 0.00025
    %v630 = vmul.f32 %v464, 0.00025
    %v631 = vmul.f32 %v469, 0.00025
    %v632 = vmul.f32 %v474, 0.00025
    %v633 = vmul.f32 %v479, 0.00025
    %v634 = vmul.f32 %v484, 0.00025
    %v635 = vmul.f32 %v489, 0.00025
    %v636 = vmul.f32 %v494, 0.00025
    %v637 = vmul.f32 %v499, 0.00025
    %v638 = vmul.f32 %v504, 0.00025
    %v639 = vmul.f32 %v509, 0.00025
    %v640 = vmul.f32 %v514, 0.00025
    %v641 = vmul.f32 %v519, 0.00025
    %v642 = vmul.f32 %v524, 0.00025
    %v643 = vmul.f32 %v529, 0.00025
    %v644 = vmul.f32 %v534, 0.00025
    %v645 = vmul.f32 %v539, 0.00025
    %v646 = vmul.f32 %v544, 0.00025
    %v647 = vmul.f32 %v549, 0.00025
    %v648 = vmul.f32 %v554, 0.00025
    %v649 = vmul.f32 %v559, 0.00025
    %v650 = vmul.f32 %v564, 0.00025
    %v651 = vmul.f32 %v569, 0.00025
    %v652 = vmul.f32 %v574, 0.00025
    %v653 = vmul.f32 %v579, 0.00025
    %v654 = vmul.f32 %v584, 0.00025
    %v655 = vmul.f32 %v589, 0.00025
    %v656 = vmax.f32 %v592, %v624
    %v657 = vmax.f32 %v593, %v625
    %v658 = vmax.f32 %v594, %v626
    %v659 = vmax.f32 %v595, %v627
    %v660 = vmax.f32 %v596, %v628
    %v661 = vmax.f32 %v597, %v629
    %v662 = vmax.f32 %v598, %v630
    %v663 = vmax.f32 %v599, %v631
    %v664 = vmax.f32 %v600, %v632
    %v665 = vmax.f32 %v601, %v633
    %v666 = vmax.f32 %v602, %v634
    %v667 = vmax.f32 %v603, %v635
    %v668 = vmax.f32 %v604, %v636
    %v669 = vmax.f32 %v605, %v637
    %v670 = vmax.f32 %v606, %v638
    %v671 = vmax.f32 %v607, %v639
    %v672 = vmax.f32 %v608, %v640
    %v673 = vmax.f32 %v609, %v641
    %v674 = vmax.f32 %v610, %v642
    %v675 = vmax.f32 %v611, %v643
    %v676 = vmax.f32 %v612, %v644
    %v677 = vmax.f32 %v613, %v645
    %v678 = vmax.f32 %v614, %v646
    %v679 = vmax.f32 %v615, %v647
    %v680 = vmax.f32 %v616, %v648
    %v681 = vmax.f32 %v617, %v649
    %v682 = vmax.f32 %v618, %v650
    %v683 = vmax.f32 %v619, %v651
    %v684 = vmax.f32 %v620, %v652
    %v685 = vmax.f32 %v621, %v653
    %v686 = vmax.f32 %v622, %v654
    %v687 = vmax.f32 %v623, %v655
    %s688 = scalar_lea.vmem [#allocation5], 128
    %v689 = vld [vmem:[%s688] sm:$0xff]
    %v690 = vld [vmem:[%s688 + $0x8] sm:$0xff]
    %v691 = vld [vmem:[%s688 + $0x10] sm:$0xff]
    %v692 = vld [vmem:[%s688 + $0x18] sm:$0xff]
    %v693 = vld [vmem:[%s688 + $0x20] sm:$0xff]
    %v694 = vld [vmem:[%s688 + $0x28] sm:$0xff]
    %v695 = vld [vmem:[%s688 + $0x30] sm:$0xff]
    %v696 = vld [vmem:[%s688 + $0x38] sm:$0xff]
    %v697 = vld [vmem:[%s688 + $0x40] sm:$0xff]
    %v698 = vld [vmem:[%s688 + $0x48] sm:$0xff]
    %v699 = vld [vmem:[%s688 + $0x50] sm:$0xff]
    %v700 = vld [vmem:[%s688 + $0x58] sm:$0xff]
    %v701 = vld [vmem:[%s688 + $0x60] sm:$0xff]
    %v702 = vld [vmem:[%s688 + $0x68] sm:$0xff]
    %v703 = vld [vmem:[%s688 + $0x70] sm:$0xff]
    %v704 = vld [vmem:[%s688 + $0x78] sm:$0xff]
    %s705 = scalar_lea.vmem [#allocation7], 1
    %v706 = vld [vmem:[%s705] sm:$0x1]
    %v708 = vlaneseq
    %v709 = vshrl.u32 %v708, 7
    %v710 = vsub.s32 0, %v709
    %v711 = vrot.slane %v706, %v710
    %713 = vmatprep.subr.mxu0 0.0
    %714 = vmatpush1.xpose.msra.mxu0 %v689
    %715 = vmatprep.subr.mxu0 0.0
    %716 = vmatpush1.xpose.msra.mxu0 %v690
    %717 = vmatprep.subr.mxu0 0.0
    %718 = vmatpush1.xpose.msra.mxu0 %v691
    %719 = vmatprep.subr.mxu0 0.0
    %720 = vmatpush1.xpose.msra.mxu0 %v692
    %721 = vmatprep.subr.mxu0 0.0
    %722 = vmatpush1.xpose.msra.mxu0 %v693
    %723 = vmatprep.subr.mxu0 0.0
    %724 = vmatpush1.xpose.msra.mxu0 %v694
    %725 = vmatprep.subr.mxu0 0.0
    %726 = vmatpush1.xpose.msra.mxu0 %v695
    %727 = vmatprep.subr.mxu0 0.0
    %728 = vmatpush1.xpose.msra.mxu0 %v696
    %729 = vmatprep.subr.mxu0 0.0
    %730 = vmatpush1.xpose.msra.mxu0 %v697
    %731 = vmatprep.subr.mxu0 0.0
    %732 = vmatpush1.xpose.msra.mxu0 %v698
    %733 = vmatprep.subr.mxu0 0.0
    %734 = vmatpush1.xpose.msra.mxu0 %v699
    %735 = vmatprep.subr.mxu0 0.0
    %736 = vmatpush1.xpose.msra.mxu0 %v700
    %737 = vmatprep.subr.mxu0 0.0
    %738 = vmatpush1.xpose.msra.mxu0 %v701
    %739 = vmatprep.subr.mxu0 0.0
    %740 = vmatpush1.xpose.msra.mxu0 %v702
    %741 = vmatprep.subr.mxu0 0.0
    %742 = vmatpush1.xpose.msra.mxu0 %v703
    %743 = vmatprep.subr.mxu0 0.0
    %744 = vmatpush1.xpose.msra.mxu0 %v704
    %745 = vmatprep.subr.mxu0 0.0
    %746 = vmatpush1.xpose.msra.mxu0 0.0
    %747 = vmatprep.subr.mxu0 0.0
    %748 = vmatpush1.xpose.msra.mxu0 0.0
    %749 = vmatprep.subr.mxu0 0.0
    %750 = vmatpush1.xpose.msra.mxu0 0.0
    %751 = vmatprep.subr.mxu0 0.0
    %752 = vmatpush1.xpose.msra.mxu0 0.0
    %753 = vmatprep.subr.mxu0 0.0
    %754 = vmatpush1.xpose.msra.mxu0 0.0
    %755 = vmatprep.subr.mxu0 0.0
    %756 = vmatpush1.xpose.msra.mxu0 0.0
    %757 = vmatprep.subr.mxu0 0.0
    %758 = vmatpush1.xpose.msra.mxu0 0.0
    %759 = vmatprep.subr.mxu0 0.0
    %760 = vmatpush1.xpose.msra.mxu0 0.0
    %761 = vmatprep.subr.mxu0 0.0
    %762 = vmatpush1.xpose.msra.mxu0 0.0
    %763 = vmatprep.subr.mxu0 0.0
    %764 = vmatpush1.xpose.msra.mxu0 0.0
    %765 = vmatprep.subr.mxu0 0.0
    %766 = vmatpush1.xpose.msra.mxu0 0.0
    %767 = vmatprep.subr.mxu0 0.0
    %768 = vmatpush1.xpose.msra.mxu0 0.0
    %769 = vmatprep.subr.mxu0 0.0
    %770 = vmatpush1.xpose.msra.mxu0 0.0
    %771 = vmatprep.subr.mxu0 0.0
    %772 = vmatpush1.xpose.msra.mxu0 0.0
    %773 = vmatprep.subr.mxu0 0.0
    %774 = vmatpush1.xpose.msra.mxu0 0.0
    %775 = vmatprep.subr.mxu0 0.0
    %776 = vmatpush1.xpose.msra.mxu0 0.0
    %777 = vmatprep.mubr.f32.mxu0 0.0
    %778 = vmatmul.mubr.f32.gmra.mrb[0].mxu0 %v656
    %v779 = vpop.f32.mrb[0].mxu0
    %v780 = vadd.f32 %v711, %v779
    %v781 = vpop.f32.mrb[0].mxu0
    %782 = vmatprep.mubr.f32.mxu0 0.0
    %783 = vmatmul.mubr.f32.gmra.mrb[0].mxu0 %v657
    %v784 = vpop.f32.mrb[0].mxu0
    %v785 = vadd.f32 %v711, %v784
    %v786 = vpop.f32.mrb[0].mxu0
    %787 = vmatprep.mubr.f32.mxu0 0.0
    %788 = vmatmul.mubr.f32.gmra.mrb[0].mxu0 %v658
    %v789 = vpop.f32.mrb[0].mxu0
    %v790 = vadd.f32 %v711, %v789
    %v791 = vpop.f32.mrb[0].mxu0
    %792 = vmatprep.mubr.f32.mxu0 0.0
    %793 = vmatmul.mubr.f32.gmra.mrb[0].mxu0 %v659
    %v794 = vpop.f32.mrb[0].mxu0
    %v795 = vadd.f32 %v711, %v794
    %v796 = vpop.f32.mrb[0].mxu0
    %797 = vmatprep.mubr.f32.mxu0 0.0
    %798 = vmatmul.mubr.f32.gmra.mrb[0].mxu0 %v660
    %v799 = vpop.f32.mrb[0].mxu0
    %v800 = vadd.f32 %v711, %v799
    %v801 = vpop.f32.mrb[0].mxu0
    %802 = vmatprep.mubr.f32.mxu0 0.0
    %803 = vmatmul.mubr.f32.gmra.mrb[0].mxu0 %v661
    %v804 = vpop.f32.mrb[0].mxu0
    %v805 = vadd.f32 %v711, %v804
    %v806 = vpop.f32.mrb[0].mxu0
    %807 = vmatprep.mubr.f32.mxu0 0.0
    %808 = vmatmul.mubr.f32.gmra.mrb[0].mxu0 %v662
    %v809 = vpop.f32.mrb[0].mxu0
    %v810 = vadd.f32 %v711, %v809
    %v811 = vpop.f32.mrb[0].mxu0
    %812 = vmatprep.mubr.f32.mxu0 0.0
    %813 = vmatmul.mubr.f32.gmra.mrb[0].mxu0 %v663
    %v814 = vpop.f32.mrb[0].mxu0
    %v815 = vadd.f32 %v711, %v814
    %v816 = vpop.f32.mrb[0].mxu0
    %817 = vmatprep.mubr.f32.mxu0 0.0
    %818 = vmatmul.mubr.f32.gmra.mrb[0].mxu0 %v664
    %v819 = vpop.f32.mrb[0].mxu0
    %v820 = vadd.f32 %v711, %v819
    %v821 = vpop.f32.mrb[0].mxu0
    %822 = vmatprep.mubr.f32.mxu0 0.0
    %823 = vmatmul.mubr.f32.gmra.mrb[0].mxu0 %v665
    %v824 = vpop.f32.mrb[0].mxu0
    %v825 = vadd.f32 %v711, %v824
    %v826 = vpop.f32.mrb[0].mxu0
    %827 = vmatprep.mubr.f32.mxu0 0.0
    %828 = vmatmul.mubr.f32.gmra.mrb[0].mxu0 %v666
    %v829 = vpop.f32.mrb[0].mxu0
    %v830 = vadd.f32 %v711, %v829
    %v831 = vpop.f32.mrb[0].mxu0
    %832 = vmatprep.mubr.f32.mxu0 0.0
    %833 = vmatmul.mubr.f32.gmra.mrb[0].mxu0 %v667
    %v834 = vpop.f32.mrb[0].mxu0
    %v835 = vadd.f32 %v711, %v834
    %v836 = vpop.f32.mrb[0].mxu0
    %837 = vmatprep.mubr.f32.mxu0 0.0
    %838 = vmatmul.mubr.f32.gmra.mrb[0].mxu0 %v668
    %v839 = vpop.f32.mrb[0].mxu0
    %v840 = vadd.f32 %v711, %v839
    %v841 = vpop.f32.mrb[0].mxu0
    %842 = vmatprep.mubr.f32.mxu0 0.0
    %843 = vmatmul.mubr.f32.gmra.mrb[0].mxu0 %v669
    %v844 = vpop.f32.mrb[0].mxu0
    %v845 = vadd.f32 %v711, %v844
    %v846 = vpop.f32.mrb[0].mxu0
    %847 = vmatprep.mubr.f32.mxu0 0.0
    %848 = vmatmul.mubr.f32.gmra.mrb[0].mxu0 %v670
    %v849 = vpop.f32.mrb[0].mxu0
    %v850 = vadd.f32 %v711, %v849
    %v851 = vpop.f32.mrb[0].mxu0
    %852 = vmatprep.mubr.f32.mxu0 0.0
    %853 = vmatmul.mubr.f32.gmra.mrb[0].mxu0 %v671
    %v854 = vpop.f32.mrb[0].mxu0
    %v855 = vadd.f32 %v711, %v854
    %v856 = vpop.f32.mrb[0].mxu0
    %857 = vmatprep.mubr.f32.mxu0 0.0
    %858 = vmatmul.mubr.f32.gmra.mrb[0].mxu0 %v672
    %v859 = vpop.f32.mrb[0].mxu0
    %v860 = vadd.f32 %v711, %v859
    %v861 = vpop.f32.mrb[0].mxu0
    %862 = vmatprep.mubr.f32.mxu0 0.0
    %863 = vmatmul.mubr.f32.gmra.mrb[0].mxu0 %v673
    %v864 = vpop.f32.mrb[0].mxu0
    %v865 = vadd.f32 %v711, %v864
    %v866 = vpop.f32.mrb[0].mxu0
    %867 = vmatprep.mubr.f32.mxu0 0.0
    %868 = vmatmul.mubr.f32.gmra.mrb[0].mxu0 %v674
    %v869 = vpop.f32.mrb[0].mxu0
    %v870 = vadd.f32 %v711, %v869
    %v871 = vpop.f32.mrb[0].mxu0
    %872 = vmatprep.mubr.f32.mxu0 0.0
    %873 = vmatmul.mubr.f32.gmra.mrb[0].mxu0 %v675
    %v874 = vpop.f32.mrb[0].mxu0
    %v875 = vadd.f32 %v711, %v874
    %v876 = vpop.f32.mrb[0].mxu0
    %877 = vmatprep.mubr.f32.mxu0 0.0
    %878 = vmatmul.mubr.f32.gmra.mrb[0].mxu0 %v676
    %v879 = vpop.f32.mrb[0].mxu0
    %v880 = vadd.f32 %v711, %v879
    %v881 = vpop.f32.mrb[0].mxu0
    %882 = vmatprep.mubr.f32.mxu0 0.0
    %883 = vmatmul.mubr.f32.gmra.mrb[0].mxu0 %v677
    %v884 = vpop.f32.mrb[0].mxu0
    %v885 = vadd.f32 %v711, %v884
    %v886 = vpop.f32.mrb[0].mxu0
    %887 = vmatprep.mubr.f32.mxu0 0.0
    %888 = vmatmul.mubr.f32.gmra.mrb[0].mxu0 %v678
    %v889 = vpop.f32.mrb[0].mxu0
    %v890 = vadd.f32 %v711, %v889
    %v891 = vpop.f32.mrb[0].mxu0
    %892 = vmatprep.mubr.f32.mxu0 0.0
    %893 = vmatmul.mubr.f32.gmra.mrb[0].mxu0 %v679
    %v894 = vpop.f32.mrb[0].mxu0
    %v895 = vadd.f32 %v711, %v894
    %v896 = vpop.f32.mrb[0].mxu0
    %897 = vmatprep.mubr.f32.mxu0 0.0
    %898 = vmatmul.mubr.f32.gmra.mrb[0].mxu0 %v680
    %v899 = vpop.f32.mrb[0].mxu0
    %v900 = vadd.f32 %v711, %v899
    %v901 = vpop.f32.mrb[0].mxu0
    %902 = vmatprep.mubr.f32.mxu0 0.0
    %903 = vmatmul.mubr.f32.gmra.mrb[0].mxu0 %v681
    %v904 = vpop.f32.mrb[0].mxu0
    %v905 = vadd.f32 %v711, %v904
    %v906 = vpop.f32.mrb[0].mxu0
    %907 = vmatprep.mubr.f32.mxu0 0.0
    %908 = vmatmul.mubr.f32.gmra.mrb[0].mxu0 %v682
    %v909 = vpop.f32.mrb[0].mxu0
    %v910 = vadd.f32 %v711, %v909
    %v911 = vpop.f32.mrb[0].mxu0
    %912 = vmatprep.mubr.f32.mxu0 0.0
    %913 = vmatmul.mubr.f32.gmra.mrb[0].mxu0 %v683
    %v914 = vpop.f32.mrb[0].mxu0
    %v915 = vadd.f32 %v711, %v914
    %v916 = vpop.f32.mrb[0].mxu0
    %917 = vmatprep.mubr.f32.mxu0 0.0
    %918 = vmatmul.mubr.f32.gmra.mrb[0].mxu0 %v684
    %v919 = vpop.f32.mrb[0].mxu0
    %v920 = vadd.f32 %v711, %v919
    %v921 = vpop.f32.mrb[0].mxu0
    %922 = vmatprep.mubr.f32.mxu0 0.0
    %923 = vmatmul.mubr.f32.gmra.mrb[0].mxu0 %v685
    %v924 = vpop.f32.mrb[0].mxu0
    %v925 = vadd.f32 %v711, %v924
    %v926 = vpop.f32.mrb[0].mxu0
    %927 = vmatprep.mubr.f32.mxu0 0.0
    %928 = vmatmul.mubr.f32.gmra.mrb[0].mxu0 %v686
    %v929 = vpop.f32.mrb[0].mxu0
    %v930 = vadd.f32 %v711, %v929
    %v931 = vpop.f32.mrb[0].mxu0
    %932 = vmatprep.mubr.f32.mxu0 0.0
    %933 = vmatmul.mubr.f32.gmra.mrb[0].mxu0 %v687
    %v934 = vpop.f32.mrb[0].mxu0
    %v935 = vadd.f32 %v711, %v934
    %v936 = vpop.f32.mrb[0].mxu0
    %937 = vdwg.mxu0
    %v938 = vmul.f32 %v780, 0.00125
    %v939 = vmul.f32 %v785, 0.00125
    %v940 = vmul.f32 %v790, 0.00125
    %v941 = vmul.f32 %v795, 0.00125
    %v942 = vmul.f32 %v800, 0.00125
    %v943 = vmul.f32 %v805, 0.00125
    %v944 = vmul.f32 %v810, 0.00125
    %v945 = vmul.f32 %v815, 0.00125
    %v946 = vmul.f32 %v820, 0.00125
    %v947 = vmul.f32 %v825, 0.00125
    %v948 = vmul.f32 %v830, 0.00125
    %v949 = vmul.f32 %v835, 0.00125
    %v950 = vmul.f32 %v840, 0.00125
    %v951 = vmul.f32 %v845, 0.00125
    %v952 = vmul.f32 %v850, 0.00125
    %v953 = vmul.f32 %v855, 0.00125
    %v954 = vmul.f32 %v860, 0.00125
    %v955 = vmul.f32 %v865, 0.00125
    %v956 = vmul.f32 %v870, 0.00125
    %v957 = vmul.f32 %v875, 0.00125
    %v958 = vmul.f32 %v880, 0.00125
    %v959 = vmul.f32 %v885, 0.00125
    %v960 = vmul.f32 %v890, 0.00125
    %v961 = vmul.f32 %v895, 0.00125
    %v962 = vmul.f32 %v900, 0.00125
    %v963 = vmul.f32 %v905, 0.00125
    %v964 = vmul.f32 %v910, 0.00125
    %v965 = vmul.f32 %v915, 0.00125
    %v966 = vmul.f32 %v920, 0.00125
    %v967 = vmul.f32 %v925, 0.00125
    %v968 = vmul.f32 %v930, 0.00125
    %v969 = vmul.f32 %v935, 0.00125
    %v970 = vmul.f32 %v780, 0.00025
    %v971 = vmul.f32 %v785, 0.00025
    %v972 = vmul.f32 %v790, 0.00025
    %v973 = vmul.f32 %v795, 0.00025
    %v974 = vmul.f32 %v800, 0.00025
    %v975 = vmul.f32 %v805, 0.00025
    %v976 = vmul.f32 %v810, 0.00025
    %v977 = vmul.f32 %v815, 0.00025
    %v978 = vmul.f32 %v820, 0.00025
    %v979 = vmul.f32 %v825, 0.00025
    %v980 = vmul.f32 %v830, 0.00025
    %v981 = vmul.f32 %v835, 0.00025
    %v982 = vmul.f32 %v840, 0.00025
    %v983 = vmul.f32 %v845, 0.00025
    %v984 = vmul.f32 %v850, 0.00025
    %v985 = vmul.f32 %v855, 0.00025
    %v986 = vmul.f32 %v860, 0.00025
    %v987 = vmul.f32 %v865, 0.00025
    %v988 = vmul.f32 %v870, 0.00025
    %v989 = vmul.f32 %v875, 0.00025
    %v990 = vmul.f32 %v880, 0.00025
    %v991 = vmul.f32 %v885, 0.00025
    %v992 = vmul.f32 %v890, 0.00025
    %v993 = vmul.f32 %v895, 0.00025
    %v994 = vmul.f32 %v900, 0.00025
    %v995 = vmul.f32 %v905, 0.00025
    %v996 = vmul.f32 %v910, 0.00025
    %v997 = vmul.f32 %v915, 0.00025
    %v998 = vmul.f32 %v920, 0.00025
    %v999 = vmul.f32 %v925, 0.00025
    %v1000 = vmul.f32 %v930, 0.00025
    %v1001 = vmul.f32 %v935, 0.00025
    %v1002 = vmax.f32 %v938, %v970
    %v1003 = vmax.f32 %v939, %v971
    %v1004 = vmax.f32 %v940, %v972
    %v1005 = vmax.f32 %v941, %v973
    %v1006 = vmax.f32 %v942, %v974
    %v1007 = vmax.f32 %v943, %v975
    %v1008 = vmax.f32 %v944, %v976
    %v1009 = vmax.f32 %v945, %v977
    %v1010 = vmax.f32 %v946, %v978
    %v1011 = vmax.f32 %v947, %v979
    %v1012 = vmax.f32 %v948, %v980
    %v1013 = vmax.f32 %v949, %v981
    %v1014 = vmax.f32 %v950, %v982
    %v1015 = vmax.f32 %v951, %v983
    %v1016 = vmax.f32 %v952, %v984
    %v1017 = vmax.f32 %v953, %v985
    %v1018 = vmax.f32 %v954, %v986
    %v1019 = vmax.f32 %v955, %v987
    %v1020 = vmax.f32 %v956, %v988
    %v1021 = vmax.f32 %v957, %v989
    %v1022 = vmax.f32 %v958, %v990
    %v1023 = vmax.f32 %v959, %v991
    %v1024 = vmax.f32 %v960, %v992
    %v1025 = vmax.f32 %v961, %v993
    %v1026 = vmax.f32 %v962, %v994
    %v1027 = vmax.f32 %v963, %v995
    %v1028 = vmax.f32 %v964, %v996
    %v1029 = vmax.f32 %v965, %v997
    %v1030 = vmax.f32 %v966, %v998
    %v1031 = vmax.f32 %v967, %v999
    %v1032 = vmax.f32 %v968, %v1000
    %v1033 = vmax.f32 %v969, %v1001
    %s1034 = scalar_lea.vmem [#allocation5], 256
    %v1035 = vld [vmem:[%s1034] sm:$0xff]
    %v1036 = vld [vmem:[%s1034 + $0x8] sm:$0xff]
    %v1037 = vld [vmem:[%s1034 + $0x10] sm:$0xff]
    %v1038 = vld [vmem:[%s1034 + $0x18] sm:$0xff]
    %v1039 = vld [vmem:[%s1034 + $0x20] sm:$0xff]
    %v1040 = vld [vmem:[%s1034 + $0x28] sm:$0xff]
    %v1041 = vld [vmem:[%s1034 + $0x30] sm:$0xff]
    %v1042 = vld [vmem:[%s1034 + $0x38] sm:$0xff]
    %v1043 = vld [vmem:[%s1034 + $0x40] sm:$0xff]
    %v1044 = vld [vmem:[%s1034 + $0x48] sm:$0xff]
    %v1045 = vld [vmem:[%s1034 + $0x50] sm:$0xff]
    %v1046 = vld [vmem:[%s1034 + $0x58] sm:$0xff]
    %v1047 = vld [vmem:[%s1034 + $0x60] sm:$0xff]
    %v1048 = vld [vmem:[%s1034 + $0x68] sm:$0xff]
    %v1049 = vld [vmem:[%s1034 + $0x70] sm:$0xff]
    %v1050 = vld [vmem:[%s1034 + $0x78] sm:$0xff]
    %s1051 = scalar_lea.vmem [#allocation7], 2
    %v1052 = vld [vmem:[%s1051] sm:$0x1]
    %v1054 = vlaneseq
    %v1055 = vshrl.u32 %v1054, 7
    %v1056 = vsub.s32 0, %v1055
    %v1057 = vrot.slane %v1052, %v1056
    %1059 = vmatprep.subr.mxu0 0.0
    %1060 = vmatpush1.xpose.msra.mxu0 %v1035
    %1061 = vmatprep.subr.mxu0 0.0
    %1062 = vmatpush1.xpose.msra.mxu0 %v1036
    %1063 = vmatprep.subr.mxu0 0.0
    %1064 = vmatpush1.xpose.msra.mxu0 %v1037
    %1065 = vmatprep.subr.mxu0 0.0
    %1066 = vmatpush1.xpose.msra.mxu0 %v1038
    %1067 = vmatprep.subr.mxu0 0.0
    %1068 = vmatpush1.xpose.msra.mxu0 %v1039
    %1069 = vmatprep.subr.mxu0 0.0
    %1070 = vmatpush1.xpose.msra.mxu0 %v1040
    %1071 = vmatprep.subr.mxu0 0.0
    %1072 = vmatpush1.xpose.msra.mxu0 %v1041
    %1073 = vmatprep.subr.mxu0 0.0
    %1074 = vmatpush1.xpose.msra.mxu0 %v1042
    %1075 = vmatprep.subr.mxu0 0.0
    %1076 = vmatpush1.xpose.msra.mxu0 %v1043
    %1077 = vmatprep.subr.mxu0 0.0
    %1078 = vmatpush1.xpose.msra.mxu0 %v1044
    %1079 = vmatprep.subr.mxu0 0.0
    %1080 = vmatpush1.xpose.msra.mxu0 %v1045
    %1081 = vmatprep.subr.mxu0 0.0
    %1082 = vmatpush1.xpose.msra.mxu0 %v1046
    %1083 = vmatprep.subr.mxu0 0.0
    %1084 = vmatpush1.xpose.msra.mxu0 %v1047
    %1085 = vmatprep.subr.mxu0 0.0
    %1086 = vmatpush1.xpose.msra.mxu0 %v1048
    %1087 = vmatprep.subr.mxu0 0.0
    %1088 = vmatpush1.xpose.msra.mxu0 %v1049
    %1089 = vmatprep.subr.mxu0 0.0
    %1090 = vmatpush1.xpose.msra.mxu0 %v1050
    %1091 = vmatprep.subr.mxu0 0.0
    %1092 = vmatpush1.xpose.msra.mxu0 0.0
    %1093 = vmatprep.subr.mxu0 0.0
    %1094 = vmatpush1.xpose.msra.mxu0 0.0
    %1095 = vmatprep.subr.mxu0 0.0
    %1096 = vmatpush1.xpose.msra.mxu0 0.0
    %1097 = vmatprep.subr.mxu0 0.0
    %1098 = vmatpush1.xpose.msra.mxu0 0.0
    %1099 = vmatprep.subr.mxu0 0.0
    %1100 = vmatpush1.xpose.msra.mxu0 0.0
    %1101 = vmatprep.subr.mxu0 0.0
    %1102 = vmatpush1.xpose.msra.mxu0 0.0
    %1103 = vmatprep.subr.mxu0 0.0
    %1104 = vmatpush1.xpose.msra.mxu0 0.0
    %1105 = vmatprep.subr.mxu0 0.0
    %1106 = vmatpush1.xpose.msra.mxu0 0.0
    %1107 = vmatprep.subr.mxu0 0.0
    %1108 = vmatpush1.xpose.msra.mxu0 0.0
    %1109 = vmatprep.subr.mxu0 0.0
    %1110 = vmatpush1.xpose.msra.mxu0 0.0
    %1111 = vmatprep.subr.mxu0 0.0
    %1112 = vmatpush1.xpose.msra.mxu0 0.0
    %1113 = vmatprep.subr.mxu0 0.0
    %1114 = vmatpush1.xpose.msra.mxu0 0.0
    %1115 = vmatprep.subr.mxu0 0.0
    %1116 = vmatpush1.xpose.msra.mxu0 0.0
    %1117 = vmatprep.subr.mxu0 0.0
    %1118 = vmatpush1.xpose.msra.mxu0 0.0
    %1119 = vmatprep.subr.mxu0 0.0
    %1120 = vmatpush1.xpose.msra.mxu0 0.0
    %1121 = vmatprep.subr.mxu0 0.0
    %1122 = vmatpush1.xpose.msra.mxu0 0.0
    %1123 = vmatprep.mubr.f32.mxu0 0.0
    %1124 = vmatmul.mubr.f32.gmra.mrb[0].mxu0 %v1002
    %v1125 = vpop.f32.mrb[0].mxu0
    %v1126 = vadd.f32 %v1057, %v1125
    %v1127 = vpop.f32.mrb[0].mxu0
    %1128 = vmatprep.mubr.f32.mxu0 0.0
    %1129 = vmatmul.mubr.f32.gmra.mrb[0].mxu0 %v1003
    %v1130 = vpop.f32.mrb[0].mxu0
    %v1131 = vadd.f32 %v1057, %v1130
    %v1132 = vpop.f32.mrb[0].mxu0
    %1133 = vmatprep.mubr.f32.mxu0 0.0
    %1134 = vmatmul.mubr.f32.gmra.mrb[0].mxu0 %v1004
    %v1135 = vpop.f32.mrb[0].mxu0
    %v1136 = vadd.f32 %v1057, %v1135
    %v1137 = vpop.f32.mrb[0].mxu0
    %1138 = vmatprep.mubr.f32.mxu0 0.0
    %1139 = vmatmul.mubr.f32.gmra.mrb[0].mxu0 %v1005
    %v1140 = vpop.f32.mrb[0].mxu0
    %v1141 = vadd.f32 %v1057, %v1140
    %v1142 = vpop.f32.mrb[0].mxu0
    %1143 = vmatprep.mubr.f32.mxu0 0.0
    %1144 = vmatmul.mubr.f32.gmra.mrb[0].mxu0 %v1006
    %v1145 = vpop.f32.mrb[0].mxu0
    %v1146 = vadd.f32 %v1057, %v1145
    %v1147 = vpop.f32.mrb[0].mxu0
    %1148 = vmatprep.mubr.f32.mxu0 0.0
    %1149 = vmatmul.mubr.f32.gmra.mrb[0].mxu0 %v1007
    %v1150 = vpop.f32.mrb[0].mxu0
    %v1151 = vadd.f32 %v1057, %v1150
    %v1152 = vpop.f32.mrb[0].mxu0
    %1153 = vmatprep.mubr.f32.mxu0 0.0
    %1154 = vmatmul.mubr.f32.gmra.mrb[0].mxu0 %v1008
    %v1155 = vpop.f32.mrb[0].mxu0
    %v1156 = vadd.f32 %v1057, %v1155
    %v1157 = vpop.f32.mrb[0].mxu0
    %1158 = vmatprep.mubr.f32.mxu0 0.0
    %1159 = vmatmul.mubr.f32.gmra.mrb[0].mxu0 %v1009
    %v1160 = vpop.f32.mrb[0].mxu0
    %v1161 = vadd.f32 %v1057, %v1160
    %v1162 = vpop.f32.mrb[0].mxu0
    %1163 = vmatprep.mubr.f32.mxu0 0.0
    %1164 = vmatmul.mubr.f32.gmra.mrb[0].mxu0 %v1010
    %v1165 = vpop.f32.mrb[0].mxu0
    %v1166 = vadd.f32 %v1057, %v1165
    %v1167 = vpop.f32.mrb[0].mxu0
    %1168 = vmatprep.mubr.f32.mxu0 0.0
    %1169 = vmatmul.mubr.f32.gmra.mrb[0].mxu0 %v1011
    %v1170 = vpop.f32.mrb[0].mxu0
    %v1171 = vadd.f32 %v1057, %v1170
    %v1172 = vpop.f32.mrb[0].mxu0
    %1173 = vmatprep.mubr.f32.mxu0 0.0
    %1174 = vmatmul.mubr.f32.gmra.mrb[0].mxu0 %v1012
    %v1175 = vpop.f32.mrb[0].mxu0
    %v1176 = vadd.f32 %v1057, %v1175
    %v1177 = vpop.f32.mrb[0].mxu0
    %1178 = vmatprep.mubr.f32.mxu0 0.0
    %1179 = vmatmul.mubr.f32.gmra.mrb[0].mxu0 %v1013
    %v1180 = vpop.f32.mrb[0].mxu0
    %v1181 = vadd.f32 %v1057, %v1180
    %v1182 = vpop.f32.mrb[0].mxu0
    %1183 = vmatprep.mubr.f32.mxu0 0.0
    %1184 = vmatmul.mubr.f32.gmra.mrb[0].mxu0 %v1014
    %v1185 = vpop.f32.mrb[0].mxu0
    %v1186 = vadd.f32 %v1057, %v1185
    %v1187 = vpop.f32.mrb[0].mxu0
    %1188 = vmatprep.mubr.f32.mxu0 0.0
    %1189 = vmatmul.mubr.f32.gmra.mrb[0].mxu0 %v1015
    %v1190 = vpop.f32.mrb[0].mxu0
    %v1191 = vadd.f32 %v1057, %v1190
    %v1192 = vpop.f32.mrb[0].mxu0
    %1193 = vmatprep.mubr.f32.mxu0 0.0
    %1194 = vmatmul.mubr.f32.gmra.mrb[0].mxu0 %v1016
    %v1195 = vpop.f32.mrb[0].mxu0
    %v1196 = vadd.f32 %v1057, %v1195
    %v1197 = vpop.f32.mrb[0].mxu0
    %1198 = vmatprep.mubr.f32.mxu0 0.0
    %1199 = vmatmul.mubr.f32.gmra.mrb[0].mxu0 %v1017
    %v1200 = vpop.f32.mrb[0].mxu0
    %v1201 = vadd.f32 %v1057, %v1200
    %v1202 = vpop.f32.mrb[0].mxu0
    %1203 = vmatprep.mubr.f32.mxu0 0.0
    %1204 = vmatmul.mubr.f32.gmra.mrb[0].mxu0 %v1018
    %v1205 = vpop.f32.mrb[0].mxu0
    %v1206 = vadd.f32 %v1057, %v1205
    %v1207 = vpop.f32.mrb[0].mxu0
    %1208 = vmatprep.mubr.f32.mxu0 0.0
    %1209 = vmatmul.mubr.f32.gmra.mrb[0].mxu0 %v1019
    %v1210 = vpop.f32.mrb[0].mxu0
    %v1211 = vadd.f32 %v1057, %v1210
    %v1212 = vpop.f32.mrb[0].mxu0
    %1213 = vmatprep.mubr.f32.mxu0 0.0
    %1214 = vmatmul.mubr.f32.gmra.mrb[0].mxu0 %v1020
    %v1215 = vpop.f32.mrb[0].mxu0
    %v1216 = vadd.f32 %v1057, %v1215
    %v1217 = vpop.f32.mrb[0].mxu0
    %1218 = vmatprep.mubr.f32.mxu0 0.0
    %1219 = vmatmul.mubr.f32.gmra.mrb[0].mxu0 %v1021
    %v1220 = vpop.f32.mrb[0].mxu0
    %v1221 = vadd.f32 %v1057, %v1220
    %v1222 = vpop.f32.mrb[0].mxu0
    %1223 = vmatprep.mubr.f32.mxu0 0.0
    %1224 = vmatmul.mubr.f32.gmra.mrb[0].mxu0 %v1022
    %v1225 = vpop.f32.mrb[0].mxu0
    %v1226 = vadd.f32 %v1057, %v1225
    %v1227 = vpop.f32.mrb[0].mxu0
    %1228 = vmatprep.mubr.f32.mxu0 0.0
    %1229 = vmatmul.mubr.f32.gmra.mrb[0].mxu0 %v1023
    %v1230 = vpop.f32.mrb[0].mxu0
    %v1231 = vadd.f32 %v1057, %v1230
    %v1232 = vpop.f32.mrb[0].mxu0
    %1233 = vmatprep.mubr.f32.mxu0 0.0
    %1234 = vmatmul.mubr.f32.gmra.mrb[0].mxu0 %v1024
    %v1235 = vpop.f32.mrb[0].mxu0
    %v1236 = vadd.f32 %v1057, %v1235
    %v1237 = vpop.f32.mrb[0].mxu0
    %1238 = vmatprep.mubr.f32.mxu0 0.0
    %1239 = vmatmul.mubr.f32.gmra.mrb[0].mxu0 %v1025
    %v1240 = vpop.f32.mrb[0].mxu0
    %v1241 = vadd.f32 %v1057, %v1240
    %v1242 = vpop.f32.mrb[0].mxu0
    %1243 = vmatprep.mubr.f32.mxu0 0.0
    %1244 = vmatmul.mubr.f32.gmra.mrb[0].mxu0 %v1026
    %v1245 = vpop.f32.mrb[0].mxu0
    %v1246 = vadd.f32 %v1057, %v1245
    %v1247 = vpop.f32.mrb[0].mxu0
    %1248 = vmatprep.mubr.f32.mxu0 0.0
    %1249 = vmatmul.mubr.f32.gmra.mrb[0].mxu0 %v1027
    %v1250 = vpop.f32.mrb[0].mxu0
    %v1251 = vadd.f32 %v1057, %v1250
    %v1252 = vpop.f32.mrb[0].mxu0
    %1253 = vmatprep.mubr.f32.mxu0 0.0
    %1254 = vmatmul.mubr.f32.gmra.mrb[0].mxu0 %v1028
    %v1255 = vpop.f32.mrb[0].mxu0
    %v1256 = vadd.f32 %v1057, %v1255
    %v1257 = vpop.f32.mrb[0].mxu0
    %1258 = vmatprep.mubr.f32.mxu0 0.0
    %1259 = vmatmul.mubr.f32.gmra.mrb[0].mxu0 %v1029
    %v1260 = vpop.f32.mrb[0].mxu0
    %v1261 = vadd.f32 %v1057, %v1260
    %v1262 = vpop.f32.mrb[0].mxu0
    %1263 = vmatprep.mubr.f32.mxu0 0.0
    %1264 = vmatmul.mubr.f32.gmra.mrb[0].mxu0 %v1030
    %v1265 = vpop.f32.mrb[0].mxu0
    %v1266 = vadd.f32 %v1057, %v1265
    %v1267 = vpop.f32.mrb[0].mxu0
    %1268 = vmatprep.mubr.f32.mxu0 0.0
    %1269 = vmatmul.mubr.f32.gmra.mrb[0].mxu0 %v1031
    %v1270 = vpop.f32.mrb[0].mxu0
    %v1271 = vadd.f32 %v1057, %v1270
    %v1272 = vpop.f32.mrb[0].mxu0
    %1273 = vmatprep.mubr.f32.mxu0 0.0
    %1274 = vmatmul.mubr.f32.gmra.mrb[0].mxu0 %v1032
    %v1275 = vpop.f32.mrb[0].mxu0
    %v1276 = vadd.f32 %v1057, %v1275
    %v1277 = vpop.f32.mrb[0].mxu0
    %1278 = vmatprep.mubr.f32.mxu0 0.0
    %1279 = vmatmul.mubr.f32.gmra.mrb[0].mxu0 %v1033
    %v1280 = vpop.f32.mrb[0].mxu0
    %v1281 = vadd.f32 %v1057, %v1280
    %v1282 = vpop.f32.mrb[0].mxu0
    %1283 = vdwg.mxu0
    %v1284 = vmul.f32 %v1126, 0.00125
    %v1285 = vmul.f32 %v1131, 0.00125
    %v1286 = vmul.f32 %v1136, 0.00125
    %v1287 = vmul.f32 %v1141, 0.00125
    %v1288 = vmul.f32 %v1146, 0.00125
    %v1289 = vmul.f32 %v1151, 0.00125
    %v1290 = vmul.f32 %v1156, 0.00125
    %v1291 = vmul.f32 %v1161, 0.00125
    %v1292 = vmul.f32 %v1166, 0.00125
    %v1293 = vmul.f32 %v1171, 0.00125
    %v1294 = vmul.f32 %v1176, 0.00125
    %v1295 = vmul.f32 %v1181, 0.00125
    %v1296 = vmul.f32 %v1186, 0.00125
    %v1297 = vmul.f32 %v1191, 0.00125
    %v1298 = vmul.f32 %v1196, 0.00125
    %v1299 = vmul.f32 %v1201, 0.00125
    %v1300 = vmul.f32 %v1206, 0.00125
    %v1301 = vmul.f32 %v1211, 0.00125
    %v1302 = vmul.f32 %v1216, 0.00125
    %v1303 = vmul.f32 %v1221, 0.00125
    %v1304 = vmul.f32 %v1226, 0.00125
    %v1305 = vmul.f32 %v1231, 0.00125
    %v1306 = vmul.f32 %v1236, 0.00125
    %v1307 = vmul.f32 %v1241, 0.00125
    %v1308 = vmul.f32 %v1246, 0.00125
    %v1309 = vmul.f32 %v1251, 0.00125
    %v1310 = vmul.f32 %v1256, 0.00125
    %v1311 = vmul.f32 %v1261, 0.00125
    %v1312 = vmul.f32 %v1266, 0.00125
    %v1313 = vmul.f32 %v1271, 0.00125
    %v1314 = vmul.f32 %v1276, 0.00125
    %v1315 = vmul.f32 %v1281, 0.00125
    %v1316 = vmul.f32 %v1126, 0.00025
    %v1317 = vmul.f32 %v1131, 0.00025
    %v1318 = vmul.f32 %v1136, 0.00025
    %v1319 = vmul.f32 %v1141, 0.00025
    %v1320 = vmul.f32 %v1146, 0.00025
    %v1321 = vmul.f32 %v1151, 0.00025
    %v1322 = vmul.f32 %v1156, 0.00025
    %v1323 = vmul.f32 %v1161, 0.00025
    %v1324 = vmul.f32 %v1166, 0.00025
    %v1325 = vmul.f32 %v1171, 0.00025
    %v1326 = vmul.f32 %v1176, 0.00025
    %v1327 = vmul.f32 %v1181, 0.00025
    %v1328 = vmul.f32 %v1186, 0.00025
    %v1329 = vmul.f32 %v1191, 0.00025
    %v1330 = vmul.f32 %v1196, 0.00025
    %v1331 = vmul.f32 %v1201, 0.00025
    %v1332 = vmul.f32 %v1206, 0.00025
    %v1333 = vmul.f32 %v1211, 0.00025
    %v1334 = vmul.f32 %v1216, 0.00025
    %v1335 = vmul.f32 %v1221, 0.00025
    %v1336 = vmul.f32 %v1226, 0.00025
    %v1337 = vmul.f32 %v1231, 0.00025
    %v1338 = vmul.f32 %v1236, 0.00025
    %v1339 = vmul.f32 %v1241, 0.00025
    %v1340 = vmul.f32 %v1246, 0.00025
    %v1341 = vmul.f32 %v1251, 0.00025
    %v1342 = vmul.f32 %v1256, 0.00025
    %v1343 = vmul.f32 %v1261, 0.00025
    %v1344 = vmul.f32 %v1266, 0.00025
    %v1345 = vmul.f32 %v1271, 0.00025
    %v1346 = vmul.f32 %v1276, 0.00025
    %v1347 = vmul.f32 %v1281, 0.00025
    %v1348 = vmax.f32 %v1284, %v1316
    %v1349 = vmax.f32 %v1285, %v1317
    %v1350 = vmax.f32 %v1286, %v1318
    %v1351 = vmax.f32 %v1287, %v1319
    %v1352 = vmax.f32 %v1288, %v1320
    %v1353 = vmax.f32 %v1289, %v1321
    %v1354 = vmax.f32 %v1290, %v1322
    %v1355 = vmax.f32 %v1291, %v1323
    %v1356 = vmax.f32 %v1292, %v1324
    %v1357 = vmax.f32 %v1293, %v1325
    %v1358 = vmax.f32 %v1294, %v1326
    %v1359 = vmax.f32 %v1295, %v1327
    %v1360 = vmax.f32 %v1296, %v1328
    %v1361 = vmax.f32 %v1297, %v1329
    %v1362 = vmax.f32 %v1298, %v1330
    %v1363 = vmax.f32 %v1299, %v1331
    %v1364 = vmax.f32 %v1300, %v1332
    %v1365 = vmax.f32 %v1301, %v1333
    %v1366 = vmax.f32 %v1302, %v1334
    %v1367 = vmax.f32 %v1303, %v1335
    %v1368 = vmax.f32 %v1304, %v1336
    %v1369 = vmax.f32 %v1305, %v1337
    %v1370 = vmax.f32 %v1306, %v1338
    %v1371 = vmax.f32 %v1307, %v1339
    %v1372 = vmax.f32 %v1308, %v1340
    %v1373 = vmax.f32 %v1309, %v1341
    %v1374 = vmax.f32 %v1310, %v1342
    %v1375 = vmax.f32 %v1311, %v1343
    %v1376 = vmax.f32 %v1312, %v1344
    %v1377 = vmax.f32 %v1313, %v1345
    %v1378 = vmax.f32 %v1314, %v1346
    %v1379 = vmax.f32 %v1315, %v1347
    %s1380 = scalar_lea.vmem [#allocation5], 384
    %v1381 = vld [vmem:[%s1380] sm:$0xff]
    %v1382 = vld [vmem:[%s1380 + $0x8] sm:$0xff]
    %v1383 = vld [vmem:[%s1380 + $0x10] sm:$0xff]
    %v1384 = vld [vmem:[%s1380 + $0x18] sm:$0xff]
    %v1385 = vld [vmem:[%s1380 + $0x20] sm:$0xff]
    %v1386 = vld [vmem:[%s1380 + $0x28] sm:$0xff]
    %v1387 = vld [vmem:[%s1380 + $0x30] sm:$0xff]
    %v1388 = vld [vmem:[%s1380 + $0x38] sm:$0xff]
    %v1389 = vld [vmem:[%s1380 + $0x40] sm:$0xff]
    %v1390 = vld [vmem:[%s1380 + $0x48] sm:$0xff]
    %v1391 = vld [vmem:[%s1380 + $0x50] sm:$0xff]
    %v1392 = vld [vmem:[%s1380 + $0x58] sm:$0xff]
    %v1393 = vld [vmem:[%s1380 + $0x60] sm:$0xff]
    %v1394 = vld [vmem:[%s1380 + $0x68] sm:$0xff]
    %v1395 = vld [vmem:[%s1380 + $0x70] sm:$0xff]
    %v1396 = vld [vmem:[%s1380 + $0x78] sm:$0xff]
    %s1397 = scalar_lea.vmem [#allocation7], 3
    %v1398 = vld [vmem:[%s1397] sm:$0x1]
    %v1400 = vlaneseq
    %v1401 = vshrl.u32 %v1400, 7
    %v1402 = vsub.s32 0, %v1401
    %v1403 = vrot.slane %v1398, %v1402
    %1405 = vmatprep.subr.mxu0 0.0
    %1406 = vmatpush1.xpose.msra.mxu0 %v1381
    %1407 = vmatprep.subr.mxu0 0.0
    %1408 = vmatpush1.xpose.msra.mxu0 %v1382
    %1409 = vmatprep.subr.mxu0 0.0
    %1410 = vmatpush1.xpose.msra.mxu0 %v1383
    %1411 = vmatprep.subr.mxu0 0.0
    %1412 = vmatpush1.xpose.msra.mxu0 %v1384
    %1413 = vmatprep.subr.mxu0 0.0
    %1414 = vmatpush1.xpose.msra.mxu0 %v1385
    %1415 = vmatprep.subr.mxu0 0.0
    %1416 = vmatpush1.xpose.msra.mxu0 %v1386
    %1417 = vmatprep.subr.mxu0 0.0
    %1418 = vmatpush1.xpose.msra.mxu0 %v1387
    %1419 = vmatprep.subr.mxu0 0.0
    %1420 = vmatpush1.xpose.msra.mxu0 %v1388
    %1421 = vmatprep.subr.mxu0 0.0
    %1422 = vmatpush1.xpose.msra.mxu0 %v1389
    %1423 = vmatprep.subr.mxu0 0.0
    %1424 = vmatpush1.xpose.msra.mxu0 %v1390
    %1425 = vmatprep.subr.mxu0 0.0
    %1426 = vmatpush1.xpose.msra.mxu0 %v1391
    %1427 = vmatprep.subr.mxu0 0.0
    %1428 = vmatpush1.xpose.msra.mxu0 %v1392
    %1429 = vmatprep.subr.mxu0 0.0
    %1430 = vmatpush1.xpose.msra.mxu0 %v1393
    %1431 = vmatprep.subr.mxu0 0.0
    %1432 = vmatpush1.xpose.msra.mxu0 %v1394
    %1433 = vmatprep.subr.mxu0 0.0
    %1434 = vmatpush1.xpose.msra.mxu0 %v1395
    %1435 = vmatprep.subr.mxu0 0.0
    %1436 = vmatpush1.xpose.msra.mxu0 %v1396
    %1437 = vmatprep.subr.mxu0 0.0
    %1438 = vmatpush1.xpose.msra.mxu0 0.0
    %1439 = vmatprep.subr.mxu0 0.0
    %1440 = vmatpush1.xpose.msra.mxu0 0.0
    %1441 = vmatprep.subr.mxu0 0.0
    %1442 = vmatpush1.xpose.msra.mxu0 0.0
    %1443 = vmatprep.subr.mxu0 0.0
    %1444 = vmatpush1.xpose.msra.mxu0 0.0
    %1445 = vmatprep.subr.mxu0 0.0
    %1446 = vmatpush1.xpose.msra.mxu0 0.0
    %1447 = vmatprep.subr.mxu0 0.0
    %1448 = vmatpush1.xpose.msra.mxu0 0.0
    %1449 = vmatprep.subr.mxu0 0.0
    %1450 = vmatpush1.xpose.msra.mxu0 0.0
    %1451 = vmatprep.subr.mxu0 0.0
    %1452 = vmatpush1.xpose.msra.mxu0 0.0
    %1453 = vmatprep.subr.mxu0 0.0
    %1454 = vmatpush1.xpose.msra.mxu0 0.0
    %1455 = vmatprep.subr.mxu0 0.0
    %1456 = vmatpush1.xpose.msra.mxu0 0.0
    %1457 = vmatprep.subr.mxu0 0.0
    %1458 = vmatpush1.xpose.msra.mxu0 0.0
    %1459 = vmatprep.subr.mxu0 0.0
    %1460 = vmatpush1.xpose.msra.mxu0 0.0
    %1461 = vmatprep.subr.mxu0 0.0
    %1462 = vmatpush1.xpose.msra.mxu0 0.0
    %1463 = vmatprep.subr.mxu0 0.0
    %1464 = vmatpush1.xpose.msra.mxu0 0.0
    %1465 = vmatprep.subr.mxu0 0.0
    %1466 = vmatpush1.xpose.msra.mxu0 0.0
    %1467 = vmatprep.subr.mxu0 0.0
    %1468 = vmatpush1.xpose.msra.mxu0 0.0
    %1469 = vmatprep.mubr.f32.mxu0 0.0
    %1470 = vmatmul.mubr.f32.gmra.mrb[0].mxu0 %v1348
    %v1471 = vpop.f32.mrb[0].mxu0
    %v1472 = vadd.f32 %v1403, %v1471
    %v1473 = vpop.f32.mrb[0].mxu0
    %1474 = vmatprep.mubr.f32.mxu0 0.0
    %1475 = vmatmul.mubr.f32.gmra.mrb[0].mxu0 %v1349
    %v1476 = vpop.f32.mrb[0].mxu0
    %v1477 = vadd.f32 %v1403, %v1476
    %v1478 = vpop.f32.mrb[0].mxu0
    %1479 = vmatprep.mubr.f32.mxu0 0.0
    %1480 = vmatmul.mubr.f32.gmra.mrb[0].mxu0 %v1350
    %v1481 = vpop.f32.mrb[0].mxu0
    %v1482 = vadd.f32 %v1403, %v1481
    %v1483 = vpop.f32.mrb[0].mxu0
    %1484 = vmatprep.mubr.f32.mxu0 0.0
    %1485 = vmatmul.mubr.f32.gmra.mrb[0].mxu0 %v1351
    %v1486 = vpop.f32.mrb[0].mxu0
    %v1487 = vadd.f32 %v1403, %v1486
    %v1488 = vpop.f32.mrb[0].mxu0
    %1489 = vmatprep.mubr.f32.mxu0 0.0
    %1490 = vmatmul.mubr.f32.gmra.mrb[0].mxu0 %v1352
    %v1491 = vpop.f32.mrb[0].mxu0
    %v1492 = vadd.f32 %v1403, %v1491
    %v1493 = vpop.f32.mrb[0].mxu0
    %1494 = vmatprep.mubr.f32.mxu0 0.0
    %1495 = vmatmul.mubr.f32.gmra.mrb[0].mxu0 %v1353
    %v1496 = vpop.f32.mrb[0].mxu0
    %v1497 = vadd.f32 %v1403, %v1496
    %v1498 = vpop.f32.mrb[0].mxu0
    %1499 = vmatprep.mubr.f32.mxu0 0.0
    %1500 = vmatmul.mubr.f32.gmra.mrb[0].mxu0 %v1354
    %v1501 = vpop.f32.mrb[0].mxu0
    %v1502 = vadd.f32 %v1403, %v1501
    %v1503 = vpop.f32.mrb[0].mxu0
    %1504 = vmatprep.mubr.f32.mxu0 0.0
    %1505 = vmatmul.mubr.f32.gmra.mrb[0].mxu0 %v1355
    %v1506 = vpop.f32.mrb[0].mxu0
    %v1507 = vadd.f32 %v1403, %v1506
    %v1508 = vpop.f32.mrb[0].mxu0
    %1509 = vmatprep.mubr.f32.mxu0 0.0
    %1510 = vmatmul.mubr.f32.gmra.mrb[0].mxu0 %v1356
    %v1511 = vpop.f32.mrb[0].mxu0
    %v1512 = vadd.f32 %v1403, %v1511
    %v1513 = vpop.f32.mrb[0].mxu0
    %1514 = vmatprep.mubr.f32.mxu0 0.0
    %1515 = vmatmul.mubr.f32.gmra.mrb[0].mxu0 %v1357
    %v1516 = vpop.f32.mrb[0].mxu0
    %v1517 = vadd.f32 %v1403, %v1516
    %v1518 = vpop.f32.mrb[0].mxu0
    %1519 = vmatprep.mubr.f32.mxu0 0.0
    %1520 = vmatmul.mubr.f32.gmra.mrb[0].mxu0 %v1358
    %v1521 = vpop.f32.mrb[0].mxu0
    %v1522 = vadd.f32 %v1403, %v1521
    %v1523 = vpop.f32.mrb[0].mxu0
    %1524 = vmatprep.mubr.f32.mxu0 0.0
    %1525 = vmatmul.mubr.f32.gmra.mrb[0].mxu0 %v1359
    %v1526 = vpop.f32.mrb[0].mxu0
    %v1527 = vadd.f32 %v1403, %v1526
    %v1528 = vpop.f32.mrb[0].mxu0
    %1529 = vmatprep.mubr.f32.mxu0 0.0
    %1530 = vmatmul.mubr.f32.gmra.mrb[0].mxu0 %v1360
    %v1531 = vpop.f32.mrb[0].mxu0
    %v1532 = vadd.f32 %v1403, %v1531
    %v1533 = vpop.f32.mrb[0].mxu0
    %1534 = vmatprep.mubr.f32.mxu0 0.0
    %1535 = vmatmul.mubr.f32.gmra.mrb[0].mxu0 %v1361
    %v1536 = vpop.f32.mrb[0].mxu0
    %v1537 = vadd.f32 %v1403, %v1536
    %v1538 = vpop.f32.mrb[0].mxu0
    %1539 = vmatprep.mubr.f32.mxu0 0.0
    %1540 = vmatmul.mubr.f32.gmra.mrb[0].mxu0 %v1362
    %v1541 = vpop.f32.mrb[0].mxu0
    %v1542 = vadd.f32 %v1403, %v1541
    %v1543 = vpop.f32.mrb[0].mxu0
    %1544 = vmatprep.mubr.f32.mxu0 0.0
    %1545 = vmatmul.mubr.f32.gmra.mrb[0].mxu0 %v1363
    %v1546 = vpop.f32.mrb[0].mxu0
    %v1547 = vadd.f32 %v1403, %v1546
    %v1548 = vpop.f32.mrb[0].mxu0
    %1549 = vmatprep.mubr.f32.mxu0 0.0
    %1550 = vmatmul.mubr.f32.gmra.mrb[0].mxu0 %v1364
    %v1551 = vpop.f32.mrb[0].mxu0
    %v1552 = vadd.f32 %v1403, %v1551
    %v1553 = vpop.f32.mrb[0].mxu0
    %1554 = vmatprep.mubr.f32.mxu0 0.0
    %1555 = vmatmul.mubr.f32.gmra.mrb[0].mxu0 %v1365
    %v1556 = vpop.f32.mrb[0].mxu0
    %v1557 = vadd.f32 %v1403, %v1556
    %v1558 = vpop.f32.mrb[0].mxu0
    %1559 = vmatprep.mubr.f32.mxu0 0.0
    %1560 = vmatmul.mubr.f32.gmra.mrb[0].mxu0 %v1366
    %v1561 = vpop.f32.mrb[0].mxu0
    %v1562 = vadd.f32 %v1403, %v1561
    %v1563 = vpop.f32.mrb[0].mxu0
    %1564 = vmatprep.mubr.f32.mxu0 0.0
    %1565 = vmatmul.mubr.f32.gmra.mrb[0].mxu0 %v1367
    %v1566 = vpop.f32.mrb[0].mxu0
    %v1567 = vadd.f32 %v1403, %v1566
    %v1568 = vpop.f32.mrb[0].mxu0
    %1569 = vmatprep.mubr.f32.mxu0 0.0
    %1570 = vmatmul.mubr.f32.gmra.mrb[0].mxu0 %v1368
    %v1571 = vpop.f32.mrb[0].mxu0
    %v1572 = vadd.f32 %v1403, %v1571
    %v1573 = vpop.f32.mrb[0].mxu0
    %1574 = vmatprep.mubr.f32.mxu0 0.0
    %1575 = vmatmul.mubr.f32.gmra.mrb[0].mxu0 %v1369
    %v1576 = vpop.f32.mrb[0].mxu0
    %v1577 = vadd.f32 %v1403, %v1576
    %v1578 = vpop.f32.mrb[0].mxu0
    %1579 = vmatprep.mubr.f32.mxu0 0.0
    %1580 = vmatmul.mubr.f32.gmra.mrb[0].mxu0 %v1370
    %v1581 = vpop.f32.mrb[0].mxu0
    %v1582 = vadd.f32 %v1403, %v1581
    %v1583 = vpop.f32.mrb[0].mxu0
    %1584 = vmatprep.mubr.f32.mxu0 0.0
    %1585 = vmatmul.mubr.f32.gmra.mrb[0].mxu0 %v1371
    %v1586 = vpop.f32.mrb[0].mxu0
    %v1587 = vadd.f32 %v1403, %v1586
    %v1588 = vpop.f32.mrb[0].mxu0
    %1589 = vmatprep.mubr.f32.mxu0 0.0
    %1590 = vmatmul.mubr.f32.gmra.mrb[0].mxu0 %v1372
    %v1591 = vpop.f32.mrb[0].mxu0
    %v1592 = vadd.f32 %v1403, %v1591
    %v1593 = vpop.f32.mrb[0].mxu0
    %1594 = vmatprep.mubr.f32.mxu0 0.0
    %1595 = vmatmul.mubr.f32.gmra.mrb[0].mxu0 %v1373
    %v1596 = vpop.f32.mrb[0].mxu0
    %v1597 = vadd.f32 %v1403, %v1596
    %v1598 = vpop.f32.mrb[0].mxu0
    %1599 = vmatprep.mubr.f32.mxu0 0.0
    %1600 = vmatmul.mubr.f32.gmra.mrb[0].mxu0 %v1374
    %v1601 = vpop.f32.mrb[0].mxu0
    %v1602 = vadd.f32 %v1403, %v1601
    %v1603 = vpop.f32.mrb[0].mxu0
    %1604 = vmatprep.mubr.f32.mxu0 0.0
    %1605 = vmatmul.mubr.f32.gmra.mrb[0].mxu0 %v1375
    %v1606 = vpop.f32.mrb[0].mxu0
    %v1607 = vadd.f32 %v1403, %v1606
    %v1608 = vpop.f32.mrb[0].mxu0
    %1609 = vmatprep.mubr.f32.mxu0 0.0
    %1610 = vmatmul.mubr.f32.gmra.mrb[0].mxu0 %v1376
    %v1611 = vpop.f32.mrb[0].mxu0
    %v1612 = vadd.f32 %v1403, %v1611
    %v1613 = vpop.f32.mrb[0].mxu0
    %1614 = vmatprep.mubr.f32.mxu0 0.0
    %1615 = vmatmul.mubr.f32.gmra.mrb[0].mxu0 %v1377
    %v1616 = vpop.f32.mrb[0].mxu0
    %v1617 = vadd.f32 %v1403, %v1616
    %v1618 = vpop.f32.mrb[0].mxu0
    %1619 = vmatprep.mubr.f32.mxu0 0.0
    %1620 = vmatmul.mubr.f32.gmra.mrb[0].mxu0 %v1378
    %v1621 = vpop.f32.mrb[0].mxu0
    %v1622 = vadd.f32 %v1403, %v1621
    %v1623 = vpop.f32.mrb[0].mxu0
    %1624 = vmatprep.mubr.f32.mxu0 0.0
    %1625 = vmatmul.mubr.f32.gmra.mrb[0].mxu0 %v1379
    %v1626 = vpop.f32.mrb[0].mxu0
    %v1627 = vadd.f32 %v1403, %v1626
    %v1628 = vpop.f32.mrb[0].mxu0
    %1629 = vdwg.mxu0
    %v1630 = vmul.f32 %v1472, 0.00125
    %v1631 = vmul.f32 %v1477, 0.00125
    %v1632 = vmul.f32 %v1482, 0.00125
    %v1633 = vmul.f32 %v1487, 0.00125
    %v1634 = vmul.f32 %v1492, 0.00125
    %v1635 = vmul.f32 %v1497, 0.00125
    %v1636 = vmul.f32 %v1502, 0.00125
    %v1637 = vmul.f32 %v1507, 0.00125
    %v1638 = vmul.f32 %v1512, 0.00125
    %v1639 = vmul.f32 %v1517, 0.00125
    %v1640 = vmul.f32 %v1522, 0.00125
    %v1641 = vmul.f32 %v1527, 0.00125
    %v1642 = vmul.f32 %v1532, 0.00125
    %v1643 = vmul.f32 %v1537, 0.00125
    %v1644 = vmul.f32 %v1542, 0.00125
    %v1645 = vmul.f32 %v1547, 0.00125
    %v1646 = vmul.f32 %v1552, 0.00125
    %v1647 = vmul.f32 %v1557, 0.00125
    %v1648 = vmul.f32 %v1562, 0.00125
    %v1649 = vmul.f32 %v1567, 0.00125
    %v1650 = vmul.f32 %v1572, 0.00125
    %v1651 = vmul.f32 %v1577, 0.00125
    %v1652 = vmul.f32 %v1582, 0.00125
    %v1653 = vmul.f32 %v1587, 0.00125
    %v1654 = vmul.f32 %v1592, 0.00125
    %v1655 = vmul.f32 %v1597, 0.00125
    %v1656 = vmul.f32 %v1602, 0.00125
    %v1657 = vmul.f32 %v1607, 0.00125
    %v1658 = vmul.f32 %v1612, 0.00125
    %v1659 = vmul.f32 %v1617, 0.00125
    %v1660 = vmul.f32 %v1622, 0.00125
    %v1661 = vmul.f32 %v1627, 0.00125
    %v1662 = vmul.f32 %v1472, 0.00025
    %v1663 = vmul.f32 %v1477, 0.00025
    %v1664 = vmul.f32 %v1482, 0.00025
    %v1665 = vmul.f32 %v1487, 0.00025
    %v1666 = vmul.f32 %v1492, 0.00025
    %v1667 = vmul.f32 %v1497, 0.00025
    %v1668 = vmul.f32 %v1502, 0.00025
    %v1669 = vmul.f32 %v1507, 0.00025
    %v1670 = vmul.f32 %v1512, 0.00025
    %v1671 = vmul.f32 %v1517, 0.00025
    %v1672 = vmul.f32 %v1522, 0.00025
    %v1673 = vmul.f32 %v1527, 0.00025
    %v1674 = vmul.f32 %v1532, 0.00025
    %v1675 = vmul.f32 %v1537, 0.00025
    %v1676 = vmul.f32 %v1542, 0.00025
    %v1677 = vmul.f32 %v1547, 0.00025
    %v1678 = vmul.f32 %v1552, 0.00025
    %v1679 = vmul.f32 %v1557, 0.00025
    %v1680 = vmul.f32 %v1562, 0.00025
    %v1681 = vmul.f32 %v1567, 0.00025
    %v1682 = vmul.f32 %v1572, 0.00025
    %v1683 = vmul.f32 %v1577, 0.00025
    %v1684 = vmul.f32 %v1582, 0.00025
    %v1685 = vmul.f32 %v1587, 0.00025
    %v1686 = vmul.f32 %v1592, 0.00025
    %v1687 = vmul.f32 %v1597, 0.00025
    %v1688 = vmul.f32 %v1602, 0.00025
    %v1689 = vmul.f32 %v1607, 0.00025
    %v1690 = vmul.f32 %v1612, 0.00025
    %v1691 = vmul.f32 %v1617, 0.00025
    %v1692 = vmul.f32 %v1622, 0.00025
    %v1693 = vmul.f32 %v1627, 0.00025
    %v1694 = vmax.f32 %v1630, %v1662
    %v1695 = vmax.f32 %v1631, %v1663
    %v1696 = vmax.f32 %v1632, %v1664
    %v1697 = vmax.f32 %v1633, %v1665
    %v1698 = vmax.f32 %v1634, %v1666
    %v1699 = vmax.f32 %v1635, %v1667
    %v1700 = vmax.f32 %v1636, %v1668
    %v1701 = vmax.f32 %v1637, %v1669
    %v1702 = vmax.f32 %v1638, %v1670
    %v1703 = vmax.f32 %v1639, %v1671
    %v1704 = vmax.f32 %v1640, %v1672
    %v1705 = vmax.f32 %v1641, %v1673
    %v1706 = vmax.f32 %v1642, %v1674
    %v1707 = vmax.f32 %v1643, %v1675
    %v1708 = vmax.f32 %v1644, %v1676
    %v1709 = vmax.f32 %v1645, %v1677
    %v1710 = vmax.f32 %v1646, %v1678
    %v1711 = vmax.f32 %v1647, %v1679
    %v1712 = vmax.f32 %v1648, %v1680
    %v1713 = vmax.f32 %v1649, %v1681
    %v1714 = vmax.f32 %v1650, %v1682
    %v1715 = vmax.f32 %v1651, %v1683
    %v1716 = vmax.f32 %v1652, %v1684
    %v1717 = vmax.f32 %v1653, %v1685
    %v1718 = vmax.f32 %v1654, %v1686
    %v1719 = vmax.f32 %v1655, %v1687
    %v1720 = vmax.f32 %v1656, %v1688
    %v1721 = vmax.f32 %v1657, %v1689
    %v1722 = vmax.f32 %v1658, %v1690
    %v1723 = vmax.f32 %v1659, %v1691
    %v1724 = vmax.f32 %v1660, %v1692
    %v1725 = vmax.f32 %v1661, %v1693
    %s1726 = scalar_lea.vmem [#allocation5], 512
    %v1727 = vld [vmem:[%s1726] sm:$0xff]
    %v1728 = vld [vmem:[%s1726 + $0x8] sm:$0xff]
    %v1729 = vld [vmem:[%s1726 + $0x10] sm:$0xff]
    %v1730 = vld [vmem:[%s1726 + $0x18] sm:$0xff]
    %v1731 = vld [vmem:[%s1726 + $0x20] sm:$0xff]
    %v1732 = vld [vmem:[%s1726 + $0x28] sm:$0xff]
    %v1733 = vld [vmem:[%s1726 + $0x30] sm:$0xff]
    %v1734 = vld [vmem:[%s1726 + $0x38] sm:$0xff]
    %v1735 = vld [vmem:[%s1726 + $0x40] sm:$0xff]
    %v1736 = vld [vmem:[%s1726 + $0x48] sm:$0xff]
    %v1737 = vld [vmem:[%s1726 + $0x50] sm:$0xff]
    %v1738 = vld [vmem:[%s1726 + $0x58] sm:$0xff]
    %v1739 = vld [vmem:[%s1726 + $0x60] sm:$0xff]
    %v1740 = vld [vmem:[%s1726 + $0x68] sm:$0xff]
    %v1741 = vld [vmem:[%s1726 + $0x70] sm:$0xff]
    %v1742 = vld [vmem:[%s1726 + $0x78] sm:$0xff]
    %s1743 = scalar_lea.vmem [#allocation7], 4
    %v1744 = vld [vmem:[%s1743] sm:$0x1]
    %v1746 = vlaneseq
    %v1747 = vshrl.u32 %v1746, 7
    %v1748 = vsub.s32 0, %v1747
    %v1749 = vrot.slane %v1744, %v1748
    %1751 = vmatprep.subr.mxu0 0.0
    %1752 = vmatpush1.xpose.msra.mxu0 %v1727
    %1753 = vmatprep.subr.mxu0 0.0
    %1754 = vmatpush1.xpose.msra.mxu0 %v1728
    %1755 = vmatprep.subr.mxu0 0.0
    %1756 = vmatpush1.xpose.msra.mxu0 %v1729
    %1757 = vmatprep.subr.mxu0 0.0
    %1758 = vmatpush1.xpose.msra.mxu0 %v1730
    %1759 = vmatprep.subr.mxu0 0.0
    %1760 = vmatpush1.xpose.msra.mxu0 %v1731
    %1761 = vmatprep.subr.mxu0 0.0
    %1762 = vmatpush1.xpose.msra.mxu0 %v1732
    %1763 = vmatprep.subr.mxu0 0.0
    %1764 = vmatpush1.xpose.msra.mxu0 %v1733
    %1765 = vmatprep.subr.mxu0 0.0
    %1766 = vmatpush1.xpose.msra.mxu0 %v1734
    %1767 = vmatprep.subr.mxu0 0.0
    %1768 = vmatpush1.xpose.msra.mxu0 %v1735
    %1769 = vmatprep.subr.mxu0 0.0
    %1770 = vmatpush1.xpose.msra.mxu0 %v1736
    %1771 = vmatprep.subr.mxu0 0.0
    %1772 = vmatpush1.xpose.msra.mxu0 %v1737
    %1773 = vmatprep.subr.mxu0 0.0
    %1774 = vmatpush1.xpose.msra.mxu0 %v1738
    %1775 = vmatprep.subr.mxu0 0.0
    %1776 = vmatpush1.xpose.msra.mxu0 %v1739
    %1777 = vmatprep.subr.mxu0 0.0
    %1778 = vmatpush1.xpose.msra.mxu0 %v1740
    %1779 = vmatprep.subr.mxu0 0.0
    %1780 = vmatpush1.xpose.msra.mxu0 %v1741
    %1781 = vmatprep.subr.mxu0 0.0
    %1782 = vmatpush1.xpose.msra.mxu0 %v1742
    %1783 = vmatprep.subr.mxu0 0.0
    %1784 = vmatpush1.xpose.msra.mxu0 0.0
    %1785 = vmatprep.subr.mxu0 0.0
    %1786 = vmatpush1.xpose.msra.mxu0 0.0
    %1787 = vmatprep.subr.mxu0 0.0
    %1788 = vmatpush1.xpose.msra.mxu0 0.0
    %1789 = vmatprep.subr.mxu0 0.0
    %1790 = vmatpush1.xpose.msra.mxu0 0.0
    %1791 = vmatprep.subr.mxu0 0.0
    %1792 = vmatpush1.xpose.msra.mxu0 0.0
    %1793 = vmatprep.subr.mxu0 0.0
    %1794 = vmatpush1.xpose.msra.mxu0 0.0
    %1795 = vmatprep.subr.mxu0 0.0
    %1796 = vmatpush1.xpose.msra.mxu0 0.0
    %1797 = vmatprep.subr.mxu0 0.0
    %1798 = vmatpush1.xpose.msra.mxu0 0.0
    %1799 = vmatprep.subr.mxu0 0.0
    %1800 = vmatpush1.xpose.msra.mxu0 0.0
    %1801 = vmatprep.subr.mxu0 0.0
    %1802 = vmatpush1.xpose.msra.mxu0 0.0
    %1803 = vmatprep.subr.mxu0 0.0
    %1804 = vmatpush1.xpose.msra.mxu0 0.0
    %1805 = vmatprep.subr.mxu0 0.0
    %1806 = vmatpush1.xpose.msra.mxu0 0.0
    %1807 = vmatprep.subr.mxu0 0.0
    %1808 = vmatpush1.xpose.msra.mxu0 0.0
    %1809 = vmatprep.subr.mxu0 0.0
    %1810 = vmatpush1.xpose.msra.mxu0 0.0
    %1811 = vmatprep.subr.mxu0 0.0
    %1812 = vmatpush1.xpose.msra.mxu0 0.0
    %1813 = vmatprep.subr.mxu0 0.0
    %1814 = vmatpush1.xpose.msra.mxu0 0.0
    %1815 = vmatprep.mubr.f32.mxu0 0.0
    %1816 = vmatmul.mubr.f32.gmra.mrb[0].mxu0 %v1694
    %v1817 = vpop.f32.mrb[0].mxu0
    %v1818 = vadd.f32 %v1749, %v1817
    %v1819 = vpop.f32.mrb[0].mxu0
    %1820 = vmatprep.mubr.f32.mxu0 0.0
    %1821 = vmatmul.mubr.f32.gmra.mrb[0].mxu0 %v1695
    %v1822 = vpop.f32.mrb[0].mxu0
    %v1823 = vadd.f32 %v1749, %v1822
    %v1824 = vpop.f32.mrb[0].mxu0
    %1825 = vmatprep.mubr.f32.mxu0 0.0
    %1826 = vmatmul.mubr.f32.gmra.mrb[0].mxu0 %v1696
    %v1827 = vpop.f32.mrb[0].mxu0
    %v1828 = vadd.f32 %v1749, %v1827
    %v1829 = vpop.f32.mrb[0].mxu0
    %1830 = vmatprep.mubr.f32.mxu0 0.0
    %1831 = vmatmul.mubr.f32.gmra.mrb[0].mxu0 %v1697
    %v1832 = vpop.f32.mrb[0].mxu0
    %v1833 = vadd.f32 %v1749, %v1832
    %v1834 = vpop.f32.mrb[0].mxu0
    %1835 = vmatprep.mubr.f32.mxu0 0.0
    %1836 = vmatmul.mubr.f32.gmra.mrb[0].mxu0 %v1698
    %v1837 = vpop.f32.mrb[0].mxu0
    %v1838 = vadd.f32 %v1749, %v1837
    %v1839 = vpop.f32.mrb[0].mxu0
    %1840 = vmatprep.mubr.f32.mxu0 0.0
    %1841 = vmatmul.mubr.f32.gmra.mrb[0].mxu0 %v1699
    %v1842 = vpop.f32.mrb[0].mxu0
    %v1843 = vadd.f32 %v1749, %v1842
    %v1844 = vpop.f32.mrb[0].mxu0
    %1845 = vmatprep.mubr.f32.mxu0 0.0
    %1846 = vmatmul.mubr.f32.gmra.mrb[0].mxu0 %v1700
    %v1847 = vpop.f32.mrb[0].mxu0
    %v1848 = vadd.f32 %v1749, %v1847
    %v1849 = vpop.f32.mrb[0].mxu0
    %1850 = vmatprep.mubr.f32.mxu0 0.0
    %1851 = vmatmul.mubr.f32.gmra.mrb[0].mxu0 %v1701
    %v1852 = vpop.f32.mrb[0].mxu0
    %v1853 = vadd.f32 %v1749, %v1852
    %v1854 = vpop.f32.mrb[0].mxu0
    %1855 = vmatprep.mubr.f32.mxu0 0.0
    %1856 = vmatmul.mubr.f32.gmra.mrb[0].mxu0 %v1702
    %v1857 = vpop.f32.mrb[0].mxu0
    %v1858 = vadd.f32 %v1749, %v1857
    %v1859 = vpop.f32.mrb[0].mxu0
    %1860 = vmatprep.mubr.f32.mxu0 0.0
    %1861 = vmatmul.mubr.f32.gmra.mrb[0].mxu0 %v1703
    %v1862 = vpop.f32.mrb[0].mxu0
    %v1863 = vadd.f32 %v1749, %v1862
    %v1864 = vpop.f32.mrb[0].mxu0
    %1865 = vmatprep.mubr.f32.mxu0 0.0
    %1866 = vmatmul.mubr.f32.gmra.mrb[0].mxu0 %v1704
    %v1867 = vpop.f32.mrb[0].mxu0
    %v1868 = vadd.f32 %v1749, %v1867
    %v1869 = vpop.f32.mrb[0].mxu0
    %1870 = vmatprep.mubr.f32.mxu0 0.0
    %1871 = vmatmul.mubr.f32.gmra.mrb[0].mxu0 %v1705
    %v1872 = vpop.f32.mrb[0].mxu0
    %v1873 = vadd.f32 %v1749, %v1872
    %v1874 = vpop.f32.mrb[0].mxu0
    %1875 = vmatprep.mubr.f32.mxu0 0.0
    %1876 = vmatmul.mubr.f32.gmra.mrb[0].mxu0 %v1706
    %v1877 = vpop.f32.mrb[0].mxu0
    %v1878 = vadd.f32 %v1749, %v1877
    %v1879 = vpop.f32.mrb[0].mxu0
    %1880 = vmatprep.mubr.f32.mxu0 0.0
    %1881 = vmatmul.mubr.f32.gmra.mrb[0].mxu0 %v1707
    %v1882 = vpop.f32.mrb[0].mxu0
    %v1883 = vadd.f32 %v1749, %v1882
    %v1884 = vpop.f32.mrb[0].mxu0
    %1885 = vmatprep.mubr.f32.mxu0 0.0
    %1886 = vmatmul.mubr.f32.gmra.mrb[0].mxu0 %v1708
    %v1887 = vpop.f32.mrb[0].mxu0
    %v1888 = vadd.f32 %v1749, %v1887
    %v1889 = vpop.f32.mrb[0].mxu0
    %1890 = vmatprep.mubr.f32.mxu0 0.0
    %1891 = vmatmul.mubr.f32.gmra.mrb[0].mxu0 %v1709
    %v1892 = vpop.f32.mrb[0].mxu0
    %v1893 = vadd.f32 %v1749, %v1892
    %v1894 = vpop.f32.mrb[0].mxu0
    %1895 = vmatprep.mubr.f32.mxu0 0.0
    %1896 = vmatmul.mubr.f32.gmra.mrb[0].mxu0 %v1710
    %v1897 = vpop.f32.mrb[0].mxu0
    %v1898 = vadd.f32 %v1749, %v1897
    %v1899 = vpop.f32.mrb[0].mxu0
    %1900 = vmatprep.mubr.f32.mxu0 0.0
    %1901 = vmatmul.mubr.f32.gmra.mrb[0].mxu0 %v1711
    %v1902 = vpop.f32.mrb[0].mxu0
    %v1903 = vadd.f32 %v1749, %v1902
    %v1904 = vpop.f32.mrb[0].mxu0
    %1905 = vmatprep.mubr.f32.mxu0 0.0
    %1906 = vmatmul.mubr.f32.gmra.mrb[0].mxu0 %v1712
    %v1907 = vpop.f32.mrb[0].mxu0
    %v1908 = vadd.f32 %v1749, %v1907
    %v1909 = vpop.f32.mrb[0].mxu0
    %1910 = vmatprep.mubr.f32.mxu0 0.0
    %1911 = vmatmul.mubr.f32.gmra.mrb[0].mxu0 %v1713
    %v1912 = vpop.f32.mrb[0].mxu0
    %v1913 = vadd.f32 %v1749, %v1912
    %v1914 = vpop.f32.mrb[0].mxu0
    %1915 = vmatprep.mubr.f32.mxu0 0.0
    %1916 = vmatmul.mubr.f32.gmra.mrb[0].mxu0 %v1714
    %v1917 = vpop.f32.mrb[0].mxu0
    %v1918 = vadd.f32 %v1749, %v1917
    %v1919 = vpop.f32.mrb[0].mxu0
    %1920 = vmatprep.mubr.f32.mxu0 0.0
    %1921 = vmatmul.mubr.f32.gmra.mrb[0].mxu0 %v1715
    %v1922 = vpop.f32.mrb[0].mxu0
    %v1923 = vadd.f32 %v1749, %v1922
    %v1924 = vpop.f32.mrb[0].mxu0
    %1925 = vmatprep.mubr.f32.mxu0 0.0
    %1926 = vmatmul.mubr.f32.gmra.mrb[0].mxu0 %v1716
    %v1927 = vpop.f32.mrb[0].mxu0
    %v1928 = vadd.f32 %v1749, %v1927
    %v1929 = vpop.f32.mrb[0].mxu0
    %1930 = vmatprep.mubr.f32.mxu0 0.0
    %1931 = vmatmul.mubr.f32.gmra.mrb[0].mxu0 %v1717
    %v1932 = vpop.f32.mrb[0].mxu0
    %v1933 = vadd.f32 %v1749, %v1932
    %v1934 = vpop.f32.mrb[0].mxu0
    %1935 = vmatprep.mubr.f32.mxu0 0.0
    %1936 = vmatmul.mubr.f32.gmra.mrb[0].mxu0 %v1718
    %v1937 = vpop.f32.mrb[0].mxu0
    %v1938 = vadd.f32 %v1749, %v1937
    %v1939 = vpop.f32.mrb[0].mxu0
    %1940 = vmatprep.mubr.f32.mxu0 0.0
    %1941 = vmatmul.mubr.f32.gmra.mrb[0].mxu0 %v1719
    %v1942 = vpop.f32.mrb[0].mxu0
    %v1943 = vadd.f32 %v1749, %v1942
    %v1944 = vpop.f32.mrb[0].mxu0
    %1945 = vmatprep.mubr.f32.mxu0 0.0
    %1946 = vmatmul.mubr.f32.gmra.mrb[0].mxu0 %v1720
    %v1947 = vpop.f32.mrb[0].mxu0
    %v1948 = vadd.f32 %v1749, %v1947
    %v1949 = vpop.f32.mrb[0].mxu0
    %1950 = vmatprep.mubr.f32.mxu0 0.0
    %1951 = vmatmul.mubr.f32.gmra.mrb[0].mxu0 %v1721
    %v1952 = vpop.f32.mrb[0].mxu0
    %v1953 = vadd.f32 %v1749, %v1952
    %v1954 = vpop.f32.mrb[0].mxu0
    %1955 = vmatprep.mubr.f32.mxu0 0.0
    %1956 = vmatmul.mubr.f32.gmra.mrb[0].mxu0 %v1722
    %v1957 = vpop.f32.mrb[0].mxu0
    %v1958 = vadd.f32 %v1749, %v1957
    %v1959 = vpop.f32.mrb[0].mxu0
    %1960 = vmatprep.mubr.f32.mxu0 0.0
    %1961 = vmatmul.mubr.f32.gmra.mrb[0].mxu0 %v1723
    %v1962 = vpop.f32.mrb[0].mxu0
    %v1963 = vadd.f32 %v1749, %v1962
    %v1964 = vpop.f32.mrb[0].mxu0
    %1965 = vmatprep.mubr.f32.mxu0 0.0
    %1966 = vmatmul.mubr.f32.gmra.mrb[0].mxu0 %v1724
    %v1967 = vpop.f32.mrb[0].mxu0
    %v1968 = vadd.f32 %v1749, %v1967
    %v1969 = vpop.f32.mrb[0].mxu0
    %1970 = vmatprep.mubr.f32.mxu0 0.0
    %1971 = vmatmul.mubr.f32.gmra.mrb[0].mxu0 %v1725
    %v1972 = vpop.f32.mrb[0].mxu0
    %v1973 = vadd.f32 %v1749, %v1972
    %v1974 = vpop.f32.mrb[0].mxu0
    %1975 = vdwg.mxu0
    %v1976 = vmul.f32 %v1818, 0.00125
    %v1977 = vmul.f32 %v1823, 0.00125
    %v1978 = vmul.f32 %v1828, 0.00125
    %v1979 = vmul.f32 %v1833, 0.00125
    %v1980 = vmul.f32 %v1838, 0.00125
    %v1981 = vmul.f32 %v1843, 0.00125
    %v1982 = vmul.f32 %v1848, 0.00125
    %v1983 = vmul.f32 %v1853, 0.00125
    %v1984 = vmul.f32 %v1858, 0.00125
    %v1985 = vmul.f32 %v1863, 0.00125
    %v1986 = vmul.f32 %v1868, 0.00125
    %v1987 = vmul.f32 %v1873, 0.00125
    %v1988 = vmul.f32 %v1878, 0.00125
    %v1989 = vmul.f32 %v1883, 0.00125
    %v1990 = vmul.f32 %v1888, 0.00125
    %v1991 = vmul.f32 %v1893, 0.00125
    %v1992 = vmul.f32 %v1898, 0.00125
    %v1993 = vmul.f32 %v1903, 0.00125
    %v1994 = vmul.f32 %v1908, 0.00125
    %v1995 = vmul.f32 %v1913, 0.00125
    %v1996 = vmul.f32 %v1918, 0.00125
    %v1997 = vmul.f32 %v1923, 0.00125
    %v1998 = vmul.f32 %v1928, 0.00125
    %v1999 = vmul.f32 %v1933, 0.00125
    %v2000 = vmul.f32 %v1938, 0.00125
    %v2001 = vmul.f32 %v1943, 0.00125
    %v2002 = vmul.f32 %v1948, 0.00125
    %v2003 = vmul.f32 %v1953, 0.00125
    %v2004 = vmul.f32 %v1958, 0.00125
    %v2005 = vmul.f32 %v1963, 0.00125
    %v2006 = vmul.f32 %v1968, 0.00125
    %v2007 = vmul.f32 %v1973, 0.00125
    %v2008 = vmul.f32 %v1818, 0.00025
    %v2009 = vmul.f32 %v1823, 0.00025
    %v2010 = vmul.f32 %v1828, 0.00025
    %v2011 = vmul.f32 %v1833, 0.00025
    %v2012 = vmul.f32 %v1838, 0.00025
    %v2013 = vmul.f32 %v1843, 0.00025
    %v2014 = vmul.f32 %v1848, 0.00025
    %v2015 = vmul.f32 %v1853, 0.00025
    %v2016 = vmul.f32 %v1858, 0.00025
    %v2017 = vmul.f32 %v1863, 0.00025
    %v2018 = vmul.f32 %v1868, 0.00025
    %v2019 = vmul.f32 %v1873, 0.00025
    %v2020 = vmul.f32 %v1878, 0.00025
    %v2021 = vmul.f32 %v1883, 0.00025
    %v2022 = vmul.f32 %v1888, 0.00025
    %v2023 = vmul.f32 %v1893, 0.00025
    %v2024 = vmul.f32 %v1898, 0.00025
    %v2025 = vmul.f32 %v1903, 0.00025
    %v2026 = vmul.f32 %v1908, 0.00025
    %v2027 = vmul.f32 %v1913, 0.00025
    %v2028 = vmul.f32 %v1918, 0.00025
    %v2029 = vmul.f32 %v1923, 0.00025
    %v2030 = vmul.f32 %v1928, 0.00025
    %v2031 = vmul.f32 %v1933, 0.00025
    %v2032 = vmul.f32 %v1938, 0.00025
    %v2033 = vmul.f32 %v1943, 0.00025
    %v2034 = vmul.f32 %v1948, 0.00025
    %v2035 = vmul.f32 %v1953, 0.00025
    %v2036 = vmul.f32 %v1958, 0.00025
    %v2037 = vmul.f32 %v1963, 0.00025
    %v2038 = vmul.f32 %v1968, 0.00025
    %v2039 = vmul.f32 %v1973, 0.00025
    %v2040 = vmax.f32 %v1976, %v2008
    %v2041 = vmax.f32 %v1977, %v2009
    %v2042 = vmax.f32 %v1978, %v2010
    %v2043 = vmax.f32 %v1979, %v2011
    %v2044 = vmax.f32 %v1980, %v2012
    %v2045 = vmax.f32 %v1981, %v2013
    %v2046 = vmax.f32 %v1982, %v2014
    %v2047 = vmax.f32 %v1983, %v2015
    %v2048 = vmax.f32 %v1984, %v2016
    %v2049 = vmax.f32 %v1985, %v2017
    %v2050 = vmax.f32 %v1986, %v2018
    %v2051 = vmax.f32 %v1987, %v2019
    %v2052 = vmax.f32 %v1988, %v2020
    %v2053 = vmax.f32 %v1989, %v2021
    %v2054 = vmax.f32 %v1990, %v2022
    %v2055 = vmax.f32 %v1991, %v2023
    %v2056 = vmax.f32 %v1992, %v2024
    %v2057 = vmax.f32 %v1993, %v2025
    %v2058 = vmax.f32 %v1994, %v2026
    %v2059 = vmax.f32 %v1995, %v2027
    %v2060 = vmax.f32 %v1996, %v2028
    %v2061 = vmax.f32 %v1997, %v2029
    %v2062 = vmax.f32 %v1998, %v2030
    %v2063 = vmax.f32 %v1999, %v2031
    %v2064 = vmax.f32 %v2000, %v2032
    %v2065 = vmax.f32 %v2001, %v2033
    %v2066 = vmax.f32 %v2002, %v2034
    %v2067 = vmax.f32 %v2003, %v2035
    %v2068 = vmax.f32 %v2004, %v2036
    %v2069 = vmax.f32 %v2005, %v2037
    %v2070 = vmax.f32 %v2006, %v2038
    %v2071 = vmax.f32 %v2007, %v2039
    %s2072 = scalar_lea.vmem [#allocation5], 640
    %v2073 = vld [vmem:[%s2072] sm:$0xff]
    %v2074 = vld [vmem:[%s2072 + $0x8] sm:$0xff]
    %v2075 = vld [vmem:[%s2072 + $0x10] sm:$0xff]
    %v2076 = vld [vmem:[%s2072 + $0x18] sm:$0xff]
    %v2077 = vld [vmem:[%s2072 + $0x20] sm:$0xff]
    %v2078 = vld [vmem:[%s2072 + $0x28] sm:$0xff]
    %v2079 = vld [vmem:[%s2072 + $0x30] sm:$0xff]
    %v2080 = vld [vmem:[%s2072 + $0x38] sm:$0xff]
    %v2081 = vld [vmem:[%s2072 + $0x40] sm:$0xff]
    %v2082 = vld [vmem:[%s2072 + $0x48] sm:$0xff]
    %v2083 = vld [vmem:[%s2072 + $0x50] sm:$0xff]
    %v2084 = vld [vmem:[%s2072 + $0x58] sm:$0xff]
    %v2085 = vld [vmem:[%s2072 + $0x60] sm:$0xff]
    %v2086 = vld [vmem:[%s2072 + $0x68] sm:$0xff]
    %v2087 = vld [vmem:[%s2072 + $0x70] sm:$0xff]
    %v2088 = vld [vmem:[%s2072 + $0x78] sm:$0xff]
    %s2089 = scalar_lea.vmem [#allocation7], 5
    %v2090 = vld [vmem:[%s2089] sm:$0x1]
    %v2092 = vlaneseq
    %v2093 = vshrl.u32 %v2092, 7
    %v2094 = vsub.s32 0, %v2093
    %v2095 = vrot.slane %v2090, %v2094
    %2097 = vmatprep.subr.mxu0 0.0
    %2098 = vmatpush1.xpose.msra.mxu0 %v2073
    %2099 = vmatprep.subr.mxu0 0.0
    %2100 = vmatpush1.xpose.msra.mxu0 %v2074
    %2101 = vmatprep.subr.mxu0 0.0
    %2102 = vmatpush1.xpose.msra.mxu0 %v2075
    %2103 = vmatprep.subr.mxu0 0.0
    %2104 = vmatpush1.xpose.msra.mxu0 %v2076
    %2105 = vmatprep.subr.mxu0 0.0
    %2106 = vmatpush1.xpose.msra.mxu0 %v2077
    %2107 = vmatprep.subr.mxu0 0.0
    %2108 = vmatpush1.xpose.msra.mxu0 %v2078
    %2109 = vmatprep.subr.mxu0 0.0
    %2110 = vmatpush1.xpose.msra.mxu0 %v2079
    %2111 = vmatprep.subr.mxu0 0.0
    %2112 = vmatpush1.xpose.msra.mxu0 %v2080
    %2113 = vmatprep.subr.mxu0 0.0
    %2114 = vmatpush1.xpose.msra.mxu0 %v2081
    %2115 = vmatprep.subr.mxu0 0.0
    %2116 = vmatpush1.xpose.msra.mxu0 %v2082
    %2117 = vmatprep.subr.mxu0 0.0
    %2118 = vmatpush1.xpose.msra.mxu0 %v2083
    %2119 = vmatprep.subr.mxu0 0.0
    %2120 = vmatpush1.xpose.msra.mxu0 %v2084
    %2121 = vmatprep.subr.mxu0 0.0
    %2122 = vmatpush1.xpose.msra.mxu0 %v2085
    %2123 = vmatprep.subr.mxu0 0.0
    %2124 = vmatpush1.xpose.msra.mxu0 %v2086
    %2125 = vmatprep.subr.mxu0 0.0
    %2126 = vmatpush1.xpose.msra.mxu0 %v2087
    %2127 = vmatprep.subr.mxu0 0.0
    %2128 = vmatpush1.xpose.msra.mxu0 %v2088
    %2129 = vmatprep.subr.mxu0 0.0
    %2130 = vmatpush1.xpose.msra.mxu0 0.0
    %2131 = vmatprep.subr.mxu0 0.0
    %2132 = vmatpush1.xpose.msra.mxu0 0.0
    %2133 = vmatprep.subr.mxu0 0.0
    %2134 = vmatpush1.xpose.msra.mxu0 0.0
    %2135 = vmatprep.subr.mxu0 0.0
    %2136 = vmatpush1.xpose.msra.mxu0 0.0
    %2137 = vmatprep.subr.mxu0 0.0
    %2138 = vmatpush1.xpose.msra.mxu0 0.0
    %2139 = vmatprep.subr.mxu0 0.0
    %2140 = vmatpush1.xpose.msra.mxu0 0.0
    %2141 = vmatprep.subr.mxu0 0.0
    %2142 = vmatpush1.xpose.msra.mxu0 0.0
    %2143 = vmatprep.subr.mxu0 0.0
    %2144 = vmatpush1.xpose.msra.mxu0 0.0
    %2145 = vmatprep.subr.mxu0 0.0
    %2146 = vmatpush1.xpose.msra.mxu0 0.0
    %2147 = vmatprep.subr.mxu0 0.0
    %2148 = vmatpush1.xpose.msra.mxu0 0.0
    %2149 = vmatprep.subr.mxu0 0.0
    %2150 = vmatpush1.xpose.msra.mxu0 0.0
    %2151 = vmatprep.subr.mxu0 0.0
    %2152 = vmatpush1.xpose.msra.mxu0 0.0
    %2153 = vmatprep.subr.mxu0 0.0
    %2154 = vmatpush1.xpose.msra.mxu0 0.0
    %2155 = vmatprep.subr.mxu0 0.0
    %2156 = vmatpush1.xpose.msra.mxu0 0.0
    %2157 = vmatprep.subr.mxu0 0.0
    %2158 = vmatpush1.xpose.msra.mxu0 0.0
    %2159 = vmatprep.subr.mxu0 0.0
    %2160 = vmatpush1.xpose.msra.mxu0 0.0
    %2161 = vmatprep.mubr.f32.mxu0 0.0
    %2162 = vmatmul.mubr.f32.gmra.mrb[0].mxu0 %v2040
    %v2163 = vpop.f32.mrb[0].mxu0
    %v2164 = vadd.f32 %v2095, %v2163
    %v2165 = vpop.f32.mrb[0].mxu0
    %2166 = vmatprep.mubr.f32.mxu0 0.0
    %2167 = vmatmul.mubr.f32.gmra.mrb[0].mxu0 %v2041
    %v2168 = vpop.f32.mrb[0].mxu0
    %v2169 = vadd.f32 %v2095, %v2168
    %v2170 = vpop.f32.mrb[0].mxu0
    %2171 = vmatprep.mubr.f32.mxu0 0.0
    %2172 = vmatmul.mubr.f32.gmra.mrb[0].mxu0 %v2042
    %v2173 = vpop.f32.mrb[0].mxu0
    %v2174 = vadd.f32 %v2095, %v2173
    %v2175 = vpop.f32.mrb[0].mxu0
    %2176 = vmatprep.mubr.f32.mxu0 0.0
    %2177 = vmatmul.mubr.f32.gmra.mrb[0].mxu0 %v2043
    %v2178 = vpop.f32.mrb[0].mxu0
    %v2179 = vadd.f32 %v2095, %v2178
    %v2180 = vpop.f32.mrb[0].mxu0
    %2181 = vmatprep.mubr.f32.mxu0 0.0
    %2182 = vmatmul.mubr.f32.gmra.mrb[0].mxu0 %v2044
    %v2183 = vpop.f32.mrb[0].mxu0
    %v2184 = vadd.f32 %v2095, %v2183
    %v2185 = vpop.f32.mrb[0].mxu0
    %2186 = vmatprep.mubr.f32.mxu0 0.0
    %2187 = vmatmul.mubr.f32.gmra.mrb[0].mxu0 %v2045
    %v2188 = vpop.f32.mrb[0].mxu0
    %v2189 = vadd.f32 %v2095, %v2188
    %v2190 = vpop.f32.mrb[0].mxu0
    %2191 = vmatprep.mubr.f32.mxu0 0.0
    %2192 = vmatmul.mubr.f32.gmra.mrb[0].mxu0 %v2046
    %v2193 = vpop.f32.mrb[0].mxu0
    %v2194 = vadd.f32 %v2095, %v2193
    %v2195 = vpop.f32.mrb[0].mxu0
    %2196 = vmatprep.mubr.f32.mxu0 0.0
    %2197 = vmatmul.mubr.f32.gmra.mrb[0].mxu0 %v2047
    %v2198 = vpop.f32.mrb[0].mxu0
    %v2199 = vadd.f32 %v2095, %v2198
    %v2200 = vpop.f32.mrb[0].mxu0
    %2201 = vmatprep.mubr.f32.mxu0 0.0
    %2202 = vmatmul.mubr.f32.gmra.mrb[0].mxu0 %v2048
    %v2203 = vpop.f32.mrb[0].mxu0
    %v2204 = vadd.f32 %v2095, %v2203
    %v2205 = vpop.f32.mrb[0].mxu0
    %2206 = vmatprep.mubr.f32.mxu0 0.0
    %2207 = vmatmul.mubr.f32.gmra.mrb[0].mxu0 %v2049
    %v2208 = vpop.f32.mrb[0].mxu0
    %v2209 = vadd.f32 %v2095, %v2208
    %v2210 = vpop.f32.mrb[0].mxu0
    %2211 = vmatprep.mubr.f32.mxu0 0.0
    %2212 = vmatmul.mubr.f32.gmra.mrb[0].mxu0 %v2050
    %v2213 = vpop.f32.mrb[0].mxu0
    %v2214 = vadd.f32 %v2095, %v2213
    %v2215 = vpop.f32.mrb[0].mxu0
    %2216 = vmatprep.mubr.f32.mxu0 0.0
    %2217 = vmatmul.mubr.f32.gmra.mrb[0].mxu0 %v2051
    %v2218 = vpop.f32.mrb[0].mxu0
    %v2219 = vadd.f32 %v2095, %v2218
    %v2220 = vpop.f32.mrb[0].mxu0
    %2221 = vmatprep.mubr.f32.mxu0 0.0
    %2222 = vmatmul.mubr.f32.gmra.mrb[0].mxu0 %v2052
    %v2223 = vpop.f32.mrb[0].mxu0
    %v2224 = vadd.f32 %v2095, %v2223
    %v2225 = vpop.f32.mrb[0].mxu0
    %2226 = vmatprep.mubr.f32.mxu0 0.0
    %2227 = vmatmul.mubr.f32.gmra.mrb[0].mxu0 %v2053
    %v2228 = vpop.f32.mrb[0].mxu0
    %v2229 = vadd.f32 %v2095, %v2228
    %v2230 = vpop.f32.mrb[0].mxu0
    %2231 = vmatprep.mubr.f32.mxu0 0.0
    %2232 = vmatmul.mubr.f32.gmra.mrb[0].mxu0 %v2054
    %v2233 = vpop.f32.mrb[0].mxu0
    %v2234 = vadd.f32 %v2095, %v2233
    %v2235 = vpop.f32.mrb[0].mxu0
    %2236 = vmatprep.mubr.f32.mxu0 0.0
    %2237 = vmatmul.mubr.f32.gmra.mrb[0].mxu0 %v2055
    %v2238 = vpop.f32.mrb[0].mxu0
    %v2239 = vadd.f32 %v2095, %v2238
    %v2240 = vpop.f32.mrb[0].mxu0
    %2241 = vmatprep.mubr.f32.mxu0 0.0
    %2242 = vmatmul.mubr.f32.gmra.mrb[0].mxu0 %v2056
    %v2243 = vpop.f32.mrb[0].mxu0
    %v2244 = vadd.f32 %v2095, %v2243
    %v2245 = vpop.f32.mrb[0].mxu0
    %2246 = vmatprep.mubr.f32.mxu0 0.0
    %2247 = vmatmul.mubr.f32.gmra.mrb[0].mxu0 %v2057
    %v2248 = vpop.f32.mrb[0].mxu0
    %v2249 = vadd.f32 %v2095, %v2248
    %v2250 = vpop.f32.mrb[0].mxu0
    %2251 = vmatprep.mubr.f32.mxu0 0.0
    %2252 = vmatmul.mubr.f32.gmra.mrb[0].mxu0 %v2058
    %v2253 = vpop.f32.mrb[0].mxu0
    %v2254 = vadd.f32 %v2095, %v2253
    %v2255 = vpop.f32.mrb[0].mxu0
    %2256 = vmatprep.mubr.f32.mxu0 0.0
    %2257 = vmatmul.mubr.f32.gmra.mrb[0].mxu0 %v2059
    %v2258 = vpop.f32.mrb[0].mxu0
    %v2259 = vadd.f32 %v2095, %v2258
    %v2260 = vpop.f32.mrb[0].mxu0
    %2261 = vmatprep.mubr.f32.mxu0 0.0
    %2262 = vmatmul.mubr.f32.gmra.mrb[0].mxu0 %v2060
    %v2263 = vpop.f32.mrb[0].mxu0
    %v2264 = vadd.f32 %v2095, %v2263
    %v2265 = vpop.f32.mrb[0].mxu0
    %2266 = vmatprep.mubr.f32.mxu0 0.0
    %2267 = vmatmul.mubr.f32.gmra.mrb[0].mxu0 %v2061
    %v2268 = vpop.f32.mrb[0].mxu0
    %v2269 = vadd.f32 %v2095, %v2268
    %v2270 = vpop.f32.mrb[0].mxu0
    %2271 = vmatprep.mubr.f32.mxu0 0.0
    %2272 = vmatmul.mubr.f32.gmra.mrb[0].mxu0 %v2062
    %v2273 = vpop.f32.mrb[0].mxu0
    %v2274 = vadd.f32 %v2095, %v2273
    %v2275 = vpop.f32.mrb[0].mxu0
    %2276 = vmatprep.mubr.f32.mxu0 0.0
    %2277 = vmatmul.mubr.f32.gmra.mrb[0].mxu0 %v2063
    %v2278 = vpop.f32.mrb[0].mxu0
    %v2279 = vadd.f32 %v2095, %v2278
    %v2280 = vpop.f32.mrb[0].mxu0
    %2281 = vmatprep.mubr.f32.mxu0 0.0
    %2282 = vmatmul.mubr.f32.gmra.mrb[0].mxu0 %v2064
    %v2283 = vpop.f32.mrb[0].mxu0
    %v2284 = vadd.f32 %v2095, %v2283
    %v2285 = vpop.f32.mrb[0].mxu0
    %2286 = vmatprep.mubr.f32.mxu0 0.0
    %2287 = vmatmul.mubr.f32.gmra.mrb[0].mxu0 %v2065
    %v2288 = vpop.f32.mrb[0].mxu0
    %v2289 = vadd.f32 %v2095, %v2288
    %v2290 = vpop.f32.mrb[0].mxu0
    %2291 = vmatprep.mubr.f32.mxu0 0.0
    %2292 = vmatmul.mubr.f32.gmra.mrb[0].mxu0 %v2066
    %v2293 = vpop.f32.mrb[0].mxu0
    %v2294 = vadd.f32 %v2095, %v2293
    %v2295 = vpop.f32.mrb[0].mxu0
    %2296 = vmatprep.mubr.f32.mxu0 0.0
    %2297 = vmatmul.mubr.f32.gmra.mrb[0].mxu0 %v2067
    %v2298 = vpop.f32.mrb[0].mxu0
    %v2299 = vadd.f32 %v2095, %v2298
    %v2300 = vpop.f32.mrb[0].mxu0
    %2301 = vmatprep.mubr.f32.mxu0 0.0
    %2302 = vmatmul.mubr.f32.gmra.mrb[0].mxu0 %v2068
    %v2303 = vpop.f32.mrb[0].mxu0
    %v2304 = vadd.f32 %v2095, %v2303
    %v2305 = vpop.f32.mrb[0].mxu0
    %2306 = vmatprep.mubr.f32.mxu0 0.0
    %2307 = vmatmul.mubr.f32.gmra.mrb[0].mxu0 %v2069
    %v2308 = vpop.f32.mrb[0].mxu0
    %v2309 = vadd.f32 %v2095, %v2308
    %v2310 = vpop.f32.mrb[0].mxu0
    %2311 = vmatprep.mubr.f32.mxu0 0.0
    %2312 = vmatmul.mubr.f32.gmra.mrb[0].mxu0 %v2070
    %v2313 = vpop.f32.mrb[0].mxu0
    %v2314 = vadd.f32 %v2095, %v2313
    %v2315 = vpop.f32.mrb[0].mxu0
    %2316 = vmatprep.mubr.f32.mxu0 0.0
    %2317 = vmatmul.mubr.f32.gmra.mrb[0].mxu0 %v2071
    %v2318 = vpop.f32.mrb[0].mxu0
    %v2319 = vadd.f32 %v2095, %v2318
    %v2320 = vpop.f32.mrb[0].mxu0
    %2321 = vdwg.mxu0
    %v2322 = vmul.f32 %v2164, 0.00125
    %v2323 = vmul.f32 %v2169, 0.00125
    %v2324 = vmul.f32 %v2174, 0.00125
    %v2325 = vmul.f32 %v2179, 0.00125
    %v2326 = vmul.f32 %v2184, 0.00125
    %v2327 = vmul.f32 %v2189, 0.00125
    %v2328 = vmul.f32 %v2194, 0.00125
    %v2329 = vmul.f32 %v2199, 0.00125
    %v2330 = vmul.f32 %v2204, 0.00125
    %v2331 = vmul.f32 %v2209, 0.00125
    %v2332 = vmul.f32 %v2214, 0.00125
    %v2333 = vmul.f32 %v2219, 0.00125
    %v2334 = vmul.f32 %v2224, 0.00125
    %v2335 = vmul.f32 %v2229, 0.00125
    %v2336 = vmul.f32 %v2234, 0.00125
    %v2337 = vmul.f32 %v2239, 0.00125
    %v2338 = vmul.f32 %v2244, 0.00125
    %v2339 = vmul.f32 %v2249, 0.00125
    %v2340 = vmul.f32 %v2254, 0.00125
    %v2341 = vmul.f32 %v2259, 0.00125
    %v2342 = vmul.f32 %v2264, 0.00125
    %v2343 = vmul.f32 %v2269, 0.00125
    %v2344 = vmul.f32 %v2274, 0.00125
    %v2345 = vmul.f32 %v2279, 0.00125
    %v2346 = vmul.f32 %v2284, 0.00125
    %v2347 = vmul.f32 %v2289, 0.00125
    %v2348 = vmul.f32 %v2294, 0.00125
    %v2349 = vmul.f32 %v2299, 0.00125
    %v2350 = vmul.f32 %v2304, 0.00125
    %v2351 = vmul.f32 %v2309, 0.00125
    %v2352 = vmul.f32 %v2314, 0.00125
    %v2353 = vmul.f32 %v2319, 0.00125
    %v2354 = vmul.f32 %v2164, 0.00025
    %v2355 = vmul.f32 %v2169, 0.00025
    %v2356 = vmul.f32 %v2174, 0.00025
    %v2357 = vmul.f32 %v2179, 0.00025
    %v2358 = vmul.f32 %v2184, 0.00025
    %v2359 = vmul.f32 %v2189, 0.00025
    %v2360 = vmul.f32 %v2194, 0.00025
    %v2361 = vmul.f32 %v2199, 0.00025
    %v2362 = vmul.f32 %v2204, 0.00025
    %v2363 = vmul.f32 %v2209, 0.00025
    %v2364 = vmul.f32 %v2214, 0.00025
    %v2365 = vmul.f32 %v2219, 0.00025
    %v2366 = vmul.f32 %v2224, 0.00025
    %v2367 = vmul.f32 %v2229, 0.00025
    %v2368 = vmul.f32 %v2234, 0.00025
    %v2369 = vmul.f32 %v2239, 0.00025
    %v2370 = vmul.f32 %v2244, 0.00025
    %v2371 = vmul.f32 %v2249, 0.00025
    %v2372 = vmul.f32 %v2254, 0.00025
    %v2373 = vmul.f32 %v2259, 0.00025
    %v2374 = vmul.f32 %v2264, 0.00025
    %v2375 = vmul.f32 %v2269, 0.00025
    %v2376 = vmul.f32 %v2274, 0.00025
    %v2377 = vmul.f32 %v2279, 0.00025
    %v2378 = vmul.f32 %v2284, 0.00025
    %v2379 = vmul.f32 %v2289, 0.00025
    %v2380 = vmul.f32 %v2294, 0.00025
    %v2381 = vmul.f32 %v2299, 0.00025
    %v2382 = vmul.f32 %v2304, 0.00025
    %v2383 = vmul.f32 %v2309, 0.00025
    %v2384 = vmul.f32 %v2314, 0.00025
    %v2385 = vmul.f32 %v2319, 0.00025
    %v2386 = vmax.f32 %v2322, %v2354
    %v2387 = vmax.f32 %v2323, %v2355
    %v2388 = vmax.f32 %v2324, %v2356
    %v2389 = vmax.f32 %v2325, %v2357
    %v2390 = vmax.f32 %v2326, %v2358
    %v2391 = vmax.f32 %v2327, %v2359
    %v2392 = vmax.f32 %v2328, %v2360
    %v2393 = vmax.f32 %v2329, %v2361
    %v2394 = vmax.f32 %v2330, %v2362
    %v2395 = vmax.f32 %v2331, %v2363
    %v2396 = vmax.f32 %v2332, %v2364
    %v2397 = vmax.f32 %v2333, %v2365
    %v2398 = vmax.f32 %v2334, %v2366
    %v2399 = vmax.f32 %v2335, %v2367
    %v2400 = vmax.f32 %v2336, %v2368
    %v2401 = vmax.f32 %v2337, %v2369
    %v2402 = vmax.f32 %v2338, %v2370
    %v2403 = vmax.f32 %v2339, %v2371
    %v2404 = vmax.f32 %v2340, %v2372
    %v2405 = vmax.f32 %v2341, %v2373
    %v2406 = vmax.f32 %v2342, %v2374
    %v2407 = vmax.f32 %v2343, %v2375
    %v2408 = vmax.f32 %v2344, %v2376
    %v2409 = vmax.f32 %v2345, %v2377
    %v2410 = vmax.f32 %v2346, %v2378
    %v2411 = vmax.f32 %v2347, %v2379
    %v2412 = vmax.f32 %v2348, %v2380
    %v2413 = vmax.f32 %v2349, %v2381
    %v2414 = vmax.f32 %v2350, %v2382
    %v2415 = vmax.f32 %v2351, %v2383
    %v2416 = vmax.f32 %v2352, %v2384
    %v2417 = vmax.f32 %v2353, %v2385
    %s2418 = scalar_lea.vmem [#allocation5], 768
    %v2419 = vld [vmem:[%s2418] sm:$0xff]
    %v2420 = vld [vmem:[%s2418 + $0x8] sm:$0xff]
    %v2421 = vld [vmem:[%s2418 + $0x10] sm:$0xff]
    %v2422 = vld [vmem:[%s2418 + $0x18] sm:$0xff]
    %v2423 = vld [vmem:[%s2418 + $0x20] sm:$0xff]
    %v2424 = vld [vmem:[%s2418 + $0x28] sm:$0xff]
    %v2425 = vld [vmem:[%s2418 + $0x30] sm:$0xff]
    %v2426 = vld [vmem:[%s2418 + $0x38] sm:$0xff]
    %v2427 = vld [vmem:[%s2418 + $0x40] sm:$0xff]
    %v2428 = vld [vmem:[%s2418 + $0x48] sm:$0xff]
    %v2429 = vld [vmem:[%s2418 + $0x50] sm:$0xff]
    %v2430 = vld [vmem:[%s2418 + $0x58] sm:$0xff]
    %v2431 = vld [vmem:[%s2418 + $0x60] sm:$0xff]
    %v2432 = vld [vmem:[%s2418 + $0x68] sm:$0xff]
    %v2433 = vld [vmem:[%s2418 + $0x70] sm:$0xff]
    %v2434 = vld [vmem:[%s2418 + $0x78] sm:$0xff]
    %s2435 = scalar_lea.vmem [#allocation7], 6
    %v2436 = vld [vmem:[%s2435] sm:$0x1]
    %v2438 = vlaneseq
    %v2439 = vshrl.u32 %v2438, 7
    %v2440 = vsub.s32 0, %v2439
    %v2441 = vrot.slane %v2436, %v2440
    %2443 = vmatprep.subr.mxu0 0.0
    %2444 = vmatpush1.xpose.msra.mxu0 %v2419
    %2445 = vmatprep.subr.mxu0 0.0
    %2446 = vmatpush1.xpose.msra.mxu0 %v2420
    %2447 = vmatprep.subr.mxu0 0.0
    %2448 = vmatpush1.xpose.msra.mxu0 %v2421
    %2449 = vmatprep.subr.mxu0 0.0
    %2450 = vmatpush1.xpose.msra.mxu0 %v2422
    %2451 = vmatprep.subr.mxu0 0.0
    %2452 = vmatpush1.xpose.msra.mxu0 %v2423
    %2453 = vmatprep.subr.mxu0 0.0
    %2454 = vmatpush1.xpose.msra.mxu0 %v2424
    %2455 = vmatprep.subr.mxu0 0.0
    %2456 = vmatpush1.xpose.msra.mxu0 %v2425
    %2457 = vmatprep.subr.mxu0 0.0
    %2458 = vmatpush1.xpose.msra.mxu0 %v2426
    %2459 = vmatprep.subr.mxu0 0.0
    %2460 = vmatpush1.xpose.msra.mxu0 %v2427
    %2461 = vmatprep.subr.mxu0 0.0
    %2462 = vmatpush1.xpose.msra.mxu0 %v2428
    %2463 = vmatprep.subr.mxu0 0.0
    %2464 = vmatpush1.xpose.msra.mxu0 %v2429
    %2465 = vmatprep.subr.mxu0 0.0
    %2466 = vmatpush1.xpose.msra.mxu0 %v2430
    %2467 = vmatprep.subr.mxu0 0.0
    %2468 = vmatpush1.xpose.msra.mxu0 %v2431
    %2469 = vmatprep.subr.mxu0 0.0
    %2470 = vmatpush1.xpose.msra.mxu0 %v2432
    %2471 = vmatprep.subr.mxu0 0.0
    %2472 = vmatpush1.xpose.msra.mxu0 %v2433
    %2473 = vmatprep.subr.mxu0 0.0
    %2474 = vmatpush1.xpose.msra.mxu0 %v2434
    %2475 = vmatprep.subr.mxu0 0.0
    %2476 = vmatpush1.xpose.msra.mxu0 0.0
    %2477 = vmatprep.subr.mxu0 0.0
    %2478 = vmatpush1.xpose.msra.mxu0 0.0
    %2479 = vmatprep.subr.mxu0 0.0
    %2480 = vmatpush1.xpose.msra.mxu0 0.0
    %2481 = vmatprep.subr.mxu0 0.0
    %2482 = vmatpush1.xpose.msra.mxu0 0.0
    %2483 = vmatprep.subr.mxu0 0.0
    %2484 = vmatpush1.xpose.msra.mxu0 0.0
    %2485 = vmatprep.subr.mxu0 0.0
    %2486 = vmatpush1.xpose.msra.mxu0 0.0
    %2487 = vmatprep.subr.mxu0 0.0
    %2488 = vmatpush1.xpose.msra.mxu0 0.0
    %2489 = vmatprep.subr.mxu0 0.0
    %2490 = vmatpush1.xpose.msra.mxu0 0.0
    %2491 = vmatprep.subr.mxu0 0.0
    %2492 = vmatpush1.xpose.msra.mxu0 0.0
    %2493 = vmatprep.subr.mxu0 0.0
    %2494 = vmatpush1.xpose.msra.mxu0 0.0
    %2495 = vmatprep.subr.mxu0 0.0
    %2496 = vmatpush1.xpose.msra.mxu0 0.0
    %2497 = vmatprep.subr.mxu0 0.0
    %2498 = vmatpush1.xpose.msra.mxu0 0.0
    %2499 = vmatprep.subr.mxu0 0.0
    %2500 = vmatpush1.xpose.msra.mxu0 0.0
    %2501 = vmatprep.subr.mxu0 0.0
    %2502 = vmatpush1.xpose.msra.mxu0 0.0
    %2503 = vmatprep.subr.mxu0 0.0
    %2504 = vmatpush1.xpose.msra.mxu0 0.0
    %2505 = vmatprep.subr.mxu0 0.0
    %2506 = vmatpush1.xpose.msra.mxu0 0.0
    %2507 = vmatprep.mubr.f32.mxu0 0.0
    %2508 = vmatmul.mubr.f32.gmra.mrb[0].mxu0 %v2386
    %v2509 = vpop.f32.mrb[0].mxu0
    %v2510 = vadd.f32 %v2441, %v2509
    %v2511 = vpop.f32.mrb[0].mxu0
    %2512 = vmatprep.mubr.f32.mxu0 0.0
    %2513 = vmatmul.mubr.f32.gmra.mrb[0].mxu0 %v2387
    %v2514 = vpop.f32.mrb[0].mxu0
    %v2515 = vadd.f32 %v2441, %v2514
    %v2516 = vpop.f32.mrb[0].mxu0
    %2517 = vmatprep.mubr.f32.mxu0 0.0
    %2518 = vmatmul.mubr.f32.gmra.mrb[0].mxu0 %v2388
    %v2519 = vpop.f32.mrb[0].mxu0
    %v2520 = vadd.f32 %v2441, %v2519
    %v2521 = vpop.f32.mrb[0].mxu0
    %2522 = vmatprep.mubr.f32.mxu0 0.0
    %2523 = vmatmul.mubr.f32.gmra.mrb[0].mxu0 %v2389
    %v2524 = vpop.f32.mrb[0].mxu0
    %v2525 = vadd.f32 %v2441, %v2524
    %v2526 = vpop.f32.mrb[0].mxu0
    %2527 = vmatprep.mubr.f32.mxu0 0.0
    %2528 = vmatmul.mubr.f32.gmra.mrb[0].mxu0 %v2390
    %v2529 = vpop.f32.mrb[0].mxu0
    %v2530 = vadd.f32 %v2441, %v2529
    %v2531 = vpop.f32.mrb[0].mxu0
    %2532 = vmatprep.mubr.f32.mxu0 0.0
    %2533 = vmatmul.mubr.f32.gmra.mrb[0].mxu0 %v2391
    %v2534 = vpop.f32.mrb[0].mxu0
    %v2535 = vadd.f32 %v2441, %v2534
    %v2536 = vpop.f32.mrb[0].mxu0
    %2537 = vmatprep.mubr.f32.mxu0 0.0
    %2538 = vmatmul.mubr.f32.gmra.mrb[0].mxu0 %v2392
    %v2539 = vpop.f32.mrb[0].mxu0
    %v2540 = vadd.f32 %v2441, %v2539
    %v2541 = vpop.f32.mrb[0].mxu0
    %2542 = vmatprep.mubr.f32.mxu0 0.0
    %2543 = vmatmul.mubr.f32.gmra.mrb[0].mxu0 %v2393
    %v2544 = vpop.f32.mrb[0].mxu0
    %v2545 = vadd.f32 %v2441, %v2544
    %v2546 = vpop.f32.mrb[0].mxu0
    %2547 = vmatprep.mubr.f32.mxu0 0.0
    %2548 = vmatmul.mubr.f32.gmra.mrb[0].mxu0 %v2394
    %v2549 = vpop.f32.mrb[0].mxu0
    %v2550 = vadd.f32 %v2441, %v2549
    %v2551 = vpop.f32.mrb[0].mxu0
    %2552 = vmatprep.mubr.f32.mxu0 0.0
    %2553 = vmatmul.mubr.f32.gmra.mrb[0].mxu0 %v2395
    %v2554 = vpop.f32.mrb[0].mxu0
    %v2555 = vadd.f32 %v2441, %v2554
    %v2556 = vpop.f32.mrb[0].mxu0
    %2557 = vmatprep.mubr.f32.mxu0 0.0
    %2558 = vmatmul.mubr.f32.gmra.mrb[0].mxu0 %v2396
    %v2559 = vpop.f32.mrb[0].mxu0
    %v2560 = vadd.f32 %v2441, %v2559
    %v2561 = vpop.f32.mrb[0].mxu0
    %2562 = vmatprep.mubr.f32.mxu0 0.0
    %2563 = vmatmul.mubr.f32.gmra.mrb[0].mxu0 %v2397
    %v2564 = vpop.f32.mrb[0].mxu0
    %v2565 = vadd.f32 %v2441, %v2564
    %v2566 = vpop.f32.mrb[0].mxu0
    %2567 = vmatprep.mubr.f32.mxu0 0.0
    %2568 = vmatmul.mubr.f32.gmra.mrb[0].mxu0 %v2398
    %v2569 = vpop.f32.mrb[0].mxu0
    %v2570 = vadd.f32 %v2441, %v2569
    %v2571 = vpop.f32.mrb[0].mxu0
    %2572 = vmatprep.mubr.f32.mxu0 0.0
    %2573 = vmatmul.mubr.f32.gmra.mrb[0].mxu0 %v2399
    %v2574 = vpop.f32.mrb[0].mxu0
    %v2575 = vadd.f32 %v2441, %v2574
    %v2576 = vpop.f32.mrb[0].mxu0
    %2577 = vmatprep.mubr.f32.mxu0 0.0
    %2578 = vmatmul.mubr.f32.gmra.mrb[0].mxu0 %v2400
    %v2579 = vpop.f32.mrb[0].mxu0
    %v2580 = vadd.f32 %v2441, %v2579
    %v2581 = vpop.f32.mrb[0].mxu0
    %2582 = vmatprep.mubr.f32.mxu0 0.0
    %2583 = vmatmul.mubr.f32.gmra.mrb[0].mxu0 %v2401
    %v2584 = vpop.f32.mrb[0].mxu0
    %v2585 = vadd.f32 %v2441, %v2584
    %v2586 = vpop.f32.mrb[0].mxu0
    %2587 = vmatprep.mubr.f32.mxu0 0.0
    %2588 = vmatmul.mubr.f32.gmra.mrb[0].mxu0 %v2402
    %v2589 = vpop.f32.mrb[0].mxu0
    %v2590 = vadd.f32 %v2441, %v2589
    %v2591 = vpop.f32.mrb[0].mxu0
    %2592 = vmatprep.mubr.f32.mxu0 0.0
    %2593 = vmatmul.mubr.f32.gmra.mrb[0].mxu0 %v2403
    %v2594 = vpop.f32.mrb[0].mxu0
    %v2595 = vadd.f32 %v2441, %v2594
    %v2596 = vpop.f32.mrb[0].mxu0
    %2597 = vmatprep.mubr.f32.mxu0 0.0
    %2598 = vmatmul.mubr.f32.gmra.mrb[0].mxu0 %v2404
    %v2599 = vpop.f32.mrb[0].mxu0
    %v2600 = vadd.f32 %v2441, %v2599
    %v2601 = vpop.f32.mrb[0].mxu0
    %2602 = vmatprep.mubr.f32.mxu0 0.0
    %2603 = vmatmul.mubr.f32.gmra.mrb[0].mxu0 %v2405
    %v2604 = vpop.f32.mrb[0].mxu0
    %v2605 = vadd.f32 %v2441, %v2604
    %v2606 = vpop.f32.mrb[0].mxu0
    %2607 = vmatprep.mubr.f32.mxu0 0.0
    %2608 = vmatmul.mubr.f32.gmra.mrb[0].mxu0 %v2406
    %v2609 = vpop.f32.mrb[0].mxu0
    %v2610 = vadd.f32 %v2441, %v2609
    %v2611 = vpop.f32.mrb[0].mxu0
    %2612 = vmatprep.mubr.f32.mxu0 0.0
    %2613 = vmatmul.mubr.f32.gmra.mrb[0].mxu0 %v2407
    %v2614 = vpop.f32.mrb[0].mxu0
    %v2615 = vadd.f32 %v2441, %v2614
    %v2616 = vpop.f32.mrb[0].mxu0
    %2617 = vmatprep.mubr.f32.mxu0 0.0
    %2618 = vmatmul.mubr.f32.gmra.mrb[0].mxu0 %v2408
    %v2619 = vpop.f32.mrb[0].mxu0
    %v2620 = vadd.f32 %v2441, %v2619
    %v2621 = vpop.f32.mrb[0].mxu0
    %2622 = vmatprep.mubr.f32.mxu0 0.0
    %2623 = vmatmul.mubr.f32.gmra.mrb[0].mxu0 %v2409
    %v2624 = vpop.f32.mrb[0].mxu0
    %v2625 = vadd.f32 %v2441, %v2624
    %v2626 = vpop.f32.mrb[0].mxu0
    %2627 = vmatprep.mubr.f32.mxu0 0.0
    %2628 = vmatmul.mubr.f32.gmra.mrb[0].mxu0 %v2410
    %v2629 = vpop.f32.mrb[0].mxu0
    %v2630 = vadd.f32 %v2441, %v2629
    %v2631 = vpop.f32.mrb[0].mxu0
    %2632 = vmatprep.mubr.f32.mxu0 0.0
    %2633 = vmatmul.mubr.f32.gmra.mrb[0].mxu0 %v2411
    %v2634 = vpop.f32.mrb[0].mxu0
    %v2635 = vadd.f32 %v2441, %v2634
    %v2636 = vpop.f32.mrb[0].mxu0
    %2637 = vmatprep.mubr.f32.mxu0 0.0
    %2638 = vmatmul.mubr.f32.gmra.mrb[0].mxu0 %v2412
    %v2639 = vpop.f32.mrb[0].mxu0
    %v2640 = vadd.f32 %v2441, %v2639
    %v2641 = vpop.f32.mrb[0].mxu0
    %2642 = vmatprep.mubr.f32.mxu0 0.0
    %2643 = vmatmul.mubr.f32.gmra.mrb[0].mxu0 %v2413
    %v2644 = vpop.f32.mrb[0].mxu0
    %v2645 = vadd.f32 %v2441, %v2644
    %v2646 = vpop.f32.mrb[0].mxu0
    %2647 = vmatprep.mubr.f32.mxu0 0.0
    %2648 = vmatmul.mubr.f32.gmra.mrb[0].mxu0 %v2414
    %v2649 = vpop.f32.mrb[0].mxu0
    %v2650 = vadd.f32 %v2441, %v2649
    %v2651 = vpop.f32.mrb[0].mxu0
    %2652 = vmatprep.mubr.f32.mxu0 0.0
    %2653 = vmatmul.mubr.f32.gmra.mrb[0].mxu0 %v2415
    %v2654 = vpop.f32.mrb[0].mxu0
    %v2655 = vadd.f32 %v2441, %v2654
    %v2656 = vpop.f32.mrb[0].mxu0
    %2657 = vmatprep.mubr.f32.mxu0 0.0
    %2658 = vmatmul.mubr.f32.gmra.mrb[0].mxu0 %v2416
    %v2659 = vpop.f32.mrb[0].mxu0
    %v2660 = vadd.f32 %v2441, %v2659
    %v2661 = vpop.f32.mrb[0].mxu0
    %2662 = vmatprep.mubr.f32.mxu0 0.0
    %2663 = vmatmul.mubr.f32.gmra.mrb[0].mxu0 %v2417
    %v2664 = vpop.f32.mrb[0].mxu0
    %v2665 = vadd.f32 %v2441, %v2664
    %v2666 = vpop.f32.mrb[0].mxu0
    %2667 = vdwg.mxu0
    %v2668 = vmul.f32 %v2510, 0.00125
    %v2669 = vmul.f32 %v2515, 0.00125
    %v2670 = vmul.f32 %v2520, 0.00125
    %v2671 = vmul.f32 %v2525, 0.00125
    %v2672 = vmul.f32 %v2530, 0.00125
    %v2673 = vmul.f32 %v2535, 0.00125
    %v2674 = vmul.f32 %v2540, 0.00125
    %v2675 = vmul.f32 %v2545, 0.00125
    %v2676 = vmul.f32 %v2550, 0.00125
    %v2677 = vmul.f32 %v2555, 0.00125
    %v2678 = vmul.f32 %v2560, 0.00125
    %v2679 = vmul.f32 %v2565, 0.00125
    %v2680 = vmul.f32 %v2570, 0.00125
    %v2681 = vmul.f32 %v2575, 0.00125
    %v2682 = vmul.f32 %v2580, 0.00125
    %v2683 = vmul.f32 %v2585, 0.00125
    %v2684 = vmul.f32 %v2590, 0.00125
    %v2685 = vmul.f32 %v2595, 0.00125
    %v2686 = vmul.f32 %v2600, 0.00125
    %v2687 = vmul.f32 %v2605, 0.00125
    %v2688 = vmul.f32 %v2610, 0.00125
    %v2689 = vmul.f32 %v2615, 0.00125
    %v2690 = vmul.f32 %v2620, 0.00125
    %v2691 = vmul.f32 %v2625, 0.00125
    %v2692 = vmul.f32 %v2630, 0.00125
    %v2693 = vmul.f32 %v2635, 0.00125
    %v2694 = vmul.f32 %v2640, 0.00125
    %v2695 = vmul.f32 %v2645, 0.00125
    %v2696 = vmul.f32 %v2650, 0.00125
    %v2697 = vmul.f32 %v2655, 0.00125
    %v2698 = vmul.f32 %v2660, 0.00125
    %v2699 = vmul.f32 %v2665, 0.00125
    %v2700 = vmul.f32 %v2510, 0.00025
    %v2701 = vmul.f32 %v2515, 0.00025
    %v2702 = vmul.f32 %v2520, 0.00025
    %v2703 = vmul.f32 %v2525, 0.00025
    %v2704 = vmul.f32 %v2530, 0.00025
    %v2705 = vmul.f32 %v2535, 0.00025
    %v2706 = vmul.f32 %v2540, 0.00025
    %v2707 = vmul.f32 %v2545, 0.00025
    %v2708 = vmul.f32 %v2550, 0.00025
    %v2709 = vmul.f32 %v2555, 0.00025
    %v2710 = vmul.f32 %v2560, 0.00025
    %v2711 = vmul.f32 %v2565, 0.00025
    %v2712 = vmul.f32 %v2570, 0.00025
    %v2713 = vmul.f32 %v2575, 0.00025
    %v2714 = vmul.f32 %v2580, 0.00025
    %v2715 = vmul.f32 %v2585, 0.00025
    %v2716 = vmul.f32 %v2590, 0.00025
    %v2717 = vmul.f32 %v2595, 0.00025
    %v2718 = vmul.f32 %v2600, 0.00025
    %v2719 = vmul.f32 %v2605, 0.00025
    %v2720 = vmul.f32 %v2610, 0.00025
    %v2721 = vmul.f32 %v2615, 0.00025
    %v2722 = vmul.f32 %v2620, 0.00025
    %v2723 = vmul.f32 %v2625, 0.00025
    %v2724 = vmul.f32 %v2630, 0.00025
    %v2725 = vmul.f32 %v2635, 0.00025
    %v2726 = vmul.f32 %v2640, 0.00025
    %v2727 = vmul.f32 %v2645, 0.00025
    %v2728 = vmul.f32 %v2650, 0.00025
    %v2729 = vmul.f32 %v2655, 0.00025
    %v2730 = vmul.f32 %v2660, 0.00025
    %v2731 = vmul.f32 %v2665, 0.00025
    %v2732 = vmax.f32 %v2668, %v2700
    %v2733 = vmax.f32 %v2669, %v2701
    %v2734 = vmax.f32 %v2670, %v2702
    %v2735 = vmax.f32 %v2671, %v2703
    %v2736 = vmax.f32 %v2672, %v2704
    %v2737 = vmax.f32 %v2673, %v2705
    %v2738 = vmax.f32 %v2674, %v2706
    %v2739 = vmax.f32 %v2675, %v2707
    %v2740 = vmax.f32 %v2676, %v2708
    %v2741 = vmax.f32 %v2677, %v2709
    %v2742 = vmax.f32 %v2678, %v2710
    %v2743 = vmax.f32 %v2679, %v2711
    %v2744 = vmax.f32 %v2680, %v2712
    %v2745 = vmax.f32 %v2681, %v2713
    %v2746 = vmax.f32 %v2682, %v2714
    %v2747 = vmax.f32 %v2683, %v2715
    %v2748 = vmax.f32 %v2684, %v2716
    %v2749 = vmax.f32 %v2685, %v2717
    %v2750 = vmax.f32 %v2686, %v2718
    %v2751 = vmax.f32 %v2687, %v2719
    %v2752 = vmax.f32 %v2688, %v2720
    %v2753 = vmax.f32 %v2689, %v2721
    %v2754 = vmax.f32 %v2690, %v2722
    %v2755 = vmax.f32 %v2691, %v2723
    %v2756 = vmax.f32 %v2692, %v2724
    %v2757 = vmax.f32 %v2693, %v2725
    %v2758 = vmax.f32 %v2694, %v2726
    %v2759 = vmax.f32 %v2695, %v2727
    %v2760 = vmax.f32 %v2696, %v2728
    %v2761 = vmax.f32 %v2697, %v2729
    %v2762 = vmax.f32 %v2698, %v2730
    %v2763 = vmax.f32 %v2699, %v2731
    %s2764 = scalar_lea.vmem [#allocation5], 896
    %v2765 = vld [vmem:[%s2764] sm:$0xff]
    %v2766 = vld [vmem:[%s2764 + $0x8] sm:$0xff]
    %v2767 = vld [vmem:[%s2764 + $0x10] sm:$0xff]
    %v2768 = vld [vmem:[%s2764 + $0x18] sm:$0xff]
    %v2769 = vld [vmem:[%s2764 + $0x20] sm:$0xff]
    %v2770 = vld [vmem:[%s2764 + $0x28] sm:$0xff]
    %v2771 = vld [vmem:[%s2764 + $0x30] sm:$0xff]
    %v2772 = vld [vmem:[%s2764 + $0x38] sm:$0xff]
    %v2773 = vld [vmem:[%s2764 + $0x40] sm:$0xff]
    %v2774 = vld [vmem:[%s2764 + $0x48] sm:$0xff]
    %v2775 = vld [vmem:[%s2764 + $0x50] sm:$0xff]
    %v2776 = vld [vmem:[%s2764 + $0x58] sm:$0xff]
    %v2777 = vld [vmem:[%s2764 + $0x60] sm:$0xff]
    %v2778 = vld [vmem:[%s2764 + $0x68] sm:$0xff]
    %v2779 = vld [vmem:[%s2764 + $0x70] sm:$0xff]
    %v2780 = vld [vmem:[%s2764 + $0x78] sm:$0xff]
    %s2781 = scalar_lea.vmem [#allocation7], 7
    %v2782 = vld [vmem:[%s2781] sm:$0x1]
    %v2784 = vlaneseq
    %v2785 = vshrl.u32 %v2784, 7
    %v2786 = vsub.s32 0, %v2785
    %v2787 = vrot.slane %v2782, %v2786
    %2789 = vmatprep.subr.mxu0 0.0
    %2790 = vmatpush1.xpose.msra.mxu0 %v2765
    %2791 = vmatprep.subr.mxu0 0.0
    %2792 = vmatpush1.xpose.msra.mxu0 %v2766
    %2793 = vmatprep.subr.mxu0 0.0
    %2794 = vmatpush1.xpose.msra.mxu0 %v2767
    %2795 = vmatprep.subr.mxu0 0.0
    %2796 = vmatpush1.xpose.msra.mxu0 %v2768
    %2797 = vmatprep.subr.mxu0 0.0
    %2798 = vmatpush1.xpose.msra.mxu0 %v2769
    %2799 = vmatprep.subr.mxu0 0.0
    %2800 = vmatpush1.xpose.msra.mxu0 %v2770
    %2801 = vmatprep.subr.mxu0 0.0
    %2802 = vmatpush1.xpose.msra.mxu0 %v2771
    %2803 = vmatprep.subr.mxu0 0.0
    %2804 = vmatpush1.xpose.msra.mxu0 %v2772
    %2805 = vmatprep.subr.mxu0 0.0
    %2806 = vmatpush1.xpose.msra.mxu0 %v2773
    %2807 = vmatprep.subr.mxu0 0.0
    %2808 = vmatpush1.xpose.msra.mxu0 %v2774
    %2809 = vmatprep.subr.mxu0 0.0
    %2810 = vmatpush1.xpose.msra.mxu0 %v2775
    %2811 = vmatprep.subr.mxu0 0.0
    %2812 = vmatpush1.xpose.msra.mxu0 %v2776
    %2813 = vmatprep.subr.mxu0 0.0
    %2814 = vmatpush1.xpose.msra.mxu0 %v2777
    %2815 = vmatprep.subr.mxu0 0.0
    %2816 = vmatpush1.xpose.msra.mxu0 %v2778
    %2817 = vmatprep.subr.mxu0 0.0
    %2818 = vmatpush1.xpose.msra.mxu0 %v2779
    %2819 = vmatprep.subr.mxu0 0.0
    %2820 = vmatpush1.xpose.msra.mxu0 %v2780
    %2821 = vmatprep.subr.mxu0 0.0
    %2822 = vmatpush1.xpose.msra.mxu0 0.0
    %2823 = vmatprep.subr.mxu0 0.0
    %2824 = vmatpush1.xpose.msra.mxu0 0.0
    %2825 = vmatprep.subr.mxu0 0.0
    %2826 = vmatpush1.xpose.msra.mxu0 0.0
    %2827 = vmatprep.subr.mxu0 0.0
    %2828 = vmatpush1.xpose.msra.mxu0 0.0
    %2829 = vmatprep.subr.mxu0 0.0
    %2830 = vmatpush1.xpose.msra.mxu0 0.0
    %2831 = vmatprep.subr.mxu0 0.0
    %2832 = vmatpush1.xpose.msra.mxu0 0.0
    %2833 = vmatprep.subr.mxu0 0.0
    %2834 = vmatpush1.xpose.msra.mxu0 0.0
    %2835 = vmatprep.subr.mxu0 0.0
    %2836 = vmatpush1.xpose.msra.mxu0 0.0
    %2837 = vmatprep.subr.mxu0 0.0
    %2838 = vmatpush1.xpose.msra.mxu0 0.0
    %2839 = vmatprep.subr.mxu0 0.0
    %2840 = vmatpush1.xpose.msra.mxu0 0.0
    %2841 = vmatprep.subr.mxu0 0.0
    %2842 = vmatpush1.xpose.msra.mxu0 0.0
    %2843 = vmatprep.subr.mxu0 0.0
    %2844 = vmatpush1.xpose.msra.mxu0 0.0
    %2845 = vmatprep.subr.mxu0 0.0
    %2846 = vmatpush1.xpose.msra.mxu0 0.0
    %2847 = vmatprep.subr.mxu0 0.0
    %2848 = vmatpush1.xpose.msra.mxu0 0.0
    %2849 = vmatprep.subr.mxu0 0.0
    %2850 = vmatpush1.xpose.msra.mxu0 0.0
    %2851 = vmatprep.subr.mxu0 0.0
    %2852 = vmatpush1.xpose.msra.mxu0 0.0
    %2853 = vmatprep.mubr.f32.mxu0 0.0
    %2854 = vmatmul.mubr.f32.gmra.mrb[0].mxu0 %v2732
    %v2855 = vpop.f32.mrb[0].mxu0
    %v2856 = vadd.f32 %v2787, %v2855
    %v2857 = vpop.f32.mrb[0].mxu0
    %2858 = vmatprep.mubr.f32.mxu0 0.0
    %2859 = vmatmul.mubr.f32.gmra.mrb[0].mxu0 %v2733
    %v2860 = vpop.f32.mrb[0].mxu0
    %v2861 = vadd.f32 %v2787, %v2860
    %v2862 = vpop.f32.mrb[0].mxu0
    %2863 = vmatprep.mubr.f32.mxu0 0.0
    %2864 = vmatmul.mubr.f32.gmra.mrb[0].mxu0 %v2734
    %v2865 = vpop.f32.mrb[0].mxu0
    %v2866 = vadd.f32 %v2787, %v2865
    %v2867 = vpop.f32.mrb[0].mxu0
    %2868 = vmatprep.mubr.f32.mxu0 0.0
    %2869 = vmatmul.mubr.f32.gmra.mrb[0].mxu0 %v2735
    %v2870 = vpop.f32.mrb[0].mxu0
    %v2871 = vadd.f32 %v2787, %v2870
    %v2872 = vpop.f32.mrb[0].mxu0
    %2873 = vmatprep.mubr.f32.mxu0 0.0
    %2874 = vmatmul.mubr.f32.gmra.mrb[0].mxu0 %v2736
    %v2875 = vpop.f32.mrb[0].mxu0
    %v2876 = vadd.f32 %v2787, %v2875
    %v2877 = vpop.f32.mrb[0].mxu0
    %2878 = vmatprep.mubr.f32.mxu0 0.0
    %2879 = vmatmul.mubr.f32.gmra.mrb[0].mxu0 %v2737
    %v2880 = vpop.f32.mrb[0].mxu0
    %v2881 = vadd.f32 %v2787, %v2880
    %v2882 = vpop.f32.mrb[0].mxu0
    %2883 = vmatprep.mubr.f32.mxu0 0.0
    %2884 = vmatmul.mubr.f32.gmra.mrb[0].mxu0 %v2738
    %v2885 = vpop.f32.mrb[0].mxu0
    %v2886 = vadd.f32 %v2787, %v2885
    %v2887 = vpop.f32.mrb[0].mxu0
    %2888 = vmatprep.mubr.f32.mxu0 0.0
    %2889 = vmatmul.mubr.f32.gmra.mrb[0].mxu0 %v2739
    %v2890 = vpop.f32.mrb[0].mxu0
    %v2891 = vadd.f32 %v2787, %v2890
    %v2892 = vpop.f32.mrb[0].mxu0
    %2893 = vmatprep.mubr.f32.mxu0 0.0
    %2894 = vmatmul.mubr.f32.gmra.mrb[0].mxu0 %v2740
    %v2895 = vpop.f32.mrb[0].mxu0
    %v2896 = vadd.f32 %v2787, %v2895
    %v2897 = vpop.f32.mrb[0].mxu0
    %2898 = vmatprep.mubr.f32.mxu0 0.0
    %2899 = vmatmul.mubr.f32.gmra.mrb[0].mxu0 %v2741
    %v2900 = vpop.f32.mrb[0].mxu0
    %v2901 = vadd.f32 %v2787, %v2900
    %v2902 = vpop.f32.mrb[0].mxu0
    %2903 = vmatprep.mubr.f32.mxu0 0.0
    %2904 = vmatmul.mubr.f32.gmra.mrb[0].mxu0 %v2742
    %v2905 = vpop.f32.mrb[0].mxu0
    %v2906 = vadd.f32 %v2787, %v2905
    %v2907 = vpop.f32.mrb[0].mxu0
    %2908 = vmatprep.mubr.f32.mxu0 0.0
    %2909 = vmatmul.mubr.f32.gmra.mrb[0].mxu0 %v2743
    %v2910 = vpop.f32.mrb[0].mxu0
    %v2911 = vadd.f32 %v2787, %v2910
    %v2912 = vpop.f32.mrb[0].mxu0
    %2913 = vmatprep.mubr.f32.mxu0 0.0
    %2914 = vmatmul.mubr.f32.gmra.mrb[0].mxu0 %v2744
    %v2915 = vpop.f32.mrb[0].mxu0
    %v2916 = vadd.f32 %v2787, %v2915
    %v2917 = vpop.f32.mrb[0].mxu0
    %2918 = vmatprep.mubr.f32.mxu0 0.0
    %2919 = vmatmul.mubr.f32.gmra.mrb[0].mxu0 %v2745
    %v2920 = vpop.f32.mrb[0].mxu0
    %v2921 = vadd.f32 %v2787, %v2920
    %v2922 = vpop.f32.mrb[0].mxu0
    %2923 = vmatprep.mubr.f32.mxu0 0.0
    %2924 = vmatmul.mubr.f32.gmra.mrb[0].mxu0 %v2746
    %v2925 = vpop.f32.mrb[0].mxu0
    %v2926 = vadd.f32 %v2787, %v2925
    %v2927 = vpop.f32.mrb[0].mxu0
    %2928 = vmatprep.mubr.f32.mxu0 0.0
    %2929 = vmatmul.mubr.f32.gmra.mrb[0].mxu0 %v2747
    %v2930 = vpop.f32.mrb[0].mxu0
    %v2931 = vadd.f32 %v2787, %v2930
    %v2932 = vpop.f32.mrb[0].mxu0
    %2933 = vmatprep.mubr.f32.mxu0 0.0
    %2934 = vmatmul.mubr.f32.gmra.mrb[0].mxu0 %v2748
    %v2935 = vpop.f32.mrb[0].mxu0
    %v2936 = vadd.f32 %v2787, %v2935
    %v2937 = vpop.f32.mrb[0].mxu0
    %2938 = vmatprep.mubr.f32.mxu0 0.0
    %2939 = vmatmul.mubr.f32.gmra.mrb[0].mxu0 %v2749
    %v2940 = vpop.f32.mrb[0].mxu0
    %v2941 = vadd.f32 %v2787, %v2940
    %v2942 = vpop.f32.mrb[0].mxu0
    %2943 = vmatprep.mubr.f32.mxu0 0.0
    %2944 = vmatmul.mubr.f32.gmra.mrb[0].mxu0 %v2750
    %v2945 = vpop.f32.mrb[0].mxu0
    %v2946 = vadd.f32 %v2787, %v2945
    %v2947 = vpop.f32.mrb[0].mxu0
    %2948 = vmatprep.mubr.f32.mxu0 0.0
    %2949 = vmatmul.mubr.f32.gmra.mrb[0].mxu0 %v2751
    %v2950 = vpop.f32.mrb[0].mxu0
    %v2951 = vadd.f32 %v2787, %v2950
    %v2952 = vpop.f32.mrb[0].mxu0
    %2953 = vmatprep.mubr.f32.mxu0 0.0
    %2954 = vmatmul.mubr.f32.gmra.mrb[0].mxu0 %v2752
    %v2955 = vpop.f32.mrb[0].mxu0
    %v2956 = vadd.f32 %v2787, %v2955
    %v2957 = vpop.f32.mrb[0].mxu0
    %2958 = vmatprep.mubr.f32.mxu0 0.0
    %2959 = vmatmul.mubr.f32.gmra.mrb[0].mxu0 %v2753
    %v2960 = vpop.f32.mrb[0].mxu0
    %v2961 = vadd.f32 %v2787, %v2960
    %v2962 = vpop.f32.mrb[0].mxu0
    %2963 = vmatprep.mubr.f32.mxu0 0.0
    %2964 = vmatmul.mubr.f32.gmra.mrb[0].mxu0 %v2754
    %v2965 = vpop.f32.mrb[0].mxu0
    %v2966 = vadd.f32 %v2787, %v2965
    %v2967 = vpop.f32.mrb[0].mxu0
    %2968 = vmatprep.mubr.f32.mxu0 0.0
    %2969 = vmatmul.mubr.f32.gmra.mrb[0].mxu0 %v2755
    %v2970 = vpop.f32.mrb[0].mxu0
    %v2971 = vadd.f32 %v2787, %v2970
    %v2972 = vpop.f32.mrb[0].mxu0
    %2973 = vmatprep.mubr.f32.mxu0 0.0
    %2974 = vmatmul.mubr.f32.gmra.mrb[0].mxu0 %v2756
    %v2975 = vpop.f32.mrb[0].mxu0
    %v2976 = vadd.f32 %v2787, %v2975
    %v2977 = vpop.f32.mrb[0].mxu0
    %2978 = vmatprep.mubr.f32.mxu0 0.0
    %2979 = vmatmul.mubr.f32.gmra.mrb[0].mxu0 %v2757
    %v2980 = vpop.f32.mrb[0].mxu0
    %v2981 = vadd.f32 %v2787, %v2980
    %v2982 = vpop.f32.mrb[0].mxu0
    %2983 = vmatprep.mubr.f32.mxu0 0.0
    %2984 = vmatmul.mubr.f32.gmra.mrb[0].mxu0 %v2758
    %v2985 = vpop.f32.mrb[0].mxu0
    %v2986 = vadd.f32 %v2787, %v2985
    %v2987 = vpop.f32.mrb[0].mxu0
    %2988 = vmatprep.mubr.f32.mxu0 0.0
    %2989 = vmatmul.mubr.f32.gmra.mrb[0].mxu0 %v2759
    %v2990 = vpop.f32.mrb[0].mxu0
    %v2991 = vadd.f32 %v2787, %v2990
    %v2992 = vpop.f32.mrb[0].mxu0
    %2993 = vmatprep.mubr.f32.mxu0 0.0
    %2994 = vmatmul.mubr.f32.gmra.mrb[0].mxu0 %v2760
    %v2995 = vpop.f32.mrb[0].mxu0
    %v2996 = vadd.f32 %v2787, %v2995
    %v2997 = vpop.f32.mrb[0].mxu0
    %2998 = vmatprep.mubr.f32.mxu0 0.0
    %2999 = vmatmul.mubr.f32.gmra.mrb[0].mxu0 %v2761
    %v3000 = vpop.f32.mrb[0].mxu0
    %v3001 = vadd.f32 %v2787, %v3000
    %v3002 = vpop.f32.mrb[0].mxu0
    %3003 = vmatprep.mubr.f32.mxu0 0.0
    %3004 = vmatmul.mubr.f32.gmra.mrb[0].mxu0 %v2762
    %v3005 = vpop.f32.mrb[0].mxu0
    %v3006 = vadd.f32 %v2787, %v3005
    %v3007 = vpop.f32.mrb[0].mxu0
    %3008 = vmatprep.mubr.f32.mxu0 0.0
    %3009 = vmatmul.mubr.f32.gmra.mrb[0].mxu0 %v2763
    %v3010 = vpop.f32.mrb[0].mxu0
    %v3011 = vadd.f32 %v2787, %v3010
    %v3012 = vpop.f32.mrb[0].mxu0
    %3013 = vdwg.mxu0
    %v3014 = vmul.f32 %v2856, 1.4142135
    %v3015 = vmul.f32 %v2861, 1.4142135
    %v3016 = vmul.f32 %v2866, 1.4142135
    %v3017 = vmul.f32 %v2871, 1.4142135
    %v3018 = vmul.f32 %v2876, 1.4142135
    %v3019 = vmul.f32 %v2881, 1.4142135
    %v3020 = vmul.f32 %v2886, 1.4142135
    %v3021 = vmul.f32 %v2891, 1.4142135
    %v3022 = vmul.f32 %v2896, 1.4142135
    %v3023 = vmul.f32 %v2901, 1.4142135
    %v3024 = vmul.f32 %v2906, 1.4142135
    %v3025 = vmul.f32 %v2911, 1.4142135
    %v3026 = vmul.f32 %v2916, 1.4142135
    %v3027 = vmul.f32 %v2921, 1.4142135
    %v3028 = vmul.f32 %v2926, 1.4142135
    %v3029 = vmul.f32 %v2931, 1.4142135
    %v3030 = vmul.f32 %v2936, 1.4142135
    %v3031 = vmul.f32 %v2941, 1.4142135
    %v3032 = vmul.f32 %v2946, 1.4142135
    %v3033 = vmul.f32 %v2951, 1.4142135
    %v3034 = vmul.f32 %v2956, 1.4142135
    %v3035 = vmul.f32 %v2961, 1.4142135
    %v3036 = vmul.f32 %v2966, 1.4142135
    %v3037 = vmul.f32 %v2971, 1.4142135
    %v3038 = vmul.f32 %v2976, 1.4142135
    %v3039 = vmul.f32 %v2981, 1.4142135
    %v3040 = vmul.f32 %v2986, 1.4142135
    %v3041 = vmul.f32 %v2991, 1.4142135
    %v3042 = vmul.f32 %v2996, 1.4142135
    %v3043 = vmul.f32 %v3001, 1.4142135
    %v3044 = vmul.f32 %v3006, 1.4142135
    %v3045 = vmul.f32 %v3011, 1.4142135
    %v3046 = vmul.f32 %v2856, 0.28284273
    %v3047 = vmul.f32 %v2861, 0.28284273
    %v3048 = vmul.f32 %v2866, 0.28284273
    %v3049 = vmul.f32 %v2871, 0.28284273
    %v3050 = vmul.f32 %v2876, 0.28284273
    %v3051 = vmul.f32 %v2881, 0.28284273
    %v3052 = vmul.f32 %v2886, 0.28284273
    %v3053 = vmul.f32 %v2891, 0.28284273
    %v3054 = vmul.f32 %v2896, 0.28284273
    %v3055 = vmul.f32 %v2901, 0.28284273
    %v3056 = vmul.f32 %v2906, 0.28284273
    %v3057 = vmul.f32 %v2911, 0.28284273
    %v3058 = vmul.f32 %v2916, 0.28284273
    %v3059 = vmul.f32 %v2921, 0.28284273
    %v3060 = vmul.f32 %v2926, 0.28284273
    %v3061 = vmul.f32 %v2931, 0.28284273
    %v3062 = vmul.f32 %v2936, 0.28284273
    %v3063 = vmul.f32 %v2941, 0.28284273
    %v3064 = vmul.f32 %v2946, 0.28284273
    %v3065 = vmul.f32 %v2951, 0.28284273
    %v3066 = vmul.f32 %v2956, 0.28284273
    %v3067 = vmul.f32 %v2961, 0.28284273
    %v3068 = vmul.f32 %v2966, 0.28284273
    %v3069 = vmul.f32 %v2971, 0.28284273
    %v3070 = vmul.f32 %v2976, 0.28284273
    %v3071 = vmul.f32 %v2981, 0.28284273
    %v3072 = vmul.f32 %v2986, 0.28284273
    %v3073 = vmul.f32 %v2991, 0.28284273
    %v3074 = vmul.f32 %v2996, 0.28284273
    %v3075 = vmul.f32 %v3001, 0.28284273
    %v3076 = vmul.f32 %v3006, 0.28284273
    %v3077 = vmul.f32 %v3011, 0.28284273
    %v3078 = vmax.f32 %v3014, %v3046
    %v3079 = vmax.f32 %v3015, %v3047
    %v3080 = vmax.f32 %v3016, %v3048
    %v3081 = vmax.f32 %v3017, %v3049
    %v3082 = vmax.f32 %v3018, %v3050
    %v3083 = vmax.f32 %v3019, %v3051
    %v3084 = vmax.f32 %v3020, %v3052
    %v3085 = vmax.f32 %v3021, %v3053
    %v3086 = vmax.f32 %v3022, %v3054
    %v3087 = vmax.f32 %v3023, %v3055
    %v3088 = vmax.f32 %v3024, %v3056
    %v3089 = vmax.f32 %v3025, %v3057
    %v3090 = vmax.f32 %v3026, %v3058
    %v3091 = vmax.f32 %v3027, %v3059
    %v3092 = vmax.f32 %v3028, %v3060
    %v3093 = vmax.f32 %v3029, %v3061
    %v3094 = vmax.f32 %v3030, %v3062
    %v3095 = vmax.f32 %v3031, %v3063
    %v3096 = vmax.f32 %v3032, %v3064
    %v3097 = vmax.f32 %v3033, %v3065
    %v3098 = vmax.f32 %v3034, %v3066
    %v3099 = vmax.f32 %v3035, %v3067
    %v3100 = vmax.f32 %v3036, %v3068
    %v3101 = vmax.f32 %v3037, %v3069
    %v3102 = vmax.f32 %v3038, %v3070
    %v3103 = vmax.f32 %v3039, %v3071
    %v3104 = vmax.f32 %v3040, %v3072
    %v3105 = vmax.f32 %v3041, %v3073
    %v3106 = vmax.f32 %v3042, %v3074
    %v3107 = vmax.f32 %v3043, %v3075
    %v3108 = vmax.f32 %v3044, %v3076
    %v3109 = vmax.f32 %v3045, %v3077
    %3110 = vst [vmem:[#allocation8] sm:$0xff] %v3078
    %3111 = vst [vmem:[#allocation8 + $0x8] sm:$0xff] %v3079
    %3112 = vst [vmem:[#allocation8 + $0x10] sm:$0xff] %v3080
    %3113 = vst [vmem:[#allocation8 + $0x18] sm:$0xff] %v3081
    %3114 = vst [vmem:[#allocation8 + $0x20] sm:$0xff] %v3082
    %3115 = vst [vmem:[#allocation8 + $0x28] sm:$0xff] %v3083
    %3116 = vst [vmem:[#allocation8 + $0x30] sm:$0xff] %v3084
    %3117 = vst [vmem:[#allocation8 + $0x38] sm:$0xff] %v3085
    %3118 = vst [vmem:[#allocation8 + $0x40] sm:$0xff] %v3086
    %3119 = vst [vmem:[#allocation8 + $0x48] sm:$0xff] %v3087
    %3120 = vst [vmem:[#allocation8 + $0x50] sm:$0xff] %v3088
    %3121 = vst [vmem:[#allocation8 + $0x58] sm:$0xff] %v3089
    %3122 = vst [vmem:[#allocation8 + $0x60] sm:$0xff] %v3090
    %3123 = vst [vmem:[#allocation8 + $0x68] sm:$0xff] %v3091
    %3124 = vst [vmem:[#allocation8 + $0x70] sm:$0xff] %v3092
    %3125 = vst [vmem:[#allocation8 + $0x78] sm:$0xff] %v3093
    %3126 = vst [vmem:[#allocation8 + $0x80] sm:$0xff] %v3094
    %3127 = vst [vmem:[#allocation8 + $0x88] sm:$0xff] %v3095
    %3128 = vst [vmem:[#allocation8 + $0x90] sm:$0xff] %v3096
    %3129 = vst [vmem:[#allocation8 + $0x98] sm:$0xff] %v3097
    %3130 = vst [vmem:[#allocation8 + $0xa0] sm:$0xff] %v3098
    %3131 = vst [vmem:[#allocation8 + $0xa8] sm:$0xff] %v3099
    %3132 = vst [vmem:[#allocation8 + $0xb0] sm:$0xff] %v3100
    %3133 = vst [vmem:[#allocation8 + $0xb8] sm:$0xff] %v3101
    %3134 = vst [vmem:[#allocation8 + $0xc0] sm:$0xff] %v3102
    %3135 = vst [vmem:[#allocation8 + $0xc8] sm:$0xff] %v3103
    %3136 = vst [vmem:[#allocation8 + $0xd0] sm:$0xff] %v3104
    %3137 = vst [vmem:[#allocation8 + $0xd8] sm:$0xff] %v3105
    %3138 = vst [vmem:[#allocation8 + $0xe0] sm:$0xff] %v3106
    %3139 = vst [vmem:[#allocation8 + $0xe8] sm:$0xff] %v3107
    %3140 = vst [vmem:[#allocation8 + $0xf0] sm:$0xff] %v3108
    %3141 = vst [vmem:[#allocation8 + $0xf8] sm:$0xff] %v3109
    // Predicated region
    $region26: #{tpu_custom_call.1} parent=1 // pred_check
      _
    $region27: #{tpu_custom_call.1} parent=1 // pred_check_branch
      %3143 = sbr.rel (0) target = $region29
    $region28: #{tpu_custom_call.1} parent=1 // pred_region
      %s3145 = ssub.s32 4096, 4096
      %3146 = vsyncadd [#allocation4], %s3145
      %s3147 = sshll.u32 [#allocation8], 4
      %s3148 = int_to_ptr.vmem [resolvable:$true] %s3147
      %3153 = dma.vmem_to_hbm [thread:$0]  %s3148, 4096, %s3, [#allocation4], 128, 128, 8
    $region29: #{tpu_custom_call.1} parent=1 // pred_fallthru
      _
    // Predicated region
    $region30: #{tpu_custom_call.1} parent=1 // pred_check
      _
    $region31: #{tpu_custom_call.1} parent=1 // pred_check_branch
      %3155 = sbr.rel (0) target = $region33
    $region32: #{tpu_custom_call.1} parent=1 // pred_region
      %3156 = dma.done [#allocation4], 4096
    $region33: #{tpu_custom_call.1} parent=1 // pred_fallthru
      _
    %3157 = vsyncpa [#allocation3], 1
    %3158 = vsyncpa [#allocation6], 1
    %3159 = vsyncpa [#allocation4], 1

</llo_original>
